<compile_context>
chip_gen: v6e
topology: v6e:2x2x1
jax: 0.10.0
libtpu: 0.0.40
codegen_flags: <defaults>
</compile_context>

<pallas_src>
import jax
import jax.numpy as jnp
from jax.experimental import pallas as pl
from jax.experimental.pallas import tpu as pltpu

BN_EPS = 1e-5


# ------------------------------ Pallas kernel ------------------------------
def cnn_kernel(x_ref, w1b_ref, sel1_ref, sel1t_ref, g1_ref, b1_ref,
               pe1_ref, po1_ref,
               w2b_ref, sel2_ref, sel2t_ref, g2_ref, b2_ref,
               pe2_ref, po2_ref,
               wfc_ref, bfc_ref, o_ref):
    B = x_ref.shape[0]
    f32 = jnp.float32

    # ---------------- layer 1: Conv2d(1,16,5) on the MXU --------------------
    # y1[(b,ho), wo*16+c] = sum_i  x[b, ho+i, :] @ W1band[i]   (K=28, N=384)
    acc1 = None
    for i in range(5):
        lhs = x_ref[:, i:i + 24, :].reshape(B * 24, 28)
        part = jnp.dot(lhs, w1b_ref[i], preferred_element_type=f32)
        acc1 = part if acc1 is None else acc1 + part          # (B*24, 384)

    # BatchNorm2d (train-mode batch stats, single pass) + ReLU.
    # Conv bias omitted: cancelled exactly by the batch-mean subtraction.
    n1 = float(B * 24 * 24)
    rs = jnp.sum(acc1, axis=0, keepdims=True)                 # (1,384)
    rq = jnp.sum(acc1 * acc1, axis=0, keepdims=True)          # (1,384)
    ch_sum = jnp.dot(rs, sel1_ref[...], preferred_element_type=f32)   # (1,16)
    ch_sq = jnp.dot(rq, sel1_ref[...], preferred_element_type=f32)    # (1,16)
    mean = ch_sum / n1
    var = ch_sq / n1 - mean * mean
    scale = g1_ref[...] * jax.lax.rsqrt(var + BN_EPS)         # (1,16)
    shift = b1_ref[...] - mean * scale
    scale_w = jnp.dot(scale, sel1t_ref[...], preferred_element_type=f32)  # (1,384)
    shift_w = jnp.dot(shift, sel1t_ref[...], preferred_element_type=f32)
    y1 = jnp.maximum(acc1 * scale_w + shift_w, 0.0)           # (B*24, 384)

    # MaxPool2d(2): H-pool = pure value op; W-pool = even/odd selector matmuls.
    y1 = y1.reshape(B, 12, 2, 384)
    y1 = jnp.maximum(y1[:, :, 0, :], y1[:, :, 1, :]).reshape(B * 12, 384)
    p1 = jnp.maximum(
        jnp.dot(y1, pe1_ref[...], preferred_element_type=f32),
        jnp.dot(y1, po1_ref[...], preferred_element_type=f32))  # (B*12, 192)

    # ---------------- layer 2: Conv2d(16,32,5) on the MXU -------------------
    # y2[(b,ho), wo*32+co] = sum_i  p1[b, ho+i, :] @ W2band[i]  (K=192, N=256)
    p1 = p1.reshape(B, 12, 192)
    acc2 = None
    for i in range(5):
        lhs = p1[:, i:i + 8, :].reshape(B * 8, 192)
        part = jnp.dot(lhs, w2b_ref[i], preferred_element_type=f32)
        acc2 = part if acc2 is None else acc2 + part          # (B*8, 256)

    n2 = float(B * 8 * 8)
    rs = jnp.sum(acc2, axis=0, keepdims=True)                 # (1,256)
    rq = jnp.sum(acc2 * acc2, axis=0, keepdims=True)          # (1,256)
    ch_sum = jnp.dot(rs, sel2_ref[...], preferred_element_type=f32)   # (1,32)
    ch_sq = jnp.dot(rq, sel2_ref[...], preferred_element_type=f32)
    mean = ch_sum / n2
    var = ch_sq / n2 - mean * mean
    scale = g2_ref[...] * jax.lax.rsqrt(var + BN_EPS)
    shift = b2_ref[...] - mean * scale
    scale_w = jnp.dot(scale, sel2t_ref[...], preferred_element_type=f32)  # (1,256)
    shift_w = jnp.dot(shift, sel2t_ref[...], preferred_element_type=f32)
    y2 = jnp.maximum(acc2 * scale_w + shift_w, 0.0)           # (B*8, 256)

    y2 = y2.reshape(B, 4, 2, 256)
    y2 = jnp.maximum(y2[:, :, 0, :], y2[:, :, 1, :]).reshape(B * 4, 256)
    p2 = jnp.maximum(
        jnp.dot(y2, pe2_ref[...], preferred_element_type=f32),
        jnp.dot(y2, po2_ref[...], preferred_element_type=f32))  # (B*4, 128)

    # ---------------- fc: Linear(512, 10), fused ----------------------------
    # Features are (b, ho', wo'*32+co); FC weight was permuted once in
    # prepare_params to (ho', wo'*32+co, k), so the FC is 4 small matmuls.
    p2 = p2.reshape(B, 4, 128)
    logits = jnp.dot(p2[:, 0, :], wfc_ref[0], preferred_element_type=f32)
    for h in range(1, 4):
        logits = logits + jnp.dot(p2[:, h, :], wfc_ref[h],
                                  preferred_element_type=f32)
    o_ref[...] = logits + bfc_ref[...]                        # (B, 10)


# ------------------------------ wrappers -----------------------------------
def prepare_params(params):
    """One-time weight-layout prep (outside the hot path).

    Conv biases b1/b2 are intentionally dropped: with training-mode BatchNorm
    the batch-mean subtraction cancels a per-channel bias exactly.
    """
    f32 = jnp.float32
    w1 = jnp.asarray(params["w1"], f32)      # (16,1,5,5)
    w2 = jnp.asarray(params["w2"], f32)      # (32,16,5,5)
    wfc = jnp.asarray(params["wfc"], f32)    # (10,512), cols = (c,h,w)

    # conv1 banded weights W1band[i, w_in, wo*16+c] = w1[c,0,i,w_in-wo]
    w1_t = jnp.transpose(w1.reshape(16, 5, 5), (1, 2, 0))     # [i, j, c]
    win = jnp.arange(28)[:, None]
    wout = jnp.arange(24)[None, :]
    j = win - wout
    valid = ((j >= 0) & (j < 5)).astype(f32)                  # (28,24)
    w1_band = (w1_t[:, jnp.clip(j, 0, 4), :]
               * valid[None, :, :, None]).reshape(5, 28, 24 * 16)

    # conv2 banded weights W2band[i, w_in*16+ci, wo*32+co] = w2[co,ci,i,w_in-wo]
    w2_t = jnp.transpose(w2, (2, 3, 1, 0))                    # [i, j, ci, co]
    win = jnp.arange(12)[:, None]
    wout = jnp.arange(8)[None, :]
    j = win - wout
    valid = ((j >= 0) & (j < 5)).astype(f32)                  # (12,8)
    w2_band = w2_t[:, jnp.clip(j, 0, 4), :, :] * valid[None, :, :, None, None]
    w2_band = jnp.transpose(w2_band, (0, 1, 3, 2, 4)).reshape(5, 12 * 16, 8 * 32)

    # per-channel reduce / broadcast selectors over packed (wo*C + c) lanes
    sel1t = jnp.tile(jnp.eye(16, dtype=f32), (1, 24))         # (16,384)
    sel2t = jnp.tile(jnp.eye(32, dtype=f32), (1, 8))          # (32,256)

    # even/odd 2x2 W-pool selectors (lane compaction done on the MXU)
    def pool_sel(w_in, c):
        wi = jnp.arange(w_in)[:, None]
        wo = jnp.arange(w_in // 2)[None, :]
        eye = jnp.eye(c, dtype=f32)
        pe = jnp.kron((wi == 2 * wo).astype(f32), eye)
        po = jnp.kron((wi == 2 * wo + 1).astype(f32), eye)
        return pe, po

    pe1, po1 = pool_sel(24, 16)    # (384,192)
    pe2, po2 = pool_sel(8, 32)     # (256,128)

    # FC weight: PyTorch flattens NCHW as (c,h,w); kernel features are
    # (ho', wo'*32+co) -> permute rows once to (4, 128, 10).
    wfc_prep = jnp.transpose(wfc.reshape(10, 32, 4, 4),
                             (2, 3, 1, 0)).reshape(4, 4 * 32, 10)

    return {
        "w1b": w1_band, "sel1": sel1t.T, "sel1t": sel1t,
        "g1": jnp.asarray(params["g1"], f32).reshape(1, 16),
        "beta1": jnp.asarray(params["beta1"], f32).reshape(1, 16),
        "pe1": pe1, "po1": po1,
        "w2b": w2_band, "sel2": sel2t.T, "sel2t": sel2t,
        "g2": jnp.asarray(params["g2"], f32).reshape(1, 32),
        "beta2": jnp.asarray(params["beta2"], f32).reshape(1, 32),
        "pe2": pe2, "po2": po2,
        "wfc": wfc_prep,
        "bfc": jnp.asarray(params["bfc"], f32).reshape(1, 10),
    }


@jax.jit
def cnn_forward(x_nchw, prep):
    B = x_nchw.shape[0]
    # NCHW (B,1,28,28) -> (B,28,28): free reshape (Cin == 1), lane-dense input.
    x = x_nchw.reshape(B, 28, 28)
    vmem = lambda: pl.BlockSpec(memory_space=pltpu.MemorySpace.VMEM)
    return pl.pallas_call(
        cnn_kernel,
        out_shape=jax.ShapeDtypeStruct((B, 10), jnp.float32),
        in_specs=[vmem() for _ in range(17)],
        out_specs=vmem(),
        compiler_params=pltpu.CompilerParams(
            vmem_limit_bytes=32 * 1024 * 1024),
    )(x, prep["w1b"], prep["sel1"], prep["sel1t"], prep["g1"], prep["beta1"],
      prep["pe1"], prep["po1"],
      prep["w2b"], prep["sel2"], prep["sel2t"], prep["g2"], prep["beta2"],
      prep["pe2"], prep["po2"], prep["wfc"], prep["bfc"])


# --------------------------- pure-JAX reference ----------------------------
def _reference_forward(x_nchw, params):
    hi = jax.lax.Precision.HIGHEST

    def conv(x_nhwc, w_oihw, b):
        B, H, W, Cin = x_nhwc.shape
        Ho, Wo = H - 4, W - 4
        cols = [x_nhwc[:, i:i + Ho, j:j + Wo, :]
                for i in range(5) for j in range(5)]
        patches = jnp.concatenate(cols, axis=-1).reshape(B * Ho * Wo, 25 * Cin)
        wmat = jnp.transpose(w_oihw, (2, 3, 1, 0)).reshape(25 * Cin, -1)
        y = jnp.dot(patches, wmat, precision=hi) + b
        return y.reshape(B, Ho, Wo, -1)

    def bn_relu(y, g, beta):
        mean = jnp.mean(y, axis=(0, 1, 2), keepdims=True)
        var = jnp.mean(jnp.square(y - mean), axis=(0, 1, 2), keepdims=True)
        return jnp.maximum((y - mean) * jax.lax.rsqrt(var + BN_EPS) * g + beta,
                           0.0)

    def pool(y):
        B, H, W, C = y.shape
        return jnp.max(y.reshape(B, H // 2, 2, W // 2, 2, C), axis=(2, 4))

    B = x_nchw.shape[0]
    x = jnp.transpose(x_nchw, (0, 2, 3, 1))
    h = pool(bn_relu(conv(x, params["w1"], params["b1"]),
                     params["g1"], params["beta1"]))
    h = pool(bn_relu(conv(h, params["w2"], params["b2"]),
                     params["g2"], params["beta2"]))
    feat = jnp.transpose(h, (0, 3, 1, 2)).reshape(B, -1)
    return jnp.dot(feat, params["wfc"].T, precision=hi) + params["bfc"]


if __name__ == "__main__":
    key = jax.random.PRNGKey(0)
    ks = jax.random.split(key, 7)
    params = {
        "w1": jax.random.normal(ks[0], (16, 1, 5, 5), jnp.float32) * 0.1,
        "b1": jax.random.normal(ks[1], (16,), jnp.float32) * 0.1,
        "g1": jnp.ones((16,), jnp.float32),
        "beta1": jnp.zeros((16,), jnp.float32),
        "w2": jax.random.normal(ks[2], (32, 16, 5, 5), jnp.float32) * 0.05,
        "b2": jax.random.normal(ks[3], (32,), jnp.float32) * 0.1,
        "g2": jnp.ones((32,), jnp.float32),
        "beta2": jnp.zeros((32,), jnp.float32),
        "wfc": jax.random.normal(ks[4], (10, 512), jnp.float32) * 0.05,
        "bfc": jax.random.normal(ks[5], (10,), jnp.float32) * 0.1,
    }
    # MNIST-style input implied by the 4*4*32 fc: (B, 1, 28, 28); small batch.
    x = jax.random.normal(ks[6], (2, 1, 28, 28), jnp.float32)

    prep = prepare_params(params)            # one-time layout prep
    out = cnn_forward(x, prep)
    jax.block_until_ready(out)
    assert out.shape == (2, 10)

    # Reference includes conv biases + two-pass BN, so this also validates the
    # bias-cancellation and single-pass-variance assumptions.  Layout /
    # permutation bugs produce O(0.1-1) errors; tolerance covers only MXU
    # f32-matmul rounding differences.
    ref = _reference_forward(x, params)
    err = float(jnp.max(jnp.abs(out - ref)))
    assert err < 3e-2, f"mismatch vs reference: {err}"
    print("KERNEL_OK")
</pallas_src>

<mosaic_0001>
module attributes {stable_mosaic.version = 11 : i64} {
  func.func @cnn_kernel(%arg0: memref<2x28x28xf32, #tpu.memory_space<vmem>>, %arg1: memref<5x28x384xf32, #tpu.memory_space<vmem>>, %arg2: memref<384x16xf32, #tpu.memory_space<vmem>>, %arg3: memref<16x384xf32, #tpu.memory_space<vmem>>, %arg4: memref<1x16xf32, #tpu.memory_space<vmem>>, %arg5: memref<1x16xf32, #tpu.memory_space<vmem>>, %arg6: memref<384x192xf32, #tpu.memory_space<vmem>>, %arg7: memref<384x192xf32, #tpu.memory_space<vmem>>, %arg8: memref<5x192x256xf32, #tpu.memory_space<vmem>>, %arg9: memref<256x32xf32, #tpu.memory_space<vmem>>, %arg10: memref<32x256xf32, #tpu.memory_space<vmem>>, %arg11: memref<1x32xf32, #tpu.memory_space<vmem>>, %arg12: memref<1x32xf32, #tpu.memory_space<vmem>>, %arg13: memref<256x128xf32, #tpu.memory_space<vmem>>, %arg14: memref<256x128xf32, #tpu.memory_space<vmem>>, %arg15: memref<4x128x10xf32, #tpu.memory_space<vmem>>, %arg16: memref<1x10xf32, #tpu.memory_space<vmem>>, %arg17: memref<2x10xf32, #tpu.memory_space<vmem>>) attributes {dimension_semantics = [], scalar_prefetch = 0 : i64, scratch_operands = 0 : i64, tpu.core_type = #tpu.core_type<tc>} {
    %c0 = arith.constant 0 : index
    %c0_0 = arith.constant 0 : index
    %c0_1 = arith.constant 0 : index
    %0 = vector.load %arg0[%c0, %c0_0, %c0_1] : memref<2x28x28xf32, #tpu.memory_space<vmem>>, vector<2x24x28xf32>
    %1 = vector.shape_cast %0 : vector<2x24x28xf32> to vector<48x28xf32>
    %c0_2 = arith.constant 0 : index
    %c0_3 = arith.constant 0 : index
    %c0_4 = arith.constant 0 : index
    %2 = vector.load %arg1[%c0_2, %c0_3, %c0_4] : memref<5x28x384xf32, #tpu.memory_space<vmem>>, vector<1x28x384xf32>
    %3 = vector.shape_cast %2 : vector<1x28x384xf32> to vector<28x384xf32>
    %cst = arith.constant dense<0.000000e+00> : vector<48x384xf32>
    %4 = tpu.matmul %1, %3, %cst {dimension_numbers = #tpu.dot_dimension_numbers<[1], [0], [0], [1], [0, 0, 1, 1], [], []>} : vector<48x28xf32>, vector<28x384xf32>, vector<48x384xf32> -> vector<48x384xf32>
    %c0_5 = arith.constant 0 : index
    %c1 = arith.constant 1 : index
    %c0_6 = arith.constant 0 : index
    %5 = vector.load %arg0[%c0_5, %c1, %c0_6] : memref<2x28x28xf32, #tpu.memory_space<vmem>>, vector<2x24x28xf32>
    %6 = vector.shape_cast %5 : vector<2x24x28xf32> to vector<48x28xf32>
    %c1_7 = arith.constant 1 : index
    %c0_8 = arith.constant 0 : index
    %c0_9 = arith.constant 0 : index
    %7 = vector.load %arg1[%c1_7, %c0_8, %c0_9] : memref<5x28x384xf32, #tpu.memory_space<vmem>>, vector<1x28x384xf32>
    %8 = vector.shape_cast %7 : vector<1x28x384xf32> to vector<28x384xf32>
    %cst_10 = arith.constant dense<0.000000e+00> : vector<48x384xf32>
    %9 = tpu.matmul %6, %8, %cst_10 {dimension_numbers = #tpu.dot_dimension_numbers<[1], [0], [0], [1], [0, 0, 1, 1], [], []>} : vector<48x28xf32>, vector<28x384xf32>, vector<48x384xf32> -> vector<48x384xf32>
    %10 = arith.addf %4, %9 : vector<48x384xf32>
    %c0_11 = arith.constant 0 : index
    %c2 = arith.constant 2 : index
    %c0_12 = arith.constant 0 : index
    %11 = vector.load %arg0[%c0_11, %c2, %c0_12] : memref<2x28x28xf32, #tpu.memory_space<vmem>>, vector<2x24x28xf32>
    %12 = vector.shape_cast %11 : vector<2x24x28xf32> to vector<48x28xf32>
    %c2_13 = arith.constant 2 : index
    %c0_14 = arith.constant 0 : index
    %c0_15 = arith.constant 0 : index
    %13 = vector.load %arg1[%c2_13, %c0_14, %c0_15] : memref<5x28x384xf32, #tpu.memory_space<vmem>>, vector<1x28x384xf32>
    %14 = vector.shape_cast %13 : vector<1x28x384xf32> to vector<28x384xf32>
    %cst_16 = arith.constant dense<0.000000e+00> : vector<48x384xf32>
    %15 = tpu.matmul %12, %14, %cst_16 {dimension_numbers = #tpu.dot_dimension_numbers<[1], [0], [0], [1], [0, 0, 1, 1], [], []>} : vector<48x28xf32>, vector<28x384xf32>, vector<48x384xf32> -> vector<48x384xf32>
    %16 = arith.addf %10, %15 : vector<48x384xf32>
    %c0_17 = arith.constant 0 : index
    %c3 = arith.constant 3 : index
    %c0_18 = arith.constant 0 : index
    %17 = vector.load %arg0[%c0_17, %c3, %c0_18] : memref<2x28x28xf32, #tpu.memory_space<vmem>>, vector<2x24x28xf32>
    %18 = vector.shape_cast %17 : vector<2x24x28xf32> to vector<48x28xf32>
    %c3_19 = arith.constant 3 : index
    %c0_20 = arith.constant 0 : index
    %c0_21 = arith.constant 0 : index
    %19 = vector.load %arg1[%c3_19, %c0_20, %c0_21] : memref<5x28x384xf32, #tpu.memory_space<vmem>>, vector<1x28x384xf32>
    %20 = vector.shape_cast %19 : vector<1x28x384xf32> to vector<28x384xf32>
    %cst_22 = arith.constant dense<0.000000e+00> : vector<48x384xf32>
    %21 = tpu.matmul %18, %20, %cst_22 {dimension_numbers = #tpu.dot_dimension_numbers<[1], [0], [0], [1], [0, 0, 1, 1], [], []>} : vector<48x28xf32>, vector<28x384xf32>, vector<48x384xf32> -> vector<48x384xf32>
    %22 = arith.addf %16, %21 : vector<48x384xf32>
    %c0_23 = arith.constant 0 : index
    %c4 = arith.constant 4 : index
    %c0_24 = arith.constant 0 : index
    %23 = vector.load %arg0[%c0_23, %c4, %c0_24] : memref<2x28x28xf32, #tpu.memory_space<vmem>>, vector<2x24x28xf32>
    %24 = vector.shape_cast %23 : vector<2x24x28xf32> to vector<48x28xf32>
    %c4_25 = arith.constant 4 : index
    %c0_26 = arith.constant 0 : index
    %c0_27 = arith.constant 0 : index
    %25 = vector.load %arg1[%c4_25, %c0_26, %c0_27] : memref<5x28x384xf32, #tpu.memory_space<vmem>>, vector<1x28x384xf32>
    %26 = vector.shape_cast %25 : vector<1x28x384xf32> to vector<28x384xf32>
    %cst_28 = arith.constant dense<0.000000e+00> : vector<48x384xf32>
    %27 = tpu.matmul %24, %26, %cst_28 {dimension_numbers = #tpu.dot_dimension_numbers<[1], [0], [0], [1], [0, 0, 1, 1], [], []>} : vector<48x28xf32>, vector<28x384xf32>, vector<48x384xf32> -> vector<48x384xf32>
    %28 = arith.addf %22, %27 : vector<48x384xf32>
    %cst_29 = arith.constant dense<0.000000e+00> : vector<384xf32>
    %29 = vector.multi_reduction <add>, %28, %cst_29 [0] : vector<48x384xf32> to vector<384xf32>
    %30 = vector.shape_cast %29 : vector<384xf32> to vector<1x384xf32>
    %31 = arith.mulf %28, %28 : vector<48x384xf32>
    %cst_30 = arith.constant dense<0.000000e+00> : vector<384xf32>
    %32 = vector.multi_reduction <add>, %31, %cst_30 [0] : vector<48x384xf32> to vector<384xf32>
    %33 = vector.shape_cast %32 : vector<384xf32> to vector<1x384xf32>
    %c0_31 = arith.constant 0 : index
    %c0_32 = arith.constant 0 : index
    %34 = vector.load %arg2[%c0_31, %c0_32] : memref<384x16xf32, #tpu.memory_space<vmem>>, vector<384x16xf32>
    %cst_33 = arith.constant dense<0.000000e+00> : vector<1x16xf32>
    %35 = tpu.matmul %30, %34, %cst_33 {dimension_numbers = #tpu.dot_dimension_numbers<[1], [0], [0], [1], [0, 0, 1, 1], [], []>} : vector<1x384xf32>, vector<384x16xf32>, vector<1x16xf32> -> vector<1x16xf32>
    %c0_34 = arith.constant 0 : index
    %c0_35 = arith.constant 0 : index
    %36 = vector.load %arg2[%c0_34, %c0_35] : memref<384x16xf32, #tpu.memory_space<vmem>>, vector<384x16xf32>
    %cst_36 = arith.constant dense<0.000000e+00> : vector<1x16xf32>
    %37 = tpu.matmul %33, %36, %cst_36 {dimension_numbers = #tpu.dot_dimension_numbers<[1], [0], [0], [1], [0, 0, 1, 1], [], []>} : vector<1x384xf32>, vector<384x16xf32>, vector<1x16xf32> -> vector<1x16xf32>
    %cst_37 = arith.constant 1.152000e+03 : f32
    %38 = vector.broadcast %cst_37 : f32 to vector<1x16xf32>
    %39 = arith.divf %35, %38 : vector<1x16xf32>
    %cst_38 = arith.constant 1.152000e+03 : f32
    %40 = vector.broadcast %cst_38 : f32 to vector<1x16xf32>
    %41 = arith.divf %37, %40 : vector<1x16xf32>
    %42 = arith.mulf %39, %39 : vector<1x16xf32>
    %43 = arith.subf %41, %42 : vector<1x16xf32>
    %c0_39 = arith.constant 0 : index
    %c0_40 = arith.constant 0 : index
    %44 = vector.load %arg4[%c0_39, %c0_40] : memref<1x16xf32, #tpu.memory_space<vmem>>, vector<1x16xf32>
    %cst_41 = arith.constant 9.99999974E-6 : f32
    %45 = vector.broadcast %cst_41 : f32 to vector<1x16xf32>
    %46 = arith.addf %43, %45 : vector<1x16xf32>
    %47 = math.rsqrt %46 : vector<1x16xf32>
    %48 = arith.mulf %44, %47 : vector<1x16xf32>
    %c0_42 = arith.constant 0 : index
    %c0_43 = arith.constant 0 : index
    %49 = vector.load %arg5[%c0_42, %c0_43] : memref<1x16xf32, #tpu.memory_space<vmem>>, vector<1x16xf32>
    %50 = arith.mulf %39, %48 : vector<1x16xf32>
    %51 = arith.subf %49, %50 : vector<1x16xf32>
    %c0_44 = arith.constant 0 : index
    %c0_45 = arith.constant 0 : index
    %52 = vector.load %arg3[%c0_44, %c0_45] : memref<16x384xf32, #tpu.memory_space<vmem>>, vector<16x384xf32>
    %cst_46 = arith.constant dense<0.000000e+00> : vector<1x384xf32>
    %53 = tpu.matmul %48, %52, %cst_46 {dimension_numbers = #tpu.dot_dimension_numbers<[1], [0], [0], [1], [0, 0, 1, 1], [], []>} : vector<1x16xf32>, vector<16x384xf32>, vector<1x384xf32> -> vector<1x384xf32>
    %c0_47 = arith.constant 0 : index
    %c0_48 = arith.constant 0 : index
    %54 = vector.load %arg3[%c0_47, %c0_48] : memref<16x384xf32, #tpu.memory_space<vmem>>, vector<16x384xf32>
    %cst_49 = arith.constant dense<0.000000e+00> : vector<1x384xf32>
    %55 = tpu.matmul %51, %54, %cst_49 {dimension_numbers = #tpu.dot_dimension_numbers<[1], [0], [0], [1], [0, 0, 1, 1], [], []>} : vector<1x16xf32>, vector<16x384xf32>, vector<1x384xf32> -> vector<1x384xf32>
    %56 = vector.broadcast %53 : vector<1x384xf32> to vector<48x384xf32>
    %57 = arith.mulf %28, %56 : vector<48x384xf32>
    %58 = vector.broadcast %55 : vector<1x384xf32> to vector<48x384xf32>
    %59 = arith.addf %57, %58 : vector<48x384xf32>
    %cst_50 = arith.constant 0.000000e+00 : f32
    %60 = vector.broadcast %cst_50 : f32 to vector<48x384xf32>
    %61 = arith.maximumf %59, %60 : vector<48x384xf32>
    %62 = vector.shape_cast %61 : vector<48x384xf32> to vector<2x12x2x384xf32>
    %63 = vector.extract_strided_slice %62 {offsets = [0, 0, 0, 0], sizes = [2, 12, 1, 384], strides = [1, 1, 1, 1]} : vector<2x12x2x384xf32> to vector<2x12x1x384xf32>
    %64 = vector.shape_cast %63 : vector<2x12x1x384xf32> to vector<2x12x384xf32>
    %65 = vector.extract_strided_slice %62 {offsets = [0, 0, 1, 0], sizes = [2, 12, 1, 384], strides = [1, 1, 1, 1]} : vector<2x12x2x384xf32> to vector<2x12x1x384xf32>
    %66 = vector.shape_cast %65 : vector<2x12x1x384xf32> to vector<2x12x384xf32>
    %67 = arith.maximumf %64, %66 : vector<2x12x384xf32>
    %68 = vector.shape_cast %67 : vector<2x12x384xf32> to vector<24x384xf32>
    %c0_51 = arith.constant 0 : index
    %c0_52 = arith.constant 0 : index
    %69 = vector.load %arg6[%c0_51, %c0_52] : memref<384x192xf32, #tpu.memory_space<vmem>>, vector<384x192xf32>
    %cst_53 = arith.constant dense<0.000000e+00> : vector<24x192xf32>
    %70 = tpu.matmul %68, %69, %cst_53 {dimension_numbers = #tpu.dot_dimension_numbers<[1], [0], [0], [1], [0, 0, 1, 1], [], []>} : vector<24x384xf32>, vector<384x192xf32>, vector<24x192xf32> -> vector<24x192xf32>
    %c0_54 = arith.constant 0 : index
    %c0_55 = arith.constant 0 : index
    %71 = vector.load %arg7[%c0_54, %c0_55] : memref<384x192xf32, #tpu.memory_space<vmem>>, vector<384x192xf32>
    %cst_56 = arith.constant dense<0.000000e+00> : vector<24x192xf32>
    %72 = tpu.matmul %68, %71, %cst_56 {dimension_numbers = #tpu.dot_dimension_numbers<[1], [0], [0], [1], [0, 0, 1, 1], [], []>} : vector<24x384xf32>, vector<384x192xf32>, vector<24x192xf32> -> vector<24x192xf32>
    %73 = arith.maximumf %70, %72 : vector<24x192xf32>
    %74 = vector.shape_cast %73 : vector<24x192xf32> to vector<2x12x192xf32>
    %75 = vector.extract_strided_slice %74 {offsets = [0, 0, 0], sizes = [2, 8, 192], strides = [1, 1, 1]} : vector<2x12x192xf32> to vector<2x8x192xf32>
    %76 = vector.shape_cast %75 : vector<2x8x192xf32> to vector<16x192xf32>
    %c0_57 = arith.constant 0 : index
    %c0_58 = arith.constant 0 : index
    %c0_59 = arith.constant 0 : index
    %77 = vector.load %arg8[%c0_57, %c0_58, %c0_59] : memref<5x192x256xf32, #tpu.memory_space<vmem>>, vector<1x192x256xf32>
    %78 = vector.shape_cast %77 : vector<1x192x256xf32> to vector<192x256xf32>
    %cst_60 = arith.constant dense<0.000000e+00> : vector<16x256xf32>
    %79 = tpu.matmul %76, %78, %cst_60 {dimension_numbers = #tpu.dot_dimension_numbers<[1], [0], [0], [1], [0, 0, 1, 1], [], []>} : vector<16x192xf32>, vector<192x256xf32>, vector<16x256xf32> -> vector<16x256xf32>
    %80 = vector.extract_strided_slice %74 {offsets = [0, 1, 0], sizes = [2, 8, 192], strides = [1, 1, 1]} : vector<2x12x192xf32> to vector<2x8x192xf32>
    %81 = vector.shape_cast %80 : vector<2x8x192xf32> to vector<16x192xf32>
    %c1_61 = arith.constant 1 : index
    %c0_62 = arith.constant 0 : index
    %c0_63 = arith.constant 0 : index
    %82 = vector.load %arg8[%c1_61, %c0_62, %c0_63] : memref<5x192x256xf32, #tpu.memory_space<vmem>>, vector<1x192x256xf32>
    %83 = vector.shape_cast %82 : vector<1x192x256xf32> to vector<192x256xf32>
    %cst_64 = arith.constant dense<0.000000e+00> : vector<16x256xf32>
    %84 = tpu.matmul %81, %83, %cst_64 {dimension_numbers = #tpu.dot_dimension_numbers<[1], [0], [0], [1], [0, 0, 1, 1], [], []>} : vector<16x192xf32>, vector<192x256xf32>, vector<16x256xf32> -> vector<16x256xf32>
    %85 = arith.addf %79, %84 : vector<16x256xf32>
    %86 = vector.extract_strided_slice %74 {offsets = [0, 2, 0], sizes = [2, 8, 192], strides = [1, 1, 1]} : vector<2x12x192xf32> to vector<2x8x192xf32>
    %87 = vector.shape_cast %86 : vector<2x8x192xf32> to vector<16x192xf32>
    %c2_65 = arith.constant 2 : index
    %c0_66 = arith.constant 0 : index
    %c0_67 = arith.constant 0 : index
    %88 = vector.load %arg8[%c2_65, %c0_66, %c0_67] : memref<5x192x256xf32, #tpu.memory_space<vmem>>, vector<1x192x256xf32>
    %89 = vector.shape_cast %88 : vector<1x192x256xf32> to vector<192x256xf32>
    %cst_68 = arith.constant dense<0.000000e+00> : vector<16x256xf32>
    %90 = tpu.matmul %87, %89, %cst_68 {dimension_numbers = #tpu.dot_dimension_numbers<[1], [0], [0], [1], [0, 0, 1, 1], [], []>} : vector<16x192xf32>, vector<192x256xf32>, vector<16x256xf32> -> vector<16x256xf32>
    %91 = arith.addf %85, %90 : vector<16x256xf32>
    %92 = vector.extract_strided_slice %74 {offsets = [0, 3, 0], sizes = [2, 8, 192], strides = [1, 1, 1]} : vector<2x12x192xf32> to vector<2x8x192xf32>
    %93 = vector.shape_cast %92 : vector<2x8x192xf32> to vector<16x192xf32>
    %c3_69 = arith.constant 3 : index
    %c0_70 = arith.constant 0 : index
    %c0_71 = arith.constant 0 : index
    %94 = vector.load %arg8[%c3_69, %c0_70, %c0_71] : memref<5x192x256xf32, #tpu.memory_space<vmem>>, vector<1x192x256xf32>
    %95 = vector.shape_cast %94 : vector<1x192x256xf32> to vector<192x256xf32>
    %cst_72 = arith.constant dense<0.000000e+00> : vector<16x256xf32>
    %96 = tpu.matmul %93, %95, %cst_72 {dimension_numbers = #tpu.dot_dimension_numbers<[1], [0], [0], [1], [0, 0, 1, 1], [], []>} : vector<16x192xf32>, vector<192x256xf32>, vector<16x256xf32> -> vector<16x256xf32>
    %97 = arith.addf %91, %96 : vector<16x256xf32>
    %98 = vector.extract_strided_slice %74 {offsets = [0, 4, 0], sizes = [2, 8, 192], strides = [1, 1, 1]} : vector<2x12x192xf32> to vector<2x8x192xf32>
    %99 = vector.shape_cast %98 : vector<2x8x192xf32> to vector<16x192xf32>
    %c4_73 = arith.constant 4 : index
    %c0_74 = arith.constant 0 : index
    %c0_75 = arith.constant 0 : index
    %100 = vector.load %arg8[%c4_73, %c0_74, %c0_75] : memref<5x192x256xf32, #tpu.memory_space<vmem>>, vector<1x192x256xf32>
    %101 = vector.shape_cast %100 : vector<1x192x256xf32> to vector<192x256xf32>
    %cst_76 = arith.constant dense<0.000000e+00> : vector<16x256xf32>
    %102 = tpu.matmul %99, %101, %cst_76 {dimension_numbers = #tpu.dot_dimension_numbers<[1], [0], [0], [1], [0, 0, 1, 1], [], []>} : vector<16x192xf32>, vector<192x256xf32>, vector<16x256xf32> -> vector<16x256xf32>
    %103 = arith.addf %97, %102 : vector<16x256xf32>
    %cst_77 = arith.constant dense<0.000000e+00> : vector<256xf32>
    %104 = vector.multi_reduction <add>, %103, %cst_77 [0] : vector<16x256xf32> to vector<256xf32>
    %105 = vector.shape_cast %104 : vector<256xf32> to vector<1x256xf32>
    %106 = arith.mulf %103, %103 : vector<16x256xf32>
    %cst_78 = arith.constant dense<0.000000e+00> : vector<256xf32>
    %107 = vector.multi_reduction <add>, %106, %cst_78 [0] : vector<16x256xf32> to vector<256xf32>
    %108 = vector.shape_cast %107 : vector<256xf32> to vector<1x256xf32>
    %c0_79 = arith.constant 0 : index
    %c0_80 = arith.constant 0 : index
    %109 = vector.load %arg9[%c0_79, %c0_80] : memref<256x32xf32, #tpu.memory_space<vmem>>, vector<256x32xf32>
    %cst_81 = arith.constant dense<0.000000e+00> : vector<1x32xf32>
    %110 = tpu.matmul %105, %109, %cst_81 {dimension_numbers = #tpu.dot_dimension_numbers<[1], [0], [0], [1], [0, 0, 1, 1], [], []>} : vector<1x256xf32>, vector<256x32xf32>, vector<1x32xf32> -> vector<1x32xf32>
    %c0_82 = arith.constant 0 : index
    %c0_83 = arith.constant 0 : index
    %111 = vector.load %arg9[%c0_82, %c0_83] : memref<256x32xf32, #tpu.memory_space<vmem>>, vector<256x32xf32>
    %cst_84 = arith.constant dense<0.000000e+00> : vector<1x32xf32>
    %112 = tpu.matmul %108, %111, %cst_84 {dimension_numbers = #tpu.dot_dimension_numbers<[1], [0], [0], [1], [0, 0, 1, 1], [], []>} : vector<1x256xf32>, vector<256x32xf32>, vector<1x32xf32> -> vector<1x32xf32>
    %cst_85 = arith.constant 1.280000e+02 : f32
    %113 = vector.broadcast %cst_85 : f32 to vector<1x32xf32>
    %114 = arith.divf %110, %113 : vector<1x32xf32>
    %cst_86 = arith.constant 1.280000e+02 : f32
    %115 = vector.broadcast %cst_86 : f32 to vector<1x32xf32>
    %116 = arith.divf %112, %115 : vector<1x32xf32>
    %117 = arith.mulf %114, %114 : vector<1x32xf32>
    %118 = arith.subf %116, %117 : vector<1x32xf32>
    %c0_87 = arith.constant 0 : index
    %c0_88 = arith.constant 0 : index
    %119 = vector.load %arg11[%c0_87, %c0_88] : memref<1x32xf32, #tpu.memory_space<vmem>>, vector<1x32xf32>
    %cst_89 = arith.constant 9.99999974E-6 : f32
    %120 = vector.broadcast %cst_89 : f32 to vector<1x32xf32>
    %121 = arith.addf %118, %120 : vector<1x32xf32>
    %122 = math.rsqrt %121 : vector<1x32xf32>
    %123 = arith.mulf %119, %122 : vector<1x32xf32>
    %c0_90 = arith.constant 0 : index
    %c0_91 = arith.constant 0 : index
    %124 = vector.load %arg12[%c0_90, %c0_91] : memref<1x32xf32, #tpu.memory_space<vmem>>, vector<1x32xf32>
    %125 = arith.mulf %114, %123 : vector<1x32xf32>
    %126 = arith.subf %124, %125 : vector<1x32xf32>
    %c0_92 = arith.constant 0 : index
    %c0_93 = arith.constant 0 : index
    %127 = vector.load %arg10[%c0_92, %c0_93] : memref<32x256xf32, #tpu.memory_space<vmem>>, vector<32x256xf32>
    %cst_94 = arith.constant dense<0.000000e+00> : vector<1x256xf32>
    %128 = tpu.matmul %123, %127, %cst_94 {dimension_numbers = #tpu.dot_dimension_numbers<[1], [0], [0], [1], [0, 0, 1, 1], [], []>} : vector<1x32xf32>, vector<32x256xf32>, vector<1x256xf32> -> vector<1x256xf32>
    %c0_95 = arith.constant 0 : index
    %c0_96 = arith.constant 0 : index
    %129 = vector.load %arg10[%c0_95, %c0_96] : memref<32x256xf32, #tpu.memory_space<vmem>>, vector<32x256xf32>
    %cst_97 = arith.constant dense<0.000000e+00> : vector<1x256xf32>
    %130 = tpu.matmul %126, %129, %cst_97 {dimension_numbers = #tpu.dot_dimension_numbers<[1], [0], [0], [1], [0, 0, 1, 1], [], []>} : vector<1x32xf32>, vector<32x256xf32>, vector<1x256xf32> -> vector<1x256xf32>
    %131 = vector.broadcast %128 : vector<1x256xf32> to vector<16x256xf32>
    %132 = arith.mulf %103, %131 : vector<16x256xf32>
    %133 = vector.broadcast %130 : vector<1x256xf32> to vector<16x256xf32>
    %134 = arith.addf %132, %133 : vector<16x256xf32>
    %cst_98 = arith.constant 0.000000e+00 : f32
    %135 = vector.broadcast %cst_98 : f32 to vector<16x256xf32>
    %136 = arith.maximumf %134, %135 : vector<16x256xf32>
    %137 = vector.shape_cast %136 : vector<16x256xf32> to vector<2x4x2x256xf32>
    %138 = vector.extract_strided_slice %137 {offsets = [0, 0, 0, 0], sizes = [2, 4, 1, 256], strides = [1, 1, 1, 1]} : vector<2x4x2x256xf32> to vector<2x4x1x256xf32>
    %139 = vector.shape_cast %138 : vector<2x4x1x256xf32> to vector<2x4x256xf32>
    %140 = vector.extract_strided_slice %137 {offsets = [0, 0, 1, 0], sizes = [2, 4, 1, 256], strides = [1, 1, 1, 1]} : vector<2x4x2x256xf32> to vector<2x4x1x256xf32>
    %141 = vector.shape_cast %140 : vector<2x4x1x256xf32> to vector<2x4x256xf32>
    %142 = arith.maximumf %139, %141 : vector<2x4x256xf32>
    %143 = vector.shape_cast %142 : vector<2x4x256xf32> to vector<8x256xf32>
    %c0_99 = arith.constant 0 : index
    %c0_100 = arith.constant 0 : index
    %144 = vector.load %arg13[%c0_99, %c0_100] : memref<256x128xf32, #tpu.memory_space<vmem>>, vector<256x128xf32>
    %cst_101 = arith.constant dense<0.000000e+00> : vector<8x128xf32>
    %145 = tpu.matmul %143, %144, %cst_101 {dimension_numbers = #tpu.dot_dimension_numbers<[1], [0], [0], [1], [0, 0, 1, 1], [], []>} : vector<8x256xf32>, vector<256x128xf32>, vector<8x128xf32> -> vector<8x128xf32>
    %c0_102 = arith.constant 0 : index
    %c0_103 = arith.constant 0 : index
    %146 = vector.load %arg14[%c0_102, %c0_103] : memref<256x128xf32, #tpu.memory_space<vmem>>, vector<256x128xf32>
    %cst_104 = arith.constant dense<0.000000e+00> : vector<8x128xf32>
    %147 = tpu.matmul %143, %146, %cst_104 {dimension_numbers = #tpu.dot_dimension_numbers<[1], [0], [0], [1], [0, 0, 1, 1], [], []>} : vector<8x256xf32>, vector<256x128xf32>, vector<8x128xf32> -> vector<8x128xf32>
    %148 = arith.maximumf %145, %147 : vector<8x128xf32>
    %149 = vector.shape_cast %148 : vector<8x128xf32> to vector<2x4x128xf32>
    %150 = vector.extract_strided_slice %149 {offsets = [0, 0, 0], sizes = [2, 1, 128], strides = [1, 1, 1]} : vector<2x4x128xf32> to vector<2x1x128xf32>
    %151 = vector.shape_cast %150 : vector<2x1x128xf32> to vector<2x128xf32>
    %c0_105 = arith.constant 0 : index
    %c0_106 = arith.constant 0 : index
    %c0_107 = arith.constant 0 : index
    %152 = vector.load %arg15[%c0_105, %c0_106, %c0_107] : memref<4x128x10xf32, #tpu.memory_space<vmem>>, vector<1x128x10xf32>
    %153 = vector.shape_cast %152 : vector<1x128x10xf32> to vector<128x10xf32>
    %cst_108 = arith.constant dense<0.000000e+00> : vector<2x10xf32>
    %154 = tpu.matmul %151, %153, %cst_108 {dimension_numbers = #tpu.dot_dimension_numbers<[1], [0], [0], [1], [0, 0, 1, 1], [], []>} : vector<2x128xf32>, vector<128x10xf32>, vector<2x10xf32> -> vector<2x10xf32>
    %155 = vector.extract_strided_slice %149 {offsets = [0, 1, 0], sizes = [2, 1, 128], strides = [1, 1, 1]} : vector<2x4x128xf32> to vector<2x1x128xf32>
    %156 = vector.shape_cast %155 : vector<2x1x128xf32> to vector<2x128xf32>
    %c1_109 = arith.constant 1 : index
    %c0_110 = arith.constant 0 : index
    %c0_111 = arith.constant 0 : index
    %157 = vector.load %arg15[%c1_109, %c0_110, %c0_111] : memref<4x128x10xf32, #tpu.memory_space<vmem>>, vector<1x128x10xf32>
    %158 = vector.shape_cast %157 : vector<1x128x10xf32> to vector<128x10xf32>
    %cst_112 = arith.constant dense<0.000000e+00> : vector<2x10xf32>
    %159 = tpu.matmul %156, %158, %cst_112 {dimension_numbers = #tpu.dot_dimension_numbers<[1], [0], [0], [1], [0, 0, 1, 1], [], []>} : vector<2x128xf32>, vector<128x10xf32>, vector<2x10xf32> -> vector<2x10xf32>
    %160 = arith.addf %154, %159 : vector<2x10xf32>
    %161 = vector.extract_strided_slice %149 {offsets = [0, 2, 0], sizes = [2, 1, 128], strides = [1, 1, 1]} : vector<2x4x128xf32> to vector<2x1x128xf32>
    %162 = vector.shape_cast %161 : vector<2x1x128xf32> to vector<2x128xf32>
    %c2_113 = arith.constant 2 : index
    %c0_114 = arith.constant 0 : index
    %c0_115 = arith.constant 0 : index
    %163 = vector.load %arg15[%c2_113, %c0_114, %c0_115] : memref<4x128x10xf32, #tpu.memory_space<vmem>>, vector<1x128x10xf32>
    %164 = vector.shape_cast %163 : vector<1x128x10xf32> to vector<128x10xf32>
    %cst_116 = arith.constant dense<0.000000e+00> : vector<2x10xf32>
    %165 = tpu.matmul %162, %164, %cst_116 {dimension_numbers = #tpu.dot_dimension_numbers<[1], [0], [0], [1], [0, 0, 1, 1], [], []>} : vector<2x128xf32>, vector<128x10xf32>, vector<2x10xf32> -> vector<2x10xf32>
    %166 = arith.addf %160, %165 : vector<2x10xf32>
    %167 = vector.extract_strided_slice %149 {offsets = [0, 3, 0], sizes = [2, 1, 128], strides = [1, 1, 1]} : vector<2x4x128xf32> to vector<2x1x128xf32>
    %168 = vector.shape_cast %167 : vector<2x1x128xf32> to vector<2x128xf32>
    %c3_117 = arith.constant 3 : index
    %c0_118 = arith.constant 0 : index
    %c0_119 = arith.constant 0 : index
    %169 = vector.load %arg15[%c3_117, %c0_118, %c0_119] : memref<4x128x10xf32, #tpu.memory_space<vmem>>, vector<1x128x10xf32>
    %170 = vector.shape_cast %169 : vector<1x128x10xf32> to vector<128x10xf32>
    %cst_120 = arith.constant dense<0.000000e+00> : vector<2x10xf32>
    %171 = tpu.matmul %168, %170, %cst_120 {dimension_numbers = #tpu.dot_dimension_numbers<[1], [0], [0], [1], [0, 0, 1, 1], [], []>} : vector<2x128xf32>, vector<128x10xf32>, vector<2x10xf32> -> vector<2x10xf32>
    %172 = arith.addf %166, %171 : vector<2x10xf32>
    %c0_121 = arith.constant 0 : index
    %c0_122 = arith.constant 0 : index
    %173 = vector.load %arg16[%c0_121, %c0_122] : memref<1x10xf32, #tpu.memory_space<vmem>>, vector<1x10xf32>
    %174 = vector.broadcast %173 : vector<1x10xf32> to vector<2x10xf32>
    %175 = arith.addf %172, %174 : vector<2x10xf32>
    %c0_123 = arith.constant 0 : index
    %c0_124 = arith.constant 0 : index
    %176 = vector.load %arg17[%c0_123, %c0_124] : memref<2x10xf32, #tpu.memory_space<vmem>>, vector<2x10xf32>
    tpu.vector_store %arg17[%c0_123, %c0_124], %175 {strides = array<i32>} : memref<2x10xf32, #tpu.memory_space<vmem>>, vector<2x10xf32>,
    return
  }
}

</mosaic_0001>

<llo_original>
// kernel: cnn_forward.1
$region0: #{cnn_forward.1}
  #allocation0 [shape = 'u32[]', space=smem, size = 0x4, offset = 0x4, fixed_abs, tag = 'smem constant byte address 0x4 - core index']
  #allocation1 [shape = 'u32[144,128]{1,0:T(1,128)}', space=vmem, size = 0x12000, scoped, tag = 'internal scratch']
  %s0 = inlined_call_operand.vmem [shape: f32[2,28,28], index: 0, kind: input, shape index: {}]
  %s1 = inlined_call_operand.vmem [shape: f32[5,28,384], index: 1, kind: input, shape index: {}]
  %s2 = inlined_call_operand.vmem [shape: f32[384,16], index: 2, kind: input, shape index: {}]
  %s3 = inlined_call_operand.hbm [shape: f32[16,384], index: 3, kind: input, shape index: {}]
  %s4 = inlined_call_operand.vmem [shape: f32[1,16], index: 4, kind: input, shape index: {}]
  %s5 = inlined_call_operand.vmem [shape: f32[1,16], index: 5, kind: input, shape index: {}]
  %s6 = inlined_call_operand.vmem [shape: f32[384,192], index: 6, kind: input, shape index: {}]
  %s7 = inlined_call_operand.vmem [shape: f32[384,192], index: 7, kind: input, shape index: {}]
  %s8 = inlined_call_operand.vmem [shape: f32[5,192,256], index: 8, kind: input, shape index: {}]
  %s9 = inlined_call_operand.vmem [shape: f32[256,32], index: 9, kind: input, shape index: {}]
  %s10 = inlined_call_operand.vmem [shape: f32[32,256], index: 10, kind: input, shape index: {}]
  %s11 = inlined_call_operand.hbm [shape: f32[1,32], index: 11, kind: input, shape index: {}]
  %s12 = inlined_call_operand.hbm [shape: f32[1,32], index: 12, kind: input, shape index: {}]
  %s13 = inlined_call_operand.vmem [shape: f32[256,128], index: 13, kind: input, shape index: {}]
  %s14 = inlined_call_operand.vmem [shape: f32[256,128], index: 14, kind: input, shape index: {}]
  %s15 = inlined_call_operand.vmem [shape: f32[4,128,10], index: 15, kind: input, shape index: {}]
  %s16 = inlined_call_operand.hbm [shape: f32[1,10], index: 16, kind: input, shape index: {}]
  %s17 = inlined_call_operand.hbm [shape: f32[2,10], index: 17, kind: output, shape index: {}]
  %s18 = sld [smem:[#allocation0]]
  $region94: #{cnn_forward.1} parent=0
    _
  %s20 = ssub.s32 1, %s18
  %s21 = scalar_select 0, %s20, %s18
  $region1: #{cnn_forward.1} parent=0
    #allocation2 [shape = 'u8[24576]{0}', space=vmem, size = 0x6000, scoped, tag = 'input window, operand 3, single buffered']
    #allocation3 [shape = 's32[1]{0}', space=sflag, size = 0x4, scoped, tag = 'scoped memory for cnn_forward.1']
    #allocation4 [shape = 's32[1]{0}', space=sflag, size = 0x4, scoped, tag = 'scoped memory for cnn_forward.1']
    #allocation5 [shape = 'u8[512]{0}', space=vmem, size = 0x400, scoped, tag = 'input window, operand 11, single buffered']
    #allocation6 [shape = 's32[1]{0}', space=sflag, size = 0x4, scoped, tag = 'scoped memory for cnn_forward.1']
    #allocation7 [shape = 'u8[512]{0}', space=vmem, size = 0x400, scoped, tag = 'input window, operand 12, single buffered']
    #allocation8 [shape = 'u8[512]{0}', space=vmem, size = 0x400, scoped, tag = 'input window, operand 16, single buffered']
    #allocation9 [shape = 's32[1]{0}', space=sflag, size = 0x4, scoped, tag = 'scoped memory for cnn_forward.1']
    #allocation10 [shape = 'u8[1024]{0}', space=vmem, size = 0x400, scoped, tag = 'output window, operand 0, single buffered']
    %22 = vsyncpa [#allocation3], 0
    %23 = vsyncpa [#allocation6], 0
    %24 = vsyncpa [#allocation9], 0
    %25 = vsyncpa [#allocation4], 0
    // Predicated region
    $region2: #{cnn_forward.1} parent=1 // pred_check
      _
    $region3: #{cnn_forward.1} parent=1 // pred_check_branch
      %27 = sbr.rel (0) target = $region5
    $region4: #{cnn_forward.1} parent=1 // pred_region
      _
    $region5: #{cnn_forward.1} parent=1 // pred_fallthru
      _
    // Predicated region
    $region6: #{cnn_forward.1} parent=1 // pred_check
      _
    $region7: #{cnn_forward.1} parent=1 // pred_check_branch
      %29 = sbr.rel (0) target = $region9
    $region8: #{cnn_forward.1} parent=1 // pred_region
      _
    $region9: #{cnn_forward.1} parent=1 // pred_fallthru
      _
    // Predicated region
    $region10: #{cnn_forward.1} parent=1 // pred_check
      _
    $region11: #{cnn_forward.1} parent=1 // pred_check_branch
      %31 = sbr.rel (0) target = $region13
    $region12: #{cnn_forward.1} parent=1 // pred_region
      _
    $region13: #{cnn_forward.1} parent=1 // pred_fallthru
      _
    // Predicated region
    $region14: #{cnn_forward.1} parent=1 // pred_check
      _
    $region15: #{cnn_forward.1} parent=1 // pred_check_branch
      %33 = sbr.rel (0) target = $region17
    $region16: #{cnn_forward.1} parent=1 // pred_region
      %s35 = ssub.s32 768, 768
      %36 = vsyncadd [#allocation3], %s35
      %s37 = sshll.u32 [#allocation2], 4
      %s38 = int_to_ptr.vmem [resolvable:$true] %s37
      %43 = dma.hbm_to_vmem [thread:$0]  %s3, 768, %s38, [#allocation3], 384, 384, 24
    $region17: #{cnn_forward.1} parent=1 // pred_fallthru
      _
    // Predicated region
    $region18: #{cnn_forward.1} parent=1 // pred_check
      _
    $region19: #{cnn_forward.1} parent=1 // pred_check_branch
      %45 = sbr.rel (0) target = $region21
    $region20: #{cnn_forward.1} parent=1 // pred_region
      _
    $region21: #{cnn_forward.1} parent=1 // pred_fallthru
      _
    // Predicated region
    $region22: #{cnn_forward.1} parent=1 // pred_check
      _
    $region23: #{cnn_forward.1} parent=1 // pred_check_branch
      %47 = sbr.rel (0) target = $region25
    $region24: #{cnn_forward.1} parent=1 // pred_region
      _
    $region25: #{cnn_forward.1} parent=1 // pred_fallthru
      _
    // Predicated region
    $region26: #{cnn_forward.1} parent=1 // pred_check
      _
    $region27: #{cnn_forward.1} parent=1 // pred_check_branch
      %49 = sbr.rel (0) target = $region29
    $region28: #{cnn_forward.1} parent=1 // pred_region
      _
    $region29: #{cnn_forward.1} parent=1 // pred_fallthru
      _
    // Predicated region
    $region30: #{cnn_forward.1} parent=1 // pred_check
      _
    $region31: #{cnn_forward.1} parent=1 // pred_check_branch
      %51 = sbr.rel (0) target = $region33
    $region32: #{cnn_forward.1} parent=1 // pred_region
      _
    $region33: #{cnn_forward.1} parent=1 // pred_fallthru
      _
    // Predicated region
    $region34: #{cnn_forward.1} parent=1 // pred_check
      _
    $region35: #{cnn_forward.1} parent=1 // pred_check_branch
      %53 = sbr.rel (0) target = $region37
    $region36: #{cnn_forward.1} parent=1 // pred_region
      _
    $region37: #{cnn_forward.1} parent=1 // pred_fallthru
      _
    // Predicated region
    $region38: #{cnn_forward.1} parent=1 // pred_check
      _
    $region39: #{cnn_forward.1} parent=1 // pred_check_branch
      %55 = sbr.rel (0) target = $region41
    $region40: #{cnn_forward.1} parent=1 // pred_region
      _
    $region41: #{cnn_forward.1} parent=1 // pred_fallthru
      _
    // Predicated region
    $region42: #{cnn_forward.1} parent=1 // pred_check
      _
    $region43: #{cnn_forward.1} parent=1 // pred_check_branch
      %57 = sbr.rel (0) target = $region45
    $region44: #{cnn_forward.1} parent=1 // pred_region
      _
    $region45: #{cnn_forward.1} parent=1 // pred_fallthru
      _
    // Predicated region
    $region46: #{cnn_forward.1} parent=1 // pred_check
      _
    $region47: #{cnn_forward.1} parent=1 // pred_check_branch
      %59 = sbr.rel (0) target = $region49
    $region48: #{cnn_forward.1} parent=1 // pred_region
      %s61 = ssub.s32 16, 16
      %62 = vsyncadd [#allocation6], %s61
      %s64 = sshll.u32 [#allocation5], 4
      %s65 = int_to_ptr.vmem [resolvable:$true] %s64
      %67 = dma.hbm_to_vmem [thread:$0]  %s11, 16, %s65, [#allocation6]
    $region49: #{cnn_forward.1} parent=1 // pred_fallthru
      _
    // Predicated region
    $region50: #{cnn_forward.1} parent=1 // pred_check
      _
    $region51: #{cnn_forward.1} parent=1 // pred_check_branch
      %69 = sbr.rel (0) target = $region53
    $region52: #{cnn_forward.1} parent=1 // pred_region
      %s71 = ssub.s32 16, 16
      %72 = vsyncadd [#allocation6], %s71
      %s74 = sshll.u32 [#allocation7], 4
      %s75 = int_to_ptr.vmem [resolvable:$true] %s74
      %77 = dma.hbm_to_vmem [thread:$0]  %s12, 16, %s75, [#allocation6]
    $region53: #{cnn_forward.1} parent=1 // pred_fallthru
      _
    // Predicated region
    $region54: #{cnn_forward.1} parent=1 // pred_check
      _
    $region55: #{cnn_forward.1} parent=1 // pred_check_branch
      %79 = sbr.rel (0) target = $region57
    $region56: #{cnn_forward.1} parent=1 // pred_region
      _
    $region57: #{cnn_forward.1} parent=1 // pred_fallthru
      _
    // Predicated region
    $region58: #{cnn_forward.1} parent=1 // pred_check
      _
    $region59: #{cnn_forward.1} parent=1 // pred_check_branch
      %81 = sbr.rel (0) target = $region61
    $region60: #{cnn_forward.1} parent=1 // pred_region
      _
    $region61: #{cnn_forward.1} parent=1 // pred_fallthru
      _
    // Predicated region
    $region62: #{cnn_forward.1} parent=1 // pred_check
      _
    $region63: #{cnn_forward.1} parent=1 // pred_check_branch
      %83 = sbr.rel (0) target = $region65
    $region64: #{cnn_forward.1} parent=1 // pred_region
      _
    $region65: #{cnn_forward.1} parent=1 // pred_fallthru
      _
    // Predicated region
    $region66: #{cnn_forward.1} parent=1 // pred_check
      _
    $region67: #{cnn_forward.1} parent=1 // pred_check_branch
      %85 = sbr.rel (0) target = $region69
    $region68: #{cnn_forward.1} parent=1 // pred_region
      %s87 = ssub.s32 16, 16
      %88 = vsyncadd [#allocation9], %s87
      %s90 = sshll.u32 [#allocation8], 4
      %s91 = int_to_ptr.vmem [resolvable:$true] %s90
      %93 = dma.hbm_to_vmem [thread:$0]  %s16, 16, %s91, [#allocation9]
    $region69: #{cnn_forward.1} parent=1 // pred_fallthru
      _
    // Predicated region
    $region70: #{cnn_forward.1} parent=1 // pred_check
      _
    $region71: #{cnn_forward.1} parent=1 // pred_check_branch
      %95 = sbr.rel (0) target = $region73
    $region72: #{cnn_forward.1} parent=1 // pred_region
      %96 = dma.done [#allocation3], 768
    $region73: #{cnn_forward.1} parent=1 // pred_fallthru
      _
    // Predicated region
    $region74: #{cnn_forward.1} parent=1 // pred_check
      _
    $region75: #{cnn_forward.1} parent=1 // pred_check_branch
      %98 = sbr.rel (0) target = $region77
    $region76: #{cnn_forward.1} parent=1 // pred_region
      %99 = dma.done [#allocation6], 16
    $region77: #{cnn_forward.1} parent=1 // pred_fallthru
      _
    // Predicated region
    $region78: #{cnn_forward.1} parent=1 // pred_check
      _
    $region79: #{cnn_forward.1} parent=1 // pred_check_branch
      %101 = sbr.rel (0) target = $region81
    $region80: #{cnn_forward.1} parent=1 // pred_region
      %102 = dma.done [#allocation6], 16
    $region81: #{cnn_forward.1} parent=1 // pred_fallthru
      _
    // Predicated region
    $region82: #{cnn_forward.1} parent=1 // pred_check
      _
    $region83: #{cnn_forward.1} parent=1 // pred_check_branch
      %104 = sbr.rel (0) target = $region85
    $region84: #{cnn_forward.1} parent=1 // pred_region
      %105 = dma.done [#allocation9], 16
    $region85: #{cnn_forward.1} parent=1 // pred_fallthru
      _
    %v106 = vld [vmem:[%s0] sm:$0xff]
    %v107 = vld [vmem:[%s0 + $0x8] sm:$0xff]
    %v108 = vld [vmem:[%s0 + $0x10] sm:$0xff]
    %v109 = vld [vmem:[%s0 + $0x20] sm:$0xff]
    %v110 = vld [vmem:[%s0 + $0x28] sm:$0xff]
    %v111 = vld [vmem:[%s0 + $0x30] sm:$0xff]
    %v112 = vld [vmem:[%s1] sm:$0xff]
    %v113 = vld [vmem:[%s1 + $0x8] sm:$0xff]
    %v114 = vld [vmem:[%s1 + $0x10] sm:$0xff]
    %v115 = vld [vmem:[%s1 + $0x18] sm:$0xff]
    %v116 = vld [vmem:[%s1 + $0x20] sm:$0xff]
    %v117 = vld [vmem:[%s1 + $0x28] sm:$0xff]
    %v118 = vld [vmem:[%s1 + $0x30] sm:$0xff]
    %v119 = vld [vmem:[%s1 + $0x38] sm:$0xff]
    %v120 = vld [vmem:[%s1 + $0x40] sm:$0xff]
    %v121 = vld [vmem:[%s1 + $0x48] sm:$0xf]
    %v122 = vld [vmem:[%s1 + $0x50] sm:$0xf]
    %v123 = vld [vmem:[%s1 + $0x58] sm:$0xf]
    %v124 = vld [vmem:[%s0 + $0x1] sm:$0xff]
    %v125 = vld [vmem:[%s0 + $0x9] sm:$0xff]
    %v126 = vld [vmem:[%s0 + $0x11] sm:$0xff]
    %v127 = vld [vmem:[%s0 + $0x21] sm:$0xff]
    %v128 = vld [vmem:[%s0 + $0x29] sm:$0xff]
    %v129 = vld [vmem:[%s0 + $0x31] sm:$0xff]
    %s130 = scalar_lea.vmem %s1, 96
    %v131 = vld [vmem:[%s130] sm:$0xff]
    %v132 = vld [vmem:[%s130 + $0x8] sm:$0xff]
    %v133 = vld [vmem:[%s130 + $0x10] sm:$0xff]
    %v134 = vld [vmem:[%s130 + $0x18] sm:$0xff]
    %v135 = vld [vmem:[%s130 + $0x20] sm:$0xff]
    %v136 = vld [vmem:[%s130 + $0x28] sm:$0xff]
    %v137 = vld [vmem:[%s130 + $0x30] sm:$0xff]
    %v138 = vld [vmem:[%s130 + $0x38] sm:$0xff]
    %v139 = vld [vmem:[%s130 + $0x40] sm:$0xff]
    %v140 = vld [vmem:[%s130 + $0x48] sm:$0xf]
    %v141 = vld [vmem:[%s130 + $0x50] sm:$0xf]
    %v142 = vld [vmem:[%s130 + $0x58] sm:$0xf]
    %vm143 = vcmask 228352
    %v145 = vsel %vm143, %v124, 0
    %v148 = vsel %vm143, %v125, 0
    %v151 = vsel %vm143, %v126, 0
    %v154 = vsel %vm143, %v127, 0
    %v157 = vsel %vm143, %v128, 0
    %v160 = vsel %vm143, %v129, 0
    %vm162 = vcmask 1043456
    %v164 = vsel %vm162, %v140, 0
    %v167 = vsel %vm162, %v141, 0
    %v170 = vsel %vm162, %v142, 0
    %172 = vmatprep.subr.mxu0 0.0
    %173 = vmatpush1.msra.mxu0 0.0
    %174 = vmatprep.subr.mxu0 0.0
    %175 = vmatpush1.msra.mxu0 0.0
    %176 = vmatprep.subr.mxu0 0.0
    %177 = vmatpush1.msra.mxu0 0.0
    %178 = vmatprep.subr.mxu0 0.0
    %179 = vmatpush1.msra.mxu0 0.0
    %180 = vmatprep.subr.mxu0 0.0
    %181 = vmatpush1.msra.mxu0 0.0
    %182 = vmatprep.subr.mxu0 0.0
    %183 = vmatpush1.msra.mxu0 0.0
    %184 = vmatprep.subr.mxu0 0.0
    %185 = vmatpush1.msra.mxu0 0.0
    %186 = vmatprep.subr.mxu0 0.0
    %187 = vmatpush1.msra.mxu0 0.0
    %188 = vmatprep.subr.mxu0 0.0
    %189 = vmatpush1.msra.mxu0 0.0
    %190 = vmatprep.subr.mxu0 0.0
    %191 = vmatpush1.msra.mxu0 0.0
    %192 = vmatprep.subr.mxu0 0.0
    %193 = vmatpush1.msra.mxu0 0.0
    %194 = vmatprep.subr.mxu0 0.0
    %195 = vmatpush1.msra.mxu0 0.0
    %196 = vmatprep.subr.mxu0 %v167
    %197 = vmatpush1.msra.mxu0 %v164
    %198 = vmatprep.subr.mxu0 %v138
    %199 = vmatpush1.msra.mxu0 %v137
    %200 = vmatprep.subr.mxu0 %v135
    %201 = vmatpush1.msra.mxu0 %v134
    %202 = vmatprep.subr.mxu0 %v132
    %203 = vmatpush1.msra.mxu0 %v131
    %204 = vmatprep.subr.mxu0 0.0
    %205 = vmatpush2.msra.mxu0 0.0
    %206 = vmatprep.subr.mxu0 0.0
    %207 = vmatpush2.msra.mxu0 0.0
    %208 = vmatprep.subr.mxu0 0.0
    %209 = vmatpush2.msra.mxu0 0.0
    %210 = vmatprep.subr.mxu0 0.0
    %211 = vmatpush2.msra.mxu0 0.0
    %212 = vmatprep.subr.mxu0 0.0
    %213 = vmatpush2.msra.mxu0 0.0
    %214 = vmatprep.subr.mxu0 0.0
    %215 = vmatpush2.msra.mxu0 0.0
    %216 = vmatprep.subr.mxu0 0.0
    %217 = vmatpush2.msra.mxu0 0.0
    %218 = vmatprep.subr.mxu0 0.0
    %219 = vmatpush2.msra.mxu0 0.0
    %220 = vmatprep.subr.mxu0 0.0
    %221 = vmatpush2.msra.mxu0 0.0
    %222 = vmatprep.subr.mxu0 0.0
    %223 = vmatpush2.msra.mxu0 0.0
    %224 = vmatprep.subr.mxu0 0.0
    %225 = vmatpush2.msra.mxu0 0.0
    %226 = vmatprep.subr.mxu0 0.0
    %227 = vmatpush2.msra.mxu0 0.0
    %228 = vmatprep.subr.mxu0 0.0
    %229 = vmatpush2.msra.mxu0 0.0
    %230 = vmatprep.subr.mxu0 0.0
    %231 = vmatpush2.msra.mxu0 0.0
    %232 = vmatprep.subr.mxu0 0.0
    %233 = vmatpush2.msra.mxu0 0.0
    %234 = vmatprep.subr.mxu0 0.0
    %235 = vmatpush2.msra.mxu0 0.0
    %236 = vmatprep.mubr.f32.mxu0 0.0
    %237 = vmatmul.mubr.f32.gmra.mxu0 %v145
    %v238 = vpop.f32.mrf.mxu0
    %v239 = vadd.f32 0.0, %v238
    %v240 = vpop.f32.mrf.mxu0
    %v241 = vadd.f32 0.0, %v240
    %242 = vmatprep.mubr.f32.mxu0 0.0
    %243 = vmatmul.mubr.f32.gmra.mxu0 %v148
    %v244 = vpop.f32.mrf.mxu0
    %v245 = vadd.f32 0.0, %v244
    %v246 = vpop.f32.mrf.mxu0
    %v247 = vadd.f32 0.0, %v246
    %248 = vmatprep.mubr.f32.mxu0 0.0
    %249 = vmatmul.mubr.f32.gmra.mxu0 %v151
    %v250 = vpop.f32.mrf.mxu0
    %v251 = vadd.f32 0.0, %v250
    %v252 = vpop.f32.mrf.mxu0
    %v253 = vadd.f32 0.0, %v252
    %254 = vmatprep.mubr.f32.mxu0 0.0
    %255 = vmatmul.mubr.f32.gmra.mxu0 %v154
    %v256 = vpop.f32.mrf.mxu0
    %v257 = vadd.f32 0.0, %v256
    %v258 = vpop.f32.mrf.mxu0
    %v259 = vadd.f32 0.0, %v258
    %260 = vmatprep.mubr.f32.mxu0 0.0
    %261 = vmatmul.mubr.f32.gmra.mxu0 %v157
    %v262 = vpop.f32.mrf.mxu0
    %v263 = vadd.f32 0.0, %v262
    %v264 = vpop.f32.mrf.mxu0
    %v265 = vadd.f32 0.0, %v264
    %266 = vmatprep.mubr.f32.mxu0 0.0
    %267 = vmatmul.mubr.f32.gmra.mxu0 %v160
    %v268 = vpop.f32.mrf.mxu0
    %v269 = vadd.f32 0.0, %v268
    %v270 = vpop.f32.mrf.mxu0
    %v271 = vadd.f32 0.0, %v270
    %272 = vdwg.mxu0
    %273 = vmatprep.subr.mxu0 0.0
    %274 = vmatpush1.msra.mxu0 0.0
    %275 = vmatprep.subr.mxu0 0.0
    %276 = vmatpush1.msra.mxu0 0.0
    %277 = vmatprep.subr.mxu0 0.0
    %278 = vmatpush1.msra.mxu0 0.0
    %279 = vmatprep.subr.mxu0 0.0
    %280 = vmatpush1.msra.mxu0 0.0
    %281 = vmatprep.subr.mxu0 0.0
    %282 = vmatpush1.msra.mxu0 0.0
    %283 = vmatprep.subr.mxu0 0.0
    %284 = vmatpush1.msra.mxu0 0.0
    %285 = vmatprep.subr.mxu0 0.0
    %286 = vmatpush1.msra.mxu0 0.0
    %287 = vmatprep.subr.mxu0 0.0
    %288 = vmatpush1.msra.mxu0 0.0
    %289 = vmatprep.subr.mxu0 0.0
    %290 = vmatpush1.msra.mxu0 0.0
    %291 = vmatprep.subr.mxu0 0.0
    %292 = vmatpush1.msra.mxu0 0.0
    %293 = vmatprep.subr.mxu0 0.0
    %294 = vmatpush1.msra.mxu0 0.0
    %295 = vmatprep.subr.mxu0 0.0
    %296 = vmatpush1.msra.mxu0 0.0
    %297 = vmatprep.subr.mxu0 0.0
    %298 = vmatpush1.msra.mxu0 %v170
    %299 = vmatprep.subr.mxu0 0.0
    %300 = vmatpush1.msra.mxu0 %v139
    %301 = vmatprep.subr.mxu0 0.0
    %302 = vmatpush1.msra.mxu0 %v136
    %303 = vmatprep.subr.mxu0 0.0
    %304 = vmatpush1.msra.mxu0 %v133
    %305 = vmatprep.subr.mxu0 0.0
    %306 = vmatpush2.msra.mxu0 0.0
    %307 = vmatprep.subr.mxu0 0.0
    %308 = vmatpush2.msra.mxu0 0.0
    %309 = vmatprep.subr.mxu0 0.0
    %310 = vmatpush2.msra.mxu0 0.0
    %311 = vmatprep.subr.mxu0 0.0
    %312 = vmatpush2.msra.mxu0 0.0
    %313 = vmatprep.subr.mxu0 0.0
    %314 = vmatpush2.msra.mxu0 0.0
    %315 = vmatprep.subr.mxu0 0.0
    %316 = vmatpush2.msra.mxu0 0.0
    %317 = vmatprep.subr.mxu0 0.0
    %318 = vmatpush2.msra.mxu0 0.0
    %319 = vmatprep.subr.mxu0 0.0
    %320 = vmatpush2.msra.mxu0 0.0
    %321 = vmatprep.subr.mxu0 0.0
    %322 = vmatpush2.msra.mxu0 0.0
    %323 = vmatprep.subr.mxu0 0.0
    %324 = vmatpush2.msra.mxu0 0.0
    %325 = vmatprep.subr.mxu0 0.0
    %326 = vmatpush2.msra.mxu0 0.0
    %327 = vmatprep.subr.mxu0 0.0
    %328 = vmatpush2.msra.mxu0 0.0
    %329 = vmatprep.subr.mxu0 0.0
    %330 = vmatpush2.msra.mxu0 0.0
    %331 = vmatprep.subr.mxu0 0.0
    %332 = vmatpush2.msra.mxu0 0.0
    %333 = vmatprep.subr.mxu0 0.0
    %334 = vmatpush2.msra.mxu0 0.0
    %335 = vmatprep.subr.mxu0 0.0
    %336 = vmatpush2.msra.mxu0 0.0
    %337 = vmatprep.mubr.f32.mxu0 0.0
    %338 = vmatmul.mubr.f32.gmra.mxu0 %v145
    %v339 = vpop.f32.mrf.mxu0
    %v340 = vadd.f32 0.0, %v339
    %v341 = vpop.f32.mrf.mxu0
    %342 = vmatprep.mubr.f32.mxu0 0.0
    %343 = vmatmul.mubr.f32.gmra.mxu0 %v148
    %v344 = vpop.f32.mrf.mxu0
    %v345 = vadd.f32 0.0, %v344
    %v346 = vpop.f32.mrf.mxu0
    %347 = vmatprep.mubr.f32.mxu0 0.0
    %348 = vmatmul.mubr.f32.gmra.mxu0 %v151
    %v349 = vpop.f32.mrf.mxu0
    %v350 = vadd.f32 0.0, %v349
    %v351 = vpop.f32.mrf.mxu0
    %352 = vmatprep.mubr.f32.mxu0 0.0
    %353 = vmatmul.mubr.f32.gmra.mxu0 %v154
    %v354 = vpop.f32.mrf.mxu0
    %v355 = vadd.f32 0.0, %v354
    %v356 = vpop.f32.mrf.mxu0
    %357 = vmatprep.mubr.f32.mxu0 0.0
    %358 = vmatmul.mubr.f32.gmra.mxu0 %v157
    %v359 = vpop.f32.mrf.mxu0
    %v360 = vadd.f32 0.0, %v359
    %v361 = vpop.f32.mrf.mxu0
    %362 = vmatprep.mubr.f32.mxu0 0.0
    %363 = vmatmul.mubr.f32.gmra.mxu0 %v160
    %v364 = vpop.f32.mrf.mxu0
    %v365 = vadd.f32 0.0, %v364
    %v366 = vpop.f32.mrf.mxu0
    %367 = vdwg.mxu0
    %v369 = vsel %vm143, %v106, 0
    %v372 = vsel %vm143, %v107, 0
    %v375 = vsel %vm143, %v108, 0
    %v378 = vsel %vm143, %v109, 0
    %v381 = vsel %vm143, %v110, 0
    %v384 = vsel %vm143, %v111, 0
    %v387 = vsel %vm162, %v121, 0
    %v390 = vsel %vm162, %v122, 0
    %v393 = vsel %vm162, %v123, 0
    %395 = vmatprep.subr.mxu0 0.0
    %396 = vmatpush1.msra.mxu0 0.0
    %397 = vmatprep.subr.mxu0 0.0
    %398 = vmatpush1.msra.mxu0 0.0
    %399 = vmatprep.subr.mxu0 0.0
    %400 = vmatpush1.msra.mxu0 0.0
    %401 = vmatprep.subr.mxu0 0.0
    %402 = vmatpush1.msra.mxu0 0.0
    %403 = vmatprep.subr.mxu0 0.0
    %404 = vmatpush1.msra.mxu0 0.0
    %405 = vmatprep.subr.mxu0 0.0
    %406 = vmatpush1.msra.mxu0 0.0
    %407 = vmatprep.subr.mxu0 0.0
    %408 = vmatpush1.msra.mxu0 0.0
    %409 = vmatprep.subr.mxu0 0.0
    %410 = vmatpush1.msra.mxu0 0.0
    %411 = vmatprep.subr.mxu0 0.0
    %412 = vmatpush1.msra.mxu0 0.0
    %413 = vmatprep.subr.mxu0 0.0
    %414 = vmatpush1.msra.mxu0 0.0
    %415 = vmatprep.subr.mxu0 0.0
    %416 = vmatpush1.msra.mxu0 0.0
    %417 = vmatprep.subr.mxu0 0.0
    %418 = vmatpush1.msra.mxu0 0.0
    %419 = vmatprep.subr.mxu0 %v390
    %420 = vmatpush1.msra.mxu0 %v387
    %421 = vmatprep.subr.mxu0 %v119
    %422 = vmatpush1.msra.mxu0 %v118
    %423 = vmatprep.subr.mxu0 %v116
    %424 = vmatpush1.msra.mxu0 %v115
    %425 = vmatprep.subr.mxu0 %v113
    %426 = vmatpush1.msra.mxu0 %v112
    %427 = vmatprep.subr.mxu0 0.0
    %428 = vmatpush2.msra.mxu0 0.0
    %429 = vmatprep.subr.mxu0 0.0
    %430 = vmatpush2.msra.mxu0 0.0
    %431 = vmatprep.subr.mxu0 0.0
    %432 = vmatpush2.msra.mxu0 0.0
    %433 = vmatprep.subr.mxu0 0.0
    %434 = vmatpush2.msra.mxu0 0.0
    %435 = vmatprep.subr.mxu0 0.0
    %436 = vmatpush2.msra.mxu0 0.0
    %437 = vmatprep.subr.mxu0 0.0
    %438 = vmatpush2.msra.mxu0 0.0
    %439 = vmatprep.subr.mxu0 0.0
    %440 = vmatpush2.msra.mxu0 0.0
    %441 = vmatprep.subr.mxu0 0.0
    %442 = vmatpush2.msra.mxu0 0.0
    %443 = vmatprep.subr.mxu0 0.0
    %444 = vmatpush2.msra.mxu0 0.0
    %445 = vmatprep.subr.mxu0 0.0
    %446 = vmatpush2.msra.mxu0 0.0
    %447 = vmatprep.subr.mxu0 0.0
    %448 = vmatpush2.msra.mxu0 0.0
    %449 = vmatprep.subr.mxu0 0.0
    %450 = vmatpush2.msra.mxu0 0.0
    %451 = vmatprep.subr.mxu0 0.0
    %452 = vmatpush2.msra.mxu0 0.0
    %453 = vmatprep.subr.mxu0 0.0
    %454 = vmatpush2.msra.mxu0 0.0
    %455 = vmatprep.subr.mxu0 0.0
    %456 = vmatpush2.msra.mxu0 0.0
    %457 = vmatprep.subr.mxu0 0.0
    %458 = vmatpush2.msra.mxu0 0.0
    %459 = vmatprep.mubr.f32.mxu0 0.0
    %460 = vmatmul.mubr.f32.gmra.mxu0 %v369
    %v461 = vpop.f32.mrf.mxu0
    %v462 = vadd.f32 %v239, %v461
    %v463 = vpop.f32.mrf.mxu0
    %v464 = vadd.f32 %v241, %v463
    %465 = vmatprep.mubr.f32.mxu0 0.0
    %466 = vmatmul.mubr.f32.gmra.mxu0 %v372
    %v467 = vpop.f32.mrf.mxu0
    %v468 = vadd.f32 %v245, %v467
    %v469 = vpop.f32.mrf.mxu0
    %v470 = vadd.f32 %v247, %v469
    %471 = vmatprep.mubr.f32.mxu0 0.0
    %472 = vmatmul.mubr.f32.gmra.mxu0 %v375
    %v473 = vpop.f32.mrf.mxu0
    %v474 = vadd.f32 %v251, %v473
    %v475 = vpop.f32.mrf.mxu0
    %v476 = vadd.f32 %v253, %v475
    %477 = vmatprep.mubr.f32.mxu0 0.0
    %478 = vmatmul.mubr.f32.gmra.mxu0 %v378
    %v479 = vpop.f32.mrf.mxu0
    %v480 = vadd.f32 %v257, %v479
    %v481 = vpop.f32.mrf.mxu0
    %v482 = vadd.f32 %v259, %v481
    %483 = vmatprep.mubr.f32.mxu0 0.0
    %484 = vmatmul.mubr.f32.gmra.mxu0 %v381
    %v485 = vpop.f32.mrf.mxu0
    %v486 = vadd.f32 %v263, %v485
    %v487 = vpop.f32.mrf.mxu0
    %v488 = vadd.f32 %v265, %v487
    %489 = vmatprep.mubr.f32.mxu0 0.0
    %490 = vmatmul.mubr.f32.gmra.mxu0 %v384
    %v491 = vpop.f32.mrf.mxu0
    %v492 = vadd.f32 %v269, %v491
    %v493 = vpop.f32.mrf.mxu0
    %v494 = vadd.f32 %v271, %v493
    %495 = vdwg.mxu0
    %496 = vmatprep.subr.mxu0 0.0
    %497 = vmatpush1.msra.mxu0 0.0
    %498 = vmatprep.subr.mxu0 0.0
    %499 = vmatpush1.msra.mxu0 0.0
    %500 = vmatprep.subr.mxu0 0.0
    %501 = vmatpush1.msra.mxu0 0.0
    %502 = vmatprep.subr.mxu0 0.0
    %503 = vmatpush1.msra.mxu0 0.0
    %504 = vmatprep.subr.mxu0 0.0
    %505 = vmatpush1.msra.mxu0 0.0
    %506 = vmatprep.subr.mxu0 0.0
    %507 = vmatpush1.msra.mxu0 0.0
    %508 = vmatprep.subr.mxu0 0.0
    %509 = vmatpush1.msra.mxu0 0.0
    %510 = vmatprep.subr.mxu0 0.0
    %511 = vmatpush1.msra.mxu0 0.0
    %512 = vmatprep.subr.mxu0 0.0
    %513 = vmatpush1.msra.mxu0 0.0
    %514 = vmatprep.subr.mxu0 0.0
    %515 = vmatpush1.msra.mxu0 0.0
    %516 = vmatprep.subr.mxu0 0.0
    %517 = vmatpush1.msra.mxu0 0.0
    %518 = vmatprep.subr.mxu0 0.0
    %519 = vmatpush1.msra.mxu0 0.0
    %520 = vmatprep.subr.mxu0 0.0
    %521 = vmatpush1.msra.mxu0 %v393
    %522 = vmatprep.subr.mxu0 0.0
    %523 = vmatpush1.msra.mxu0 %v120
    %524 = vmatprep.subr.mxu0 0.0
    %525 = vmatpush1.msra.mxu0 %v117
    %526 = vmatprep.subr.mxu0 0.0
    %527 = vmatpush1.msra.mxu0 %v114
    %528 = vmatprep.subr.mxu0 0.0
    %529 = vmatpush2.msra.mxu0 0.0
    %530 = vmatprep.subr.mxu0 0.0
    %531 = vmatpush2.msra.mxu0 0.0
    %532 = vmatprep.subr.mxu0 0.0
    %533 = vmatpush2.msra.mxu0 0.0
    %534 = vmatprep.subr.mxu0 0.0
    %535 = vmatpush2.msra.mxu0 0.0
    %536 = vmatprep.subr.mxu0 0.0
    %537 = vmatpush2.msra.mxu0 0.0
    %538 = vmatprep.subr.mxu0 0.0
    %539 = vmatpush2.msra.mxu0 0.0
    %540 = vmatprep.subr.mxu0 0.0
    %541 = vmatpush2.msra.mxu0 0.0
    %542 = vmatprep.subr.mxu0 0.0
    %543 = vmatpush2.msra.mxu0 0.0
    %544 = vmatprep.subr.mxu0 0.0
    %545 = vmatpush2.msra.mxu0 0.0
    %546 = vmatprep.subr.mxu0 0.0
    %547 = vmatpush2.msra.mxu0 0.0
    %548 = vmatprep.subr.mxu0 0.0
    %549 = vmatpush2.msra.mxu0 0.0
    %550 = vmatprep.subr.mxu0 0.0
    %551 = vmatpush2.msra.mxu0 0.0
    %552 = vmatprep.subr.mxu0 0.0
    %553 = vmatpush2.msra.mxu0 0.0
    %554 = vmatprep.subr.mxu0 0.0
    %555 = vmatpush2.msra.mxu0 0.0
    %556 = vmatprep.subr.mxu0 0.0
    %557 = vmatpush2.msra.mxu0 0.0
    %558 = vmatprep.subr.mxu0 0.0
    %559 = vmatpush2.msra.mxu0 0.0
    %560 = vmatprep.mubr.f32.mxu0 0.0
    %561 = vmatmul.mubr.f32.gmra.mxu0 %v369
    %v562 = vpop.f32.mrf.mxu0
    %v563 = vadd.f32 %v340, %v562
    %v564 = vpop.f32.mrf.mxu0
    %565 = vmatprep.mubr.f32.mxu0 0.0
    %566 = vmatmul.mubr.f32.gmra.mxu0 %v372
    %v567 = vpop.f32.mrf.mxu0
    %v568 = vadd.f32 %v345, %v567
    %v569 = vpop.f32.mrf.mxu0
    %570 = vmatprep.mubr.f32.mxu0 0.0
    %571 = vmatmul.mubr.f32.gmra.mxu0 %v375
    %v572 = vpop.f32.mrf.mxu0
    %v573 = vadd.f32 %v350, %v572
    %v574 = vpop.f32.mrf.mxu0
    %575 = vmatprep.mubr.f32.mxu0 0.0
    %576 = vmatmul.mubr.f32.gmra.mxu0 %v378
    %v577 = vpop.f32.mrf.mxu0
    %v578 = vadd.f32 %v355, %v577
    %v579 = vpop.f32.mrf.mxu0
    %580 = vmatprep.mubr.f32.mxu0 0.0
    %581 = vmatmul.mubr.f32.gmra.mxu0 %v381
    %v582 = vpop.f32.mrf.mxu0
    %v583 = vadd.f32 %v360, %v582
    %v584 = vpop.f32.mrf.mxu0
    %585 = vmatprep.mubr.f32.mxu0 0.0
    %586 = vmatmul.mubr.f32.gmra.mxu0 %v384
    %v587 = vpop.f32.mrf.mxu0
    %v588 = vadd.f32 %v365, %v587
    %v589 = vpop.f32.mrf.mxu0
    %590 = vdwg.mxu0
    %v591 = vld [vmem:[%s0 + $0x2] sm:$0xff]
    %v592 = vld [vmem:[%s0 + $0xa] sm:$0xff]
    %v593 = vld [vmem:[%s0 + $0x12] sm:$0xff]
    %v594 = vld [vmem:[%s0 + $0x22] sm:$0xff]
    %v595 = vld [vmem:[%s0 + $0x2a] sm:$0xff]
    %v596 = vld [vmem:[%s0 + $0x32] sm:$0xff]
    %s597 = scalar_lea.vmem %s1, 192
    %v598 = vld [vmem:[%s597] sm:$0xff]
    %v599 = vld [vmem:[%s597 + $0x8] sm:$0xff]
    %v600 = vld [vmem:[%s597 + $0x10] sm:$0xff]
    %v601 = vld [vmem:[%s597 + $0x18] sm:$0xff]
    %v602 = vld [vmem:[%s597 + $0x20] sm:$0xff]
    %v603 = vld [vmem:[%s597 + $0x28] sm:$0xff]
    %v604 = vld [vmem:[%s597 + $0x30] sm:$0xff]
    %v605 = vld [vmem:[%s597 + $0x38] sm:$0xff]
    %v606 = vld [vmem:[%s597 + $0x40] sm:$0xff]
    %v607 = vld [vmem:[%s597 + $0x48] sm:$0xf]
    %v608 = vld [vmem:[%s597 + $0x50] sm:$0xf]
    %v609 = vld [vmem:[%s597 + $0x58] sm:$0xf]
    %v611 = vsel %vm143, %v591, 0
    %v614 = vsel %vm143, %v592, 0
    %v617 = vsel %vm143, %v593, 0
    %v620 = vsel %vm143, %v594, 0
    %v623 = vsel %vm143, %v595, 0
    %v626 = vsel %vm143, %v596, 0
    %v629 = vsel %vm162, %v607, 0
    %v632 = vsel %vm162, %v608, 0
    %v635 = vsel %vm162, %v609, 0
    %637 = vmatprep.subr.mxu0 0.0
    %638 = vmatpush1.msra.mxu0 0.0
    %639 = vmatprep.subr.mxu0 0.0
    %640 = vmatpush1.msra.mxu0 0.0
    %641 = vmatprep.subr.mxu0 0.0
    %642 = vmatpush1.msra.mxu0 0.0
    %643 = vmatprep.subr.mxu0 0.0
    %644 = vmatpush1.msra.mxu0 0.0
    %645 = vmatprep.subr.mxu0 0.0
    %646 = vmatpush1.msra.mxu0 0.0
    %647 = vmatprep.subr.mxu0 0.0
    %648 = vmatpush1.msra.mxu0 0.0
    %649 = vmatprep.subr.mxu0 0.0
    %650 = vmatpush1.msra.mxu0 0.0
    %651 = vmatprep.subr.mxu0 0.0
    %652 = vmatpush1.msra.mxu0 0.0
    %653 = vmatprep.subr.mxu0 0.0
    %654 = vmatpush1.msra.mxu0 0.0
    %655 = vmatprep.subr.mxu0 0.0
    %656 = vmatpush1.msra.mxu0 0.0
    %657 = vmatprep.subr.mxu0 0.0
    %658 = vmatpush1.msra.mxu0 0.0
    %659 = vmatprep.subr.mxu0 0.0
    %660 = vmatpush1.msra.mxu0 0.0
    %661 = vmatprep.subr.mxu0 %v632
    %662 = vmatpush1.msra.mxu0 %v629
    %663 = vmatprep.subr.mxu0 %v605
    %664 = vmatpush1.msra.mxu0 %v604
    %665 = vmatprep.subr.mxu0 %v602
    %666 = vmatpush1.msra.mxu0 %v601
    %667 = vmatprep.subr.mxu0 %v599
    %668 = vmatpush1.msra.mxu0 %v598
    %669 = vmatprep.subr.mxu0 0.0
    %670 = vmatpush2.msra.mxu0 0.0
    %671 = vmatprep.subr.mxu0 0.0
    %672 = vmatpush2.msra.mxu0 0.0
    %673 = vmatprep.subr.mxu0 0.0
    %674 = vmatpush2.msra.mxu0 0.0
    %675 = vmatprep.subr.mxu0 0.0
    %676 = vmatpush2.msra.mxu0 0.0
    %677 = vmatprep.subr.mxu0 0.0
    %678 = vmatpush2.msra.mxu0 0.0
    %679 = vmatprep.subr.mxu0 0.0
    %680 = vmatpush2.msra.mxu0 0.0
    %681 = vmatprep.subr.mxu0 0.0
    %682 = vmatpush2.msra.mxu0 0.0
    %683 = vmatprep.subr.mxu0 0.0
    %684 = vmatpush2.msra.mxu0 0.0
    %685 = vmatprep.subr.mxu0 0.0
    %686 = vmatpush2.msra.mxu0 0.0
    %687 = vmatprep.subr.mxu0 0.0
    %688 = vmatpush2.msra.mxu0 0.0
    %689 = vmatprep.subr.mxu0 0.0
    %690 = vmatpush2.msra.mxu0 0.0
    %691 = vmatprep.subr.mxu0 0.0
    %692 = vmatpush2.msra.mxu0 0.0
    %693 = vmatprep.subr.mxu0 0.0
    %694 = vmatpush2.msra.mxu0 0.0
    %695 = vmatprep.subr.mxu0 0.0
    %696 = vmatpush2.msra.mxu0 0.0
    %697 = vmatprep.subr.mxu0 0.0
    %698 = vmatpush2.msra.mxu0 0.0
    %699 = vmatprep.subr.mxu0 0.0
    %700 = vmatpush2.msra.mxu0 0.0
    %701 = vmatprep.mubr.f32.mxu0 0.0
    %702 = vmatmul.mubr.f32.gmra.mxu0 %v611
    %v703 = vpop.f32.mrf.mxu0
    %v704 = vadd.f32 0.0, %v703
    %v705 = vpop.f32.mrf.mxu0
    %v706 = vadd.f32 0.0, %v705
    %707 = vmatprep.mubr.f32.mxu0 0.0
    %708 = vmatmul.mubr.f32.gmra.mxu0 %v614
    %v709 = vpop.f32.mrf.mxu0
    %v710 = vadd.f32 0.0, %v709
    %v711 = vpop.f32.mrf.mxu0
    %v712 = vadd.f32 0.0, %v711
    %713 = vmatprep.mubr.f32.mxu0 0.0
    %714 = vmatmul.mubr.f32.gmra.mxu0 %v617
    %v715 = vpop.f32.mrf.mxu0
    %v716 = vadd.f32 0.0, %v715
    %v717 = vpop.f32.mrf.mxu0
    %v718 = vadd.f32 0.0, %v717
    %719 = vmatprep.mubr.f32.mxu0 0.0
    %720 = vmatmul.mubr.f32.gmra.mxu0 %v620
    %v721 = vpop.f32.mrf.mxu0
    %v722 = vadd.f32 0.0, %v721
    %v723 = vpop.f32.mrf.mxu0
    %v724 = vadd.f32 0.0, %v723
    %725 = vmatprep.mubr.f32.mxu0 0.0
    %726 = vmatmul.mubr.f32.gmra.mxu0 %v623
    %v727 = vpop.f32.mrf.mxu0
    %v728 = vadd.f32 0.0, %v727
    %v729 = vpop.f32.mrf.mxu0
    %v730 = vadd.f32 0.0, %v729
    %731 = vmatprep.mubr.f32.mxu0 0.0
    %732 = vmatmul.mubr.f32.gmra.mxu0 %v626
    %v733 = vpop.f32.mrf.mxu0
    %v734 = vadd.f32 0.0, %v733
    %v735 = vpop.f32.mrf.mxu0
    %v736 = vadd.f32 0.0, %v735
    %737 = vdwg.mxu0
    %738 = vmatprep.subr.mxu0 0.0
    %739 = vmatpush1.msra.mxu0 0.0
    %740 = vmatprep.subr.mxu0 0.0
    %741 = vmatpush1.msra.mxu0 0.0
    %742 = vmatprep.subr.mxu0 0.0
    %743 = vmatpush1.msra.mxu0 0.0
    %744 = vmatprep.subr.mxu0 0.0
    %745 = vmatpush1.msra.mxu0 0.0
    %746 = vmatprep.subr.mxu0 0.0
    %747 = vmatpush1.msra.mxu0 0.0
    %748 = vmatprep.subr.mxu0 0.0
    %749 = vmatpush1.msra.mxu0 0.0
    %750 = vmatprep.subr.mxu0 0.0
    %751 = vmatpush1.msra.mxu0 0.0
    %752 = vmatprep.subr.mxu0 0.0
    %753 = vmatpush1.msra.mxu0 0.0
    %754 = vmatprep.subr.mxu0 0.0
    %755 = vmatpush1.msra.mxu0 0.0
    %756 = vmatprep.subr.mxu0 0.0
    %757 = vmatpush1.msra.mxu0 0.0
    %758 = vmatprep.subr.mxu0 0.0
    %759 = vmatpush1.msra.mxu0 0.0
    %760 = vmatprep.subr.mxu0 0.0
    %761 = vmatpush1.msra.mxu0 0.0
    %762 = vmatprep.subr.mxu0 0.0
    %763 = vmatpush1.msra.mxu0 %v635
    %764 = vmatprep.subr.mxu0 0.0
    %765 = vmatpush1.msra.mxu0 %v606
    %766 = vmatprep.subr.mxu0 0.0
    %767 = vmatpush1.msra.mxu0 %v603
    %768 = vmatprep.subr.mxu0 0.0
    %769 = vmatpush1.msra.mxu0 %v600
    %770 = vmatprep.subr.mxu0 0.0
    %771 = vmatpush2.msra.mxu0 0.0
    %772 = vmatprep.subr.mxu0 0.0
    %773 = vmatpush2.msra.mxu0 0.0
    %774 = vmatprep.subr.mxu0 0.0
    %775 = vmatpush2.msra.mxu0 0.0
    %776 = vmatprep.subr.mxu0 0.0
    %777 = vmatpush2.msra.mxu0 0.0
    %778 = vmatprep.subr.mxu0 0.0
    %779 = vmatpush2.msra.mxu0 0.0
    %780 = vmatprep.subr.mxu0 0.0
    %781 = vmatpush2.msra.mxu0 0.0
    %782 = vmatprep.subr.mxu0 0.0
    %783 = vmatpush2.msra.mxu0 0.0
    %784 = vmatprep.subr.mxu0 0.0
    %785 = vmatpush2.msra.mxu0 0.0
    %786 = vmatprep.subr.mxu0 0.0
    %787 = vmatpush2.msra.mxu0 0.0
    %788 = vmatprep.subr.mxu0 0.0
    %789 = vmatpush2.msra.mxu0 0.0
    %790 = vmatprep.subr.mxu0 0.0
    %791 = vmatpush2.msra.mxu0 0.0
    %792 = vmatprep.subr.mxu0 0.0
    %793 = vmatpush2.msra.mxu0 0.0
    %794 = vmatprep.subr.mxu0 0.0
    %795 = vmatpush2.msra.mxu0 0.0
    %796 = vmatprep.subr.mxu0 0.0
    %797 = vmatpush2.msra.mxu0 0.0
    %798 = vmatprep.subr.mxu0 0.0
    %799 = vmatpush2.msra.mxu0 0.0
    %800 = vmatprep.subr.mxu0 0.0
    %801 = vmatpush2.msra.mxu0 0.0
    %802 = vmatprep.mubr.f32.mxu0 0.0
    %803 = vmatmul.mubr.f32.gmra.mxu0 %v611
    %v804 = vpop.f32.mrf.mxu0
    %v805 = vadd.f32 0.0, %v804
    %v806 = vpop.f32.mrf.mxu0
    %807 = vmatprep.mubr.f32.mxu0 0.0
    %808 = vmatmul.mubr.f32.gmra.mxu0 %v614
    %v809 = vpop.f32.mrf.mxu0
    %v810 = vadd.f32 0.0, %v809
    %v811 = vpop.f32.mrf.mxu0
    %812 = vmatprep.mubr.f32.mxu0 0.0
    %813 = vmatmul.mubr.f32.gmra.mxu0 %v617
    %v814 = vpop.f32.mrf.mxu0
    %v815 = vadd.f32 0.0, %v814
    %v816 = vpop.f32.mrf.mxu0
    %817 = vmatprep.mubr.f32.mxu0 0.0
    %818 = vmatmul.mubr.f32.gmra.mxu0 %v620
    %v819 = vpop.f32.mrf.mxu0
    %v820 = vadd.f32 0.0, %v819
    %v821 = vpop.f32.mrf.mxu0
    %822 = vmatprep.mubr.f32.mxu0 0.0
    %823 = vmatmul.mubr.f32.gmra.mxu0 %v623
    %v824 = vpop.f32.mrf.mxu0
    %v825 = vadd.f32 0.0, %v824
    %v826 = vpop.f32.mrf.mxu0
    %827 = vmatprep.mubr.f32.mxu0 0.0
    %828 = vmatmul.mubr.f32.gmra.mxu0 %v626
    %v829 = vpop.f32.mrf.mxu0
    %v830 = vadd.f32 0.0, %v829
    %v831 = vpop.f32.mrf.mxu0
    %832 = vdwg.mxu0
    %v833 = vadd.f32 %v462, %v704
    %v834 = vadd.f32 %v464, %v706
    %v835 = vadd.f32 %v563, %v805
    %v836 = vadd.f32 %v468, %v710
    %v837 = vadd.f32 %v470, %v712
    %v838 = vadd.f32 %v568, %v810
    %v839 = vadd.f32 %v474, %v716
    %v840 = vadd.f32 %v476, %v718
    %v841 = vadd.f32 %v573, %v815
    %v842 = vadd.f32 %v480, %v722
    %v843 = vadd.f32 %v482, %v724
    %v844 = vadd.f32 %v578, %v820
    %v845 = vadd.f32 %v486, %v728
    %v846 = vadd.f32 %v488, %v730
    %v847 = vadd.f32 %v583, %v825
    %v848 = vadd.f32 %v492, %v734
    %v849 = vadd.f32 %v494, %v736
    %v850 = vadd.f32 %v588, %v830
    %v851 = vld [vmem:[%s0 + $0x3] sm:$0xff]
    %v852 = vld [vmem:[%s0 + $0xb] sm:$0xff]
    %v853 = vld [vmem:[%s0 + $0x13] sm:$0xff]
    %v854 = vld [vmem:[%s0 + $0x23] sm:$0xff]
    %v855 = vld [vmem:[%s0 + $0x2b] sm:$0xff]
    %v856 = vld [vmem:[%s0 + $0x33] sm:$0xff]
    %s857 = scalar_lea.vmem %s1, 288
    %v858 = vld [vmem:[%s857] sm:$0xff]
    %v859 = vld [vmem:[%s857 + $0x8] sm:$0xff]
    %v860 = vld [vmem:[%s857 + $0x10] sm:$0xff]
    %v861 = vld [vmem:[%s857 + $0x18] sm:$0xff]
    %v862 = vld [vmem:[%s857 + $0x20] sm:$0xff]
    %v863 = vld [vmem:[%s857 + $0x28] sm:$0xff]
    %v864 = vld [vmem:[%s857 + $0x30] sm:$0xff]
    %v865 = vld [vmem:[%s857 + $0x38] sm:$0xff]
    %v866 = vld [vmem:[%s857 + $0x40] sm:$0xff]
    %v867 = vld [vmem:[%s857 + $0x48] sm:$0xf]
    %v868 = vld [vmem:[%s857 + $0x50] sm:$0xf]
    %v869 = vld [vmem:[%s857 + $0x58] sm:$0xf]
    %v871 = vsel %vm143, %v851, 0
    %v874 = vsel %vm143, %v852, 0
    %v877 = vsel %vm143, %v853, 0
    %v880 = vsel %vm143, %v854, 0
    %v883 = vsel %vm143, %v855, 0
    %v886 = vsel %vm143, %v856, 0
    %v889 = vsel %vm162, %v867, 0
    %v892 = vsel %vm162, %v868, 0
    %v895 = vsel %vm162, %v869, 0
    %897 = vmatprep.subr.mxu0 0.0
    %898 = vmatpush1.msra.mxu0 0.0
    %899 = vmatprep.subr.mxu0 0.0
    %900 = vmatpush1.msra.mxu0 0.0
    %901 = vmatprep.subr.mxu0 0.0
    %902 = vmatpush1.msra.mxu0 0.0
    %903 = vmatprep.subr.mxu0 0.0
    %904 = vmatpush1.msra.mxu0 0.0
    %905 = vmatprep.subr.mxu0 0.0
    %906 = vmatpush1.msra.mxu0 0.0
    %907 = vmatprep.subr.mxu0 0.0
    %908 = vmatpush1.msra.mxu0 0.0
    %909 = vmatprep.subr.mxu0 0.0
    %910 = vmatpush1.msra.mxu0 0.0
    %911 = vmatprep.subr.mxu0 0.0
    %912 = vmatpush1.msra.mxu0 0.0
    %913 = vmatprep.subr.mxu0 0.0
    %914 = vmatpush1.msra.mxu0 0.0
    %915 = vmatprep.subr.mxu0 0.0
    %916 = vmatpush1.msra.mxu0 0.0
    %917 = vmatprep.subr.mxu0 0.0
    %918 = vmatpush1.msra.mxu0 0.0
    %919 = vmatprep.subr.mxu0 0.0
    %920 = vmatpush1.msra.mxu0 0.0
    %921 = vmatprep.subr.mxu0 %v892
    %922 = vmatpush1.msra.mxu0 %v889
    %923 = vmatprep.subr.mxu0 %v865
    %924 = vmatpush1.msra.mxu0 %v864
    %925 = vmatprep.subr.mxu0 %v862
    %926 = vmatpush1.msra.mxu0 %v861
    %927 = vmatprep.subr.mxu0 %v859
    %928 = vmatpush1.msra.mxu0 %v858
    %929 = vmatprep.subr.mxu0 0.0
    %930 = vmatpush2.msra.mxu0 0.0
    %931 = vmatprep.subr.mxu0 0.0
    %932 = vmatpush2.msra.mxu0 0.0
    %933 = vmatprep.subr.mxu0 0.0
    %934 = vmatpush2.msra.mxu0 0.0
    %935 = vmatprep.subr.mxu0 0.0
    %936 = vmatpush2.msra.mxu0 0.0
    %937 = vmatprep.subr.mxu0 0.0
    %938 = vmatpush2.msra.mxu0 0.0
    %939 = vmatprep.subr.mxu0 0.0
    %940 = vmatpush2.msra.mxu0 0.0
    %941 = vmatprep.subr.mxu0 0.0
    %942 = vmatpush2.msra.mxu0 0.0
    %943 = vmatprep.subr.mxu0 0.0
    %944 = vmatpush2.msra.mxu0 0.0
    %945 = vmatprep.subr.mxu0 0.0
    %946 = vmatpush2.msra.mxu0 0.0
    %947 = vmatprep.subr.mxu0 0.0
    %948 = vmatpush2.msra.mxu0 0.0
    %949 = vmatprep.subr.mxu0 0.0
    %950 = vmatpush2.msra.mxu0 0.0
    %951 = vmatprep.subr.mxu0 0.0
    %952 = vmatpush2.msra.mxu0 0.0
    %953 = vmatprep.subr.mxu0 0.0
    %954 = vmatpush2.msra.mxu0 0.0
    %955 = vmatprep.subr.mxu0 0.0
    %956 = vmatpush2.msra.mxu0 0.0
    %957 = vmatprep.subr.mxu0 0.0
    %958 = vmatpush2.msra.mxu0 0.0
    %959 = vmatprep.subr.mxu0 0.0
    %960 = vmatpush2.msra.mxu0 0.0
    %961 = vmatprep.mubr.f32.mxu0 0.0
    %962 = vmatmul.mubr.f32.gmra.mxu0 %v871
    %v963 = vpop.f32.mrf.mxu0
    %v964 = vadd.f32 0.0, %v963
    %v965 = vpop.f32.mrf.mxu0
    %v966 = vadd.f32 0.0, %v965
    %967 = vmatprep.mubr.f32.mxu0 0.0
    %968 = vmatmul.mubr.f32.gmra.mxu0 %v874
    %v969 = vpop.f32.mrf.mxu0
    %v970 = vadd.f32 0.0, %v969
    %v971 = vpop.f32.mrf.mxu0
    %v972 = vadd.f32 0.0, %v971
    %973 = vmatprep.mubr.f32.mxu0 0.0
    %974 = vmatmul.mubr.f32.gmra.mxu0 %v877
    %v975 = vpop.f32.mrf.mxu0
    %v976 = vadd.f32 0.0, %v975
    %v977 = vpop.f32.mrf.mxu0
    %v978 = vadd.f32 0.0, %v977
    %979 = vmatprep.mubr.f32.mxu0 0.0
    %980 = vmatmul.mubr.f32.gmra.mxu0 %v880
    %v981 = vpop.f32.mrf.mxu0
    %v982 = vadd.f32 0.0, %v981
    %v983 = vpop.f32.mrf.mxu0
    %v984 = vadd.f32 0.0, %v983
    %985 = vmatprep.mubr.f32.mxu0 0.0
    %986 = vmatmul.mubr.f32.gmra.mxu0 %v883
    %v987 = vpop.f32.mrf.mxu0
    %v988 = vadd.f32 0.0, %v987
    %v989 = vpop.f32.mrf.mxu0
    %v990 = vadd.f32 0.0, %v989
    %991 = vmatprep.mubr.f32.mxu0 0.0
    %992 = vmatmul.mubr.f32.gmra.mxu0 %v886
    %v993 = vpop.f32.mrf.mxu0
    %v994 = vadd.f32 0.0, %v993
    %v995 = vpop.f32.mrf.mxu0
    %v996 = vadd.f32 0.0, %v995
    %997 = vdwg.mxu0
    %998 = vmatprep.subr.mxu0 0.0
    %999 = vmatpush1.msra.mxu0 0.0
    %1000 = vmatprep.subr.mxu0 0.0
    %1001 = vmatpush1.msra.mxu0 0.0
    %1002 = vmatprep.subr.mxu0 0.0
    %1003 = vmatpush1.msra.mxu0 0.0
    %1004 = vmatprep.subr.mxu0 0.0
    %1005 = vmatpush1.msra.mxu0 0.0
    %1006 = vmatprep.subr.mxu0 0.0
    %1007 = vmatpush1.msra.mxu0 0.0
    %1008 = vmatprep.subr.mxu0 0.0
    %1009 = vmatpush1.msra.mxu0 0.0
    %1010 = vmatprep.subr.mxu0 0.0
    %1011 = vmatpush1.msra.mxu0 0.0
    %1012 = vmatprep.subr.mxu0 0.0
    %1013 = vmatpush1.msra.mxu0 0.0
    %1014 = vmatprep.subr.mxu0 0.0
    %1015 = vmatpush1.msra.mxu0 0.0
    %1016 = vmatprep.subr.mxu0 0.0
    %1017 = vmatpush1.msra.mxu0 0.0
    %1018 = vmatprep.subr.mxu0 0.0
    %1019 = vmatpush1.msra.mxu0 0.0
    %1020 = vmatprep.subr.mxu0 0.0
    %1021 = vmatpush1.msra.mxu0 0.0
    %1022 = vmatprep.subr.mxu0 0.0
    %1023 = vmatpush1.msra.mxu0 %v895
    %1024 = vmatprep.subr.mxu0 0.0
    %1025 = vmatpush1.msra.mxu0 %v866
    %1026 = vmatprep.subr.mxu0 0.0
    %1027 = vmatpush1.msra.mxu0 %v863
    %1028 = vmatprep.subr.mxu0 0.0
    %1029 = vmatpush1.msra.mxu0 %v860
    %1030 = vmatprep.subr.mxu0 0.0
    %1031 = vmatpush2.msra.mxu0 0.0
    %1032 = vmatprep.subr.mxu0 0.0
    %1033 = vmatpush2.msra.mxu0 0.0
    %1034 = vmatprep.subr.mxu0 0.0
    %1035 = vmatpush2.msra.mxu0 0.0
    %1036 = vmatprep.subr.mxu0 0.0
    %1037 = vmatpush2.msra.mxu0 0.0
    %1038 = vmatprep.subr.mxu0 0.0
    %1039 = vmatpush2.msra.mxu0 0.0
    %1040 = vmatprep.subr.mxu0 0.0
    %1041 = vmatpush2.msra.mxu0 0.0
    %1042 = vmatprep.subr.mxu0 0.0
    %1043 = vmatpush2.msra.mxu0 0.0
    %1044 = vmatprep.subr.mxu0 0.0
    %1045 = vmatpush2.msra.mxu0 0.0
    %1046 = vmatprep.subr.mxu0 0.0
    %1047 = vmatpush2.msra.mxu0 0.0
    %1048 = vmatprep.subr.mxu0 0.0
    %1049 = vmatpush2.msra.mxu0 0.0
    %1050 = vmatprep.subr.mxu0 0.0
    %1051 = vmatpush2.msra.mxu0 0.0
    %1052 = vmatprep.subr.mxu0 0.0
    %1053 = vmatpush2.msra.mxu0 0.0
    %1054 = vmatprep.subr.mxu0 0.0
    %1055 = vmatpush2.msra.mxu0 0.0
    %1056 = vmatprep.subr.mxu0 0.0
    %1057 = vmatpush2.msra.mxu0 0.0
    %1058 = vmatprep.subr.mxu0 0.0
    %1059 = vmatpush2.msra.mxu0 0.0
    %1060 = vmatprep.subr.mxu0 0.0
    %1061 = vmatpush2.msra.mxu0 0.0
    %1062 = vmatprep.mubr.f32.mxu0 0.0
    %1063 = vmatmul.mubr.f32.gmra.mxu0 %v871
    %v1064 = vpop.f32.mrf.mxu0
    %v1065 = vadd.f32 0.0, %v1064
    %v1066 = vpop.f32.mrf.mxu0
    %1067 = vmatprep.mubr.f32.mxu0 0.0
    %1068 = vmatmul.mubr.f32.gmra.mxu0 %v874
    %v1069 = vpop.f32.mrf.mxu0
    %v1070 = vadd.f32 0.0, %v1069
    %v1071 = vpop.f32.mrf.mxu0
    %1072 = vmatprep.mubr.f32.mxu0 0.0
    %1073 = vmatmul.mubr.f32.gmra.mxu0 %v877
    %v1074 = vpop.f32.mrf.mxu0
    %v1075 = vadd.f32 0.0, %v1074
    %v1076 = vpop.f32.mrf.mxu0
    %1077 = vmatprep.mubr.f32.mxu0 0.0
    %1078 = vmatmul.mubr.f32.gmra.mxu0 %v880
    %v1079 = vpop.f32.mrf.mxu0
    %v1080 = vadd.f32 0.0, %v1079
    %v1081 = vpop.f32.mrf.mxu0
    %1082 = vmatprep.mubr.f32.mxu0 0.0
    %1083 = vmatmul.mubr.f32.gmra.mxu0 %v883
    %v1084 = vpop.f32.mrf.mxu0
    %v1085 = vadd.f32 0.0, %v1084
    %v1086 = vpop.f32.mrf.mxu0
    %1087 = vmatprep.mubr.f32.mxu0 0.0
    %1088 = vmatmul.mubr.f32.gmra.mxu0 %v886
    %v1089 = vpop.f32.mrf.mxu0
    %v1090 = vadd.f32 0.0, %v1089
    %v1091 = vpop.f32.mrf.mxu0
    %1092 = vdwg.mxu0
    %v1093 = vadd.f32 %v833, %v964
    %v1094 = vadd.f32 %v834, %v966
    %v1095 = vadd.f32 %v835, %v1065
    %v1096 = vadd.f32 %v836, %v970
    %v1097 = vadd.f32 %v837, %v972
    %v1098 = vadd.f32 %v838, %v1070
    %v1099 = vadd.f32 %v839, %v976
    %v1100 = vadd.f32 %v840, %v978
    %v1101 = vadd.f32 %v841, %v1075
    %v1102 = vadd.f32 %v842, %v982
    %v1103 = vadd.f32 %v843, %v984
    %v1104 = vadd.f32 %v844, %v1080
    %v1105 = vadd.f32 %v845, %v988
    %v1106 = vadd.f32 %v846, %v990
    %v1107 = vadd.f32 %v847, %v1085
    %v1108 = vadd.f32 %v848, %v994
    %v1109 = vadd.f32 %v849, %v996
    %v1110 = vadd.f32 %v850, %v1090
    %v1111 = vld [vmem:[%s0 + $0x4] sm:$0xff]
    %v1112 = vld [vmem:[%s0 + $0xc] sm:$0xff]
    %v1113 = vld [vmem:[%s0 + $0x14] sm:$0xff]
    %v1114 = vld [vmem:[%s0 + $0x24] sm:$0xff]
    %v1115 = vld [vmem:[%s0 + $0x2c] sm:$0xff]
    %v1116 = vld [vmem:[%s0 + $0x34] sm:$0xff]
    %s1117 = scalar_lea.vmem %s1, 384
    %v1118 = vld [vmem:[%s1117] sm:$0xff]
    %v1119 = vld [vmem:[%s1117 + $0x8] sm:$0xff]
    %v1120 = vld [vmem:[%s1117 + $0x10] sm:$0xff]
    %v1121 = vld [vmem:[%s1117 + $0x18] sm:$0xff]
    %v1122 = vld [vmem:[%s1117 + $0x20] sm:$0xff]
    %v1123 = vld [vmem:[%s1117 + $0x28] sm:$0xff]
    %v1124 = vld [vmem:[%s1117 + $0x30] sm:$0xff]
    %v1125 = vld [vmem:[%s1117 + $0x38] sm:$0xff]
    %v1126 = vld [vmem:[%s1117 + $0x40] sm:$0xff]
    %v1127 = vld [vmem:[%s1117 + $0x48] sm:$0xf]
    %v1128 = vld [vmem:[%s1117 + $0x50] sm:$0xf]
    %v1129 = vld [vmem:[%s1117 + $0x58] sm:$0xf]
    %v1131 = vsel %vm143, %v1111, 0
    %v1134 = vsel %vm143, %v1112, 0
    %v1137 = vsel %vm143, %v1113, 0
    %v1140 = vsel %vm143, %v1114, 0
    %v1143 = vsel %vm143, %v1115, 0
    %v1146 = vsel %vm143, %v1116, 0
    %v1149 = vsel %vm162, %v1127, 0
    %v1152 = vsel %vm162, %v1128, 0
    %v1155 = vsel %vm162, %v1129, 0
    %1157 = vmatprep.subr.mxu0 0.0
    %1158 = vmatpush1.msra.mxu0 0.0
    %1159 = vmatprep.subr.mxu0 0.0
    %1160 = vmatpush1.msra.mxu0 0.0
    %1161 = vmatprep.subr.mxu0 0.0
    %1162 = vmatpush1.msra.mxu0 0.0
    %1163 = vmatprep.subr.mxu0 0.0
    %1164 = vmatpush1.msra.mxu0 0.0
    %1165 = vmatprep.subr.mxu0 0.0
    %1166 = vmatpush1.msra.mxu0 0.0
    %1167 = vmatprep.subr.mxu0 0.0
    %1168 = vmatpush1.msra.mxu0 0.0
    %1169 = vmatprep.subr.mxu0 0.0
    %1170 = vmatpush1.msra.mxu0 0.0
    %1171 = vmatprep.subr.mxu0 0.0
    %1172 = vmatpush1.msra.mxu0 0.0
    %1173 = vmatprep.subr.mxu0 0.0
    %1174 = vmatpush1.msra.mxu0 0.0
    %1175 = vmatprep.subr.mxu0 0.0
    %1176 = vmatpush1.msra.mxu0 0.0
    %1177 = vmatprep.subr.mxu0 0.0
    %1178 = vmatpush1.msra.mxu0 0.0
    %1179 = vmatprep.subr.mxu0 0.0
    %1180 = vmatpush1.msra.mxu0 0.0
    %1181 = vmatprep.subr.mxu0 %v1152
    %1182 = vmatpush1.msra.mxu0 %v1149
    %1183 = vmatprep.subr.mxu0 %v1125
    %1184 = vmatpush1.msra.mxu0 %v1124
    %1185 = vmatprep.subr.mxu0 %v1122
    %1186 = vmatpush1.msra.mxu0 %v1121
    %1187 = vmatprep.subr.mxu0 %v1119
    %1188 = vmatpush1.msra.mxu0 %v1118
    %1189 = vmatprep.subr.mxu0 0.0
    %1190 = vmatpush2.msra.mxu0 0.0
    %1191 = vmatprep.subr.mxu0 0.0
    %1192 = vmatpush2.msra.mxu0 0.0
    %1193 = vmatprep.subr.mxu0 0.0
    %1194 = vmatpush2.msra.mxu0 0.0
    %1195 = vmatprep.subr.mxu0 0.0
    %1196 = vmatpush2.msra.mxu0 0.0
    %1197 = vmatprep.subr.mxu0 0.0
    %1198 = vmatpush2.msra.mxu0 0.0
    %1199 = vmatprep.subr.mxu0 0.0
    %1200 = vmatpush2.msra.mxu0 0.0
    %1201 = vmatprep.subr.mxu0 0.0
    %1202 = vmatpush2.msra.mxu0 0.0
    %1203 = vmatprep.subr.mxu0 0.0
    %1204 = vmatpush2.msra.mxu0 0.0
    %1205 = vmatprep.subr.mxu0 0.0
    %1206 = vmatpush2.msra.mxu0 0.0
    %1207 = vmatprep.subr.mxu0 0.0
    %1208 = vmatpush2.msra.mxu0 0.0
    %1209 = vmatprep.subr.mxu0 0.0
    %1210 = vmatpush2.msra.mxu0 0.0
    %1211 = vmatprep.subr.mxu0 0.0
    %1212 = vmatpush2.msra.mxu0 0.0
    %1213 = vmatprep.subr.mxu0 0.0
    %1214 = vmatpush2.msra.mxu0 0.0
    %1215 = vmatprep.subr.mxu0 0.0
    %1216 = vmatpush2.msra.mxu0 0.0
    %1217 = vmatprep.subr.mxu0 0.0
    %1218 = vmatpush2.msra.mxu0 0.0
    %1219 = vmatprep.subr.mxu0 0.0
    %1220 = vmatpush2.msra.mxu0 0.0
    %1221 = vmatprep.mubr.f32.mxu0 0.0
    %1222 = vmatmul.mubr.f32.gmra.mxu0 %v1131
    %v1223 = vpop.f32.mrf.mxu0
    %v1224 = vadd.f32 0.0, %v1223
    %v1225 = vpop.f32.mrf.mxu0
    %v1226 = vadd.f32 0.0, %v1225
    %1227 = vmatprep.mubr.f32.mxu0 0.0
    %1228 = vmatmul.mubr.f32.gmra.mxu0 %v1134
    %v1229 = vpop.f32.mrf.mxu0
    %v1230 = vadd.f32 0.0, %v1229
    %v1231 = vpop.f32.mrf.mxu0
    %v1232 = vadd.f32 0.0, %v1231
    %1233 = vmatprep.mubr.f32.mxu0 0.0
    %1234 = vmatmul.mubr.f32.gmra.mxu0 %v1137
    %v1235 = vpop.f32.mrf.mxu0
    %v1236 = vadd.f32 0.0, %v1235
    %v1237 = vpop.f32.mrf.mxu0
    %v1238 = vadd.f32 0.0, %v1237
    %1239 = vmatprep.mubr.f32.mxu0 0.0
    %1240 = vmatmul.mubr.f32.gmra.mxu0 %v1140
    %v1241 = vpop.f32.mrf.mxu0
    %v1242 = vadd.f32 0.0, %v1241
    %v1243 = vpop.f32.mrf.mxu0
    %v1244 = vadd.f32 0.0, %v1243
    %1245 = vmatprep.mubr.f32.mxu0 0.0
    %1246 = vmatmul.mubr.f32.gmra.mxu0 %v1143
    %v1247 = vpop.f32.mrf.mxu0
    %v1248 = vadd.f32 0.0, %v1247
    %v1249 = vpop.f32.mrf.mxu0
    %v1250 = vadd.f32 0.0, %v1249
    %1251 = vmatprep.mubr.f32.mxu0 0.0
    %1252 = vmatmul.mubr.f32.gmra.mxu0 %v1146
    %v1253 = vpop.f32.mrf.mxu0
    %v1254 = vadd.f32 0.0, %v1253
    %v1255 = vpop.f32.mrf.mxu0
    %v1256 = vadd.f32 0.0, %v1255
    %1257 = vdwg.mxu0
    %1258 = vmatprep.subr.mxu0 0.0
    %1259 = vmatpush1.msra.mxu0 0.0
    %1260 = vmatprep.subr.mxu0 0.0
    %1261 = vmatpush1.msra.mxu0 0.0
    %1262 = vmatprep.subr.mxu0 0.0
    %1263 = vmatpush1.msra.mxu0 0.0
    %1264 = vmatprep.subr.mxu0 0.0
    %1265 = vmatpush1.msra.mxu0 0.0
    %1266 = vmatprep.subr.mxu0 0.0
    %1267 = vmatpush1.msra.mxu0 0.0
    %1268 = vmatprep.subr.mxu0 0.0
    %1269 = vmatpush1.msra.mxu0 0.0
    %1270 = vmatprep.subr.mxu0 0.0
    %1271 = vmatpush1.msra.mxu0 0.0
    %1272 = vmatprep.subr.mxu0 0.0
    %1273 = vmatpush1.msra.mxu0 0.0
    %1274 = vmatprep.subr.mxu0 0.0
    %1275 = vmatpush1.msra.mxu0 0.0
    %1276 = vmatprep.subr.mxu0 0.0
    %1277 = vmatpush1.msra.mxu0 0.0
    %1278 = vmatprep.subr.mxu0 0.0
    %1279 = vmatpush1.msra.mxu0 0.0
    %1280 = vmatprep.subr.mxu0 0.0
    %1281 = vmatpush1.msra.mxu0 0.0
    %1282 = vmatprep.subr.mxu0 0.0
    %1283 = vmatpush1.msra.mxu0 %v1155
    %1284 = vmatprep.subr.mxu0 0.0
    %1285 = vmatpush1.msra.mxu0 %v1126
    %1286 = vmatprep.subr.mxu0 0.0
    %1287 = vmatpush1.msra.mxu0 %v1123
    %1288 = vmatprep.subr.mxu0 0.0
    %1289 = vmatpush1.msra.mxu0 %v1120
    %1290 = vmatprep.subr.mxu0 0.0
    %1291 = vmatpush2.msra.mxu0 0.0
    %1292 = vmatprep.subr.mxu0 0.0
    %1293 = vmatpush2.msra.mxu0 0.0
    %1294 = vmatprep.subr.mxu0 0.0
    %1295 = vmatpush2.msra.mxu0 0.0
    %1296 = vmatprep.subr.mxu0 0.0
    %1297 = vmatpush2.msra.mxu0 0.0
    %1298 = vmatprep.subr.mxu0 0.0
    %1299 = vmatpush2.msra.mxu0 0.0
    %1300 = vmatprep.subr.mxu0 0.0
    %1301 = vmatpush2.msra.mxu0 0.0
    %1302 = vmatprep.subr.mxu0 0.0
    %1303 = vmatpush2.msra.mxu0 0.0
    %1304 = vmatprep.subr.mxu0 0.0
    %1305 = vmatpush2.msra.mxu0 0.0
    %1306 = vmatprep.subr.mxu0 0.0
    %1307 = vmatpush2.msra.mxu0 0.0
    %1308 = vmatprep.subr.mxu0 0.0
    %1309 = vmatpush2.msra.mxu0 0.0
    %1310 = vmatprep.subr.mxu0 0.0
    %1311 = vmatpush2.msra.mxu0 0.0
    %1312 = vmatprep.subr.mxu0 0.0
    %1313 = vmatpush2.msra.mxu0 0.0
    %1314 = vmatprep.subr.mxu0 0.0
    %1315 = vmatpush2.msra.mxu0 0.0
    %1316 = vmatprep.subr.mxu0 0.0
    %1317 = vmatpush2.msra.mxu0 0.0
    %1318 = vmatprep.subr.mxu0 0.0
    %1319 = vmatpush2.msra.mxu0 0.0
    %1320 = vmatprep.subr.mxu0 0.0
    %1321 = vmatpush2.msra.mxu0 0.0
    %1322 = vmatprep.mubr.f32.mxu0 0.0
    %1323 = vmatmul.mubr.f32.gmra.mxu0 %v1131
    %v1324 = vpop.f32.mrf.mxu0
    %v1325 = vadd.f32 0.0, %v1324
    %v1326 = vpop.f32.mrf.mxu0
    %1327 = vmatprep.mubr.f32.mxu0 0.0
    %1328 = vmatmul.mubr.f32.gmra.mxu0 %v1134
    %v1329 = vpop.f32.mrf.mxu0
    %v1330 = vadd.f32 0.0, %v1329
    %v1331 = vpop.f32.mrf.mxu0
    %1332 = vmatprep.mubr.f32.mxu0 0.0
    %1333 = vmatmul.mubr.f32.gmra.mxu0 %v1137
    %v1334 = vpop.f32.mrf.mxu0
    %v1335 = vadd.f32 0.0, %v1334
    %v1336 = vpop.f32.mrf.mxu0
    %1337 = vmatprep.mubr.f32.mxu0 0.0
    %1338 = vmatmul.mubr.f32.gmra.mxu0 %v1140
    %v1339 = vpop.f32.mrf.mxu0
    %v1340 = vadd.f32 0.0, %v1339
    %v1341 = vpop.f32.mrf.mxu0
    %1342 = vmatprep.mubr.f32.mxu0 0.0
    %1343 = vmatmul.mubr.f32.gmra.mxu0 %v1143
    %v1344 = vpop.f32.mrf.mxu0
    %v1345 = vadd.f32 0.0, %v1344
    %v1346 = vpop.f32.mrf.mxu0
    %1347 = vmatprep.mubr.f32.mxu0 0.0
    %1348 = vmatmul.mubr.f32.gmra.mxu0 %v1146
    %v1349 = vpop.f32.mrf.mxu0
    %v1350 = vadd.f32 0.0, %v1349
    %v1351 = vpop.f32.mrf.mxu0
    %1352 = vdwg.mxu0
    %v1353 = vadd.f32 %v1093, %v1224
    %v1354 = vadd.f32 %v1094, %v1226
    %v1355 = vadd.f32 %v1095, %v1325
    %v1356 = vadd.f32 %v1096, %v1230
    %v1357 = vadd.f32 %v1097, %v1232
    %v1358 = vadd.f32 %v1098, %v1330
    %v1359 = vadd.f32 %v1099, %v1236
    %v1360 = vadd.f32 %v1100, %v1238
    %v1361 = vadd.f32 %v1101, %v1335
    %v1362 = vadd.f32 %v1102, %v1242
    %v1363 = vadd.f32 %v1103, %v1244
    %v1364 = vadd.f32 %v1104, %v1340
    %v1365 = vadd.f32 %v1105, %v1248
    %v1366 = vadd.f32 %v1106, %v1250
    %v1367 = vadd.f32 %v1107, %v1345
    %v1368 = vadd.f32 %v1108, %v1254
    %v1369 = vadd.f32 %v1109, %v1256
    %v1370 = vadd.f32 %v1110, %v1350
    %v1371 = vadd.f32 %v1353, %v1356
    %v1372 = vadd.f32 %v1371, %v1359
    %v1373 = vadd.f32 %v1372, %v1362
    %v1374 = vadd.f32 %v1373, %v1365
    %v1375 = vadd.f32 %v1374, %v1368
    %v1376 = vrot.slane %v1375, 4
    %v1377 = vadd.f32 %v1375, %v1376
    %v1378 = vrot.slane %v1377, 2
    %v1379 = vadd.f32 %v1377, %v1378
    %v1380 = vrot.slane %v1379, 1
    %v1381 = vadd.f32 %v1379, %v1380
    %v1382 = vadd.f32 %v1354, %v1357
    %v1383 = vadd.f32 %v1382, %v1360
    %v1384 = vadd.f32 %v1383, %v1363
    %v1385 = vadd.f32 %v1384, %v1366
    %v1386 = vadd.f32 %v1385, %v1369
    %v1387 = vrot.slane %v1386, 4
    %v1388 = vadd.f32 %v1386, %v1387
    %v1389 = vrot.slane %v1388, 2
    %v1390 = vadd.f32 %v1388, %v1389
    %v1391 = vrot.slane %v1390, 1
    %v1392 = vadd.f32 %v1390, %v1391
    %v1393 = vadd.f32 %v1355, %v1358
    %v1394 = vadd.f32 %v1393, %v1361
    %v1395 = vadd.f32 %v1394, %v1364
    %v1396 = vadd.f32 %v1395, %v1367
    %v1397 = vadd.f32 %v1396, %v1370
    %v1398 = vrot.slane %v1397, 4
    %v1399 = vadd.f32 %v1397, %v1398
    %v1400 = vrot.slane %v1399, 2
    %v1401 = vadd.f32 %v1399, %v1400
    %v1402 = vrot.slane %v1401, 1
    %v1403 = vadd.f32 %v1401, %v1402
    %v1404 = vmul.f32 %v1353, %v1353
    %v1405 = vmul.f32 %v1354, %v1354
    %v1406 = vmul.f32 %v1355, %v1355
    %v1407 = vmul.f32 %v1356, %v1356
    %v1408 = vmul.f32 %v1357, %v1357
    %v1409 = vmul.f32 %v1358, %v1358
    %v1410 = vmul.f32 %v1359, %v1359
    %v1411 = vmul.f32 %v1360, %v1360
    %v1412 = vmul.f32 %v1361, %v1361
    %v1413 = vmul.f32 %v1362, %v1362
    %v1414 = vmul.f32 %v1363, %v1363
    %v1415 = vmul.f32 %v1364, %v1364
    %v1416 = vmul.f32 %v1365, %v1365
    %v1417 = vmul.f32 %v1366, %v1366
    %v1418 = vmul.f32 %v1367, %v1367
    %v1419 = vmul.f32 %v1368, %v1368
    %v1420 = vmul.f32 %v1369, %v1369
    %v1421 = vmul.f32 %v1370, %v1370
    %v1422 = vadd.f32 %v1404, %v1407
    %v1423 = vadd.f32 %v1422, %v1410
    %v1424 = vadd.f32 %v1423, %v1413
    %v1425 = vadd.f32 %v1424, %v1416
    %v1426 = vadd.f32 %v1425, %v1419
    %v1427 = vrot.slane %v1426, 4
    %v1428 = vadd.f32 %v1426, %v1427
    %v1429 = vrot.slane %v1428, 2
    %v1430 = vadd.f32 %v1428, %v1429
    %v1431 = vrot.slane %v1430, 1
    %v1432 = vadd.f32 %v1430, %v1431
    %v1433 = vadd.f32 %v1405, %v1408
    %v1434 = vadd.f32 %v1433, %v1411
    %v1435 = vadd.f32 %v1434, %v1414
    %v1436 = vadd.f32 %v1435, %v1417
    %v1437 = vadd.f32 %v1436, %v1420
    %v1438 = vrot.slane %v1437, 4
    %v1439 = vadd.f32 %v1437, %v1438
    %v1440 = vrot.slane %v1439, 2
    %v1441 = vadd.f32 %v1439, %v1440
    %v1442 = vrot.slane %v1441, 1
    %v1443 = vadd.f32 %v1441, %v1442
    %v1444 = vadd.f32 %v1406, %v1409
    %v1445 = vadd.f32 %v1444, %v1412
    %v1446 = vadd.f32 %v1445, %v1415
    %v1447 = vadd.f32 %v1446, %v1418
    %v1448 = vadd.f32 %v1447, %v1421
    %v1449 = vrot.slane %v1448, 4
    %v1450 = vadd.f32 %v1448, %v1449
    %v1451 = vrot.slane %v1450, 2
    %v1452 = vadd.f32 %v1450, %v1451
    %v1453 = vrot.slane %v1452, 1
    %v1454 = vadd.f32 %v1452, %v1453
    %v1455 = vld [vmem:[%s2] sm:$0xff]
    %v1456 = vld [vmem:[%s2 + $0x8] sm:$0xff]
    %v1457 = vld [vmem:[%s2 + $0x10] sm:$0xff]
    %v1458 = vld [vmem:[%s2 + $0x18] sm:$0xff]
    %v1459 = vld [vmem:[%s2 + $0x20] sm:$0xff]
    %v1460 = vld [vmem:[%s2 + $0x28] sm:$0xff]
    %v1461 = vld [vmem:[%s2 + $0x30] sm:$0xff]
    %v1462 = vld [vmem:[%s2 + $0x38] sm:$0xff]
    %v1463 = vld [vmem:[%s2 + $0x40] sm:$0xff]
    %v1464 = vld [vmem:[%s2 + $0x48] sm:$0xff]
    %v1465 = vld [vmem:[%s2 + $0x50] sm:$0xff]
    %v1466 = vld [vmem:[%s2 + $0x58] sm:$0xff]
    %v1467 = vld [vmem:[%s2 + $0x60] sm:$0xff]
    %v1468 = vld [vmem:[%s2 + $0x68] sm:$0xff]
    %v1469 = vld [vmem:[%s2 + $0x70] sm:$0xff]
    %v1470 = vld [vmem:[%s2 + $0x78] sm:$0xff]
    %v1471 = vld [vmem:[%s2 + $0x80] sm:$0xff]
    %v1472 = vld [vmem:[%s2 + $0x88] sm:$0xff]
    %v1473 = vld [vmem:[%s2 + $0x90] sm:$0xff]
    %v1474 = vld [vmem:[%s2 + $0x98] sm:$0xff]
    %v1475 = vld [vmem:[%s2 + $0xa0] sm:$0xff]
    %v1476 = vld [vmem:[%s2 + $0xa8] sm:$0xff]
    %v1477 = vld [vmem:[%s2 + $0xb0] sm:$0xff]
    %v1478 = vld [vmem:[%s2 + $0xb8] sm:$0xff]
    %v1479 = vld [vmem:[%s2 + $0xc0] sm:$0xff]
    %v1480 = vld [vmem:[%s2 + $0xc8] sm:$0xff]
    %v1481 = vld [vmem:[%s2 + $0xd0] sm:$0xff]
    %v1482 = vld [vmem:[%s2 + $0xd8] sm:$0xff]
    %v1483 = vld [vmem:[%s2 + $0xe0] sm:$0xff]
    %v1484 = vld [vmem:[%s2 + $0xe8] sm:$0xff]
    %v1485 = vld [vmem:[%s2 + $0xf0] sm:$0xff]
    %v1486 = vld [vmem:[%s2 + $0xf8] sm:$0xff]
    %v1487 = vld [vmem:[%s2 + $0x100] sm:$0xff]
    %v1488 = vld [vmem:[%s2 + $0x108] sm:$0xff]
    %v1489 = vld [vmem:[%s2 + $0x110] sm:$0xff]
    %v1490 = vld [vmem:[%s2 + $0x118] sm:$0xff]
    %v1491 = vld [vmem:[%s2 + $0x120] sm:$0xff]
    %v1492 = vld [vmem:[%s2 + $0x128] sm:$0xff]
    %v1493 = vld [vmem:[%s2 + $0x130] sm:$0xff]
    %v1494 = vld [vmem:[%s2 + $0x138] sm:$0xff]
    %v1495 = vld [vmem:[%s2 + $0x140] sm:$0xff]
    %v1496 = vld [vmem:[%s2 + $0x148] sm:$0xff]
    %v1497 = vld [vmem:[%s2 + $0x150] sm:$0xff]
    %v1498 = vld [vmem:[%s2 + $0x158] sm:$0xff]
    %v1499 = vld [vmem:[%s2 + $0x160] sm:$0xff]
    %v1500 = vld [vmem:[%s2 + $0x168] sm:$0xff]
    %v1501 = vld [vmem:[%s2 + $0x170] sm:$0xff]
    %v1502 = vld [vmem:[%s2 + $0x178] sm:$0xff]
    %1503 = vmatprep.subr.mxu0 0.0
    %1504 = vmatpush1.msra.mxu0 %v1470
    %1505 = vmatprep.subr.mxu0 0.0
    %1506 = vmatpush1.msra.mxu0 %v1469
    %1507 = vmatprep.subr.mxu0 0.0
    %1508 = vmatpush1.msra.mxu0 %v1468
    %1509 = vmatprep.subr.mxu0 0.0
    %1510 = vmatpush1.msra.mxu0 %v1467
    %1511 = vmatprep.subr.mxu0 0.0
    %1512 = vmatpush1.msra.mxu0 %v1466
    %1513 = vmatprep.subr.mxu0 0.0
    %1514 = vmatpush1.msra.mxu0 %v1465
    %1515 = vmatprep.subr.mxu0 0.0
    %1516 = vmatpush1.msra.mxu0 %v1464
    %1517 = vmatprep.subr.mxu0 0.0
    %1518 = vmatpush1.msra.mxu0 %v1463
    %1519 = vmatprep.subr.mxu0 0.0
    %1520 = vmatpush1.msra.mxu0 %v1462
    %1521 = vmatprep.subr.mxu0 0.0
    %1522 = vmatpush1.msra.mxu0 %v1461
    %1523 = vmatprep.subr.mxu0 0.0
    %1524 = vmatpush1.msra.mxu0 %v1460
    %1525 = vmatprep.subr.mxu0 0.0
    %1526 = vmatpush1.msra.mxu0 %v1459
    %1527 = vmatprep.subr.mxu0 0.0
    %1528 = vmatpush1.msra.mxu0 %v1458
    %1529 = vmatprep.subr.mxu0 0.0
    %1530 = vmatpush1.msra.mxu0 %v1457
    %1531 = vmatprep.subr.mxu0 0.0
    %1532 = vmatpush1.msra.mxu0 %v1456
    %1533 = vmatprep.subr.mxu0 0.0
    %1534 = vmatpush1.msra.mxu0 %v1455
    %1535 = vmatprep.subr.mxu0 0.0
    %1536 = vmatpush2.msra.mxu0 %v1486
    %1537 = vmatprep.subr.mxu0 0.0
    %1538 = vmatpush2.msra.mxu0 %v1485
    %1539 = vmatprep.subr.mxu0 0.0
    %1540 = vmatpush2.msra.mxu0 %v1484
    %1541 = vmatprep.subr.mxu0 0.0
    %1542 = vmatpush2.msra.mxu0 %v1483
    %1543 = vmatprep.subr.mxu0 0.0
    %1544 = vmatpush2.msra.mxu0 %v1482
    %1545 = vmatprep.subr.mxu0 0.0
    %1546 = vmatpush2.msra.mxu0 %v1481
    %1547 = vmatprep.subr.mxu0 0.0
    %1548 = vmatpush2.msra.mxu0 %v1480
    %1549 = vmatprep.subr.mxu0 0.0
    %1550 = vmatpush2.msra.mxu0 %v1479
    %1551 = vmatprep.subr.mxu0 0.0
    %1552 = vmatpush2.msra.mxu0 %v1478
    %1553 = vmatprep.subr.mxu0 0.0
    %1554 = vmatpush2.msra.mxu0 %v1477
    %1555 = vmatprep.subr.mxu0 0.0
    %1556 = vmatpush2.msra.mxu0 %v1476
    %1557 = vmatprep.subr.mxu0 0.0
    %1558 = vmatpush2.msra.mxu0 %v1475
    %1559 = vmatprep.subr.mxu0 0.0
    %1560 = vmatpush2.msra.mxu0 %v1474
    %1561 = vmatprep.subr.mxu0 0.0
    %1562 = vmatpush2.msra.mxu0 %v1473
    %1563 = vmatprep.subr.mxu0 0.0
    %1564 = vmatpush2.msra.mxu0 %v1472
    %1565 = vmatprep.subr.mxu0 0.0
    %1566 = vmatpush2.msra.mxu0 %v1471
    %1567 = vmatprep.mubr.f32.mxu0 %v1392
    %1568 = vmatmul.mubr.f32.gmra.mxu0 %v1381
    %v1569 = vpop.f32.mrf.mxu0
    %v1570 = vadd.f32 0.0, %v1569
    %v1571 = vpop.f32.mrf.mxu0
    %1572 = vdwg.mxu0
    %1573 = vmatprep.subr.mxu0 0.0
    %1574 = vmatpush1.msra.mxu0 %v1502
    %1575 = vmatprep.subr.mxu0 0.0
    %1576 = vmatpush1.msra.mxu0 %v1501
    %1577 = vmatprep.subr.mxu0 0.0
    %1578 = vmatpush1.msra.mxu0 %v1500
    %1579 = vmatprep.subr.mxu0 0.0
    %1580 = vmatpush1.msra.mxu0 %v1499
    %1581 = vmatprep.subr.mxu0 0.0
    %1582 = vmatpush1.msra.mxu0 %v1498
    %1583 = vmatprep.subr.mxu0 0.0
    %1584 = vmatpush1.msra.mxu0 %v1497
    %1585 = vmatprep.subr.mxu0 0.0
    %1586 = vmatpush1.msra.mxu0 %v1496
    %1587 = vmatprep.subr.mxu0 0.0
    %1588 = vmatpush1.msra.mxu0 %v1495
    %1589 = vmatprep.subr.mxu0 0.0
    %1590 = vmatpush1.msra.mxu0 %v1494
    %1591 = vmatprep.subr.mxu0 0.0
    %1592 = vmatpush1.msra.mxu0 %v1493
    %1593 = vmatprep.subr.mxu0 0.0
    %1594 = vmatpush1.msra.mxu0 %v1492
    %1595 = vmatprep.subr.mxu0 0.0
    %1596 = vmatpush1.msra.mxu0 %v1491
    %1597 = vmatprep.subr.mxu0 0.0
    %1598 = vmatpush1.msra.mxu0 %v1490
    %1599 = vmatprep.subr.mxu0 0.0
    %1600 = vmatpush1.msra.mxu0 %v1489
    %1601 = vmatprep.subr.mxu0 0.0
    %1602 = vmatpush1.msra.mxu0 %v1488
    %1603 = vmatprep.subr.mxu0 0.0
    %1604 = vmatpush1.msra.mxu0 %v1487
    %1605 = vmatprep.subr.mxu0 0.0
    %1606 = vmatpush2.msra.mxu0 0.0
    %1607 = vmatprep.subr.mxu0 0.0
    %1608 = vmatpush2.msra.mxu0 0.0
    %1609 = vmatprep.subr.mxu0 0.0
    %1610 = vmatpush2.msra.mxu0 0.0
    %1611 = vmatprep.subr.mxu0 0.0
    %1612 = vmatpush2.msra.mxu0 0.0
    %1613 = vmatprep.subr.mxu0 0.0
    %1614 = vmatpush2.msra.mxu0 0.0
    %1615 = vmatprep.subr.mxu0 0.0
    %1616 = vmatpush2.msra.mxu0 0.0
    %1617 = vmatprep.subr.mxu0 0.0
    %1618 = vmatpush2.msra.mxu0 0.0
    %1619 = vmatprep.subr.mxu0 0.0
    %1620 = vmatpush2.msra.mxu0 0.0
    %1621 = vmatprep.subr.mxu0 0.0
    %1622 = vmatpush2.msra.mxu0 0.0
    %1623 = vmatprep.subr.mxu0 0.0
    %1624 = vmatpush2.msra.mxu0 0.0
    %1625 = vmatprep.subr.mxu0 0.0
    %1626 = vmatpush2.msra.mxu0 0.0
    %1627 = vmatprep.subr.mxu0 0.0
    %1628 = vmatpush2.msra.mxu0 0.0
    %1629 = vmatprep.subr.mxu0 0.0
    %1630 = vmatpush2.msra.mxu0 0.0
    %1631 = vmatprep.subr.mxu0 0.0
    %1632 = vmatpush2.msra.mxu0 0.0
    %1633 = vmatprep.subr.mxu0 0.0
    %1634 = vmatpush2.msra.mxu0 0.0
    %1635 = vmatprep.subr.mxu0 0.0
    %1636 = vmatpush2.msra.mxu0 0.0
    %1637 = vmatprep.mubr.f32.mxu0 0.0
    %1638 = vmatmul.mubr.f32.gmra.mxu0 %v1403
    %v1639 = vpop.f32.mrf.mxu0
    %v1640 = vadd.f32 %v1570, %v1639
    %v1641 = vpop.f32.mrf.mxu0
    %1642 = vdwg.mxu0
    %1643 = vmatprep.subr.mxu0 0.0
    %1644 = vmatpush1.msra.mxu0 %v1470
    %1645 = vmatprep.subr.mxu0 0.0
    %1646 = vmatpush1.msra.mxu0 %v1469
    %1647 = vmatprep.subr.mxu0 0.0
    %1648 = vmatpush1.msra.mxu0 %v1468
    %1649 = vmatprep.subr.mxu0 0.0
    %1650 = vmatpush1.msra.mxu0 %v1467
    %1651 = vmatprep.subr.mxu0 0.0
    %1652 = vmatpush1.msra.mxu0 %v1466
    %1653 = vmatprep.subr.mxu0 0.0
    %1654 = vmatpush1.msra.mxu0 %v1465
    %1655 = vmatprep.subr.mxu0 0.0
    %1656 = vmatpush1.msra.mxu0 %v1464
    %1657 = vmatprep.subr.mxu0 0.0
    %1658 = vmatpush1.msra.mxu0 %v1463
    %1659 = vmatprep.subr.mxu0 0.0
    %1660 = vmatpush1.msra.mxu0 %v1462
    %1661 = vmatprep.subr.mxu0 0.0
    %1662 = vmatpush1.msra.mxu0 %v1461
    %1663 = vmatprep.subr.mxu0 0.0
    %1664 = vmatpush1.msra.mxu0 %v1460
    %1665 = vmatprep.subr.mxu0 0.0
    %1666 = vmatpush1.msra.mxu0 %v1459
    %1667 = vmatprep.subr.mxu0 0.0
    %1668 = vmatpush1.msra.mxu0 %v1458
    %1669 = vmatprep.subr.mxu0 0.0
    %1670 = vmatpush1.msra.mxu0 %v1457
    %1671 = vmatprep.subr.mxu0 0.0
    %1672 = vmatpush1.msra.mxu0 %v1456
    %1673 = vmatprep.subr.mxu0 0.0
    %1674 = vmatpush1.msra.mxu0 %v1455
    %1675 = vmatprep.subr.mxu0 0.0
    %1676 = vmatpush2.msra.mxu0 %v1486
    %1677 = vmatprep.subr.mxu0 0.0
    %1678 = vmatpush2.msra.mxu0 %v1485
    %1679 = vmatprep.subr.mxu0 0.0
    %1680 = vmatpush2.msra.mxu0 %v1484
    %1681 = vmatprep.subr.mxu0 0.0
    %1682 = vmatpush2.msra.mxu0 %v1483
    %1683 = vmatprep.subr.mxu0 0.0
    %1684 = vmatpush2.msra.mxu0 %v1482
    %1685 = vmatprep.subr.mxu0 0.0
    %1686 = vmatpush2.msra.mxu0 %v1481
    %1687 = vmatprep.subr.mxu0 0.0
    %1688 = vmatpush2.msra.mxu0 %v1480
    %1689 = vmatprep.subr.mxu0 0.0
    %1690 = vmatpush2.msra.mxu0 %v1479
    %1691 = vmatprep.subr.mxu0 0.0
    %1692 = vmatpush2.msra.mxu0 %v1478
    %1693 = vmatprep.subr.mxu0 0.0
    %1694 = vmatpush2.msra.mxu0 %v1477
    %1695 = vmatprep.subr.mxu0 0.0
    %1696 = vmatpush2.msra.mxu0 %v1476
    %1697 = vmatprep.subr.mxu0 0.0
    %1698 = vmatpush2.msra.mxu0 %v1475
    %1699 = vmatprep.subr.mxu0 0.0
    %1700 = vmatpush2.msra.mxu0 %v1474
    %1701 = vmatprep.subr.mxu0 0.0
    %1702 = vmatpush2.msra.mxu0 %v1473
    %1703 = vmatprep.subr.mxu0 0.0
    %1704 = vmatpush2.msra.mxu0 %v1472
    %1705 = vmatprep.subr.mxu0 0.0
    %1706 = vmatpush2.msra.mxu0 %v1471
    %1707 = vmatprep.mubr.f32.mxu0 %v1443
    %1708 = vmatmul.mubr.f32.gmra.mxu0 %v1432
    %v1709 = vpop.f32.mrf.mxu0
    %v1710 = vadd.f32 0.0, %v1709
    %v1711 = vpop.f32.mrf.mxu0
    %1712 = vdwg.mxu0
    %1713 = vmatprep.subr.mxu0 0.0
    %1714 = vmatpush1.msra.mxu0 %v1502
    %1715 = vmatprep.subr.mxu0 0.0
    %1716 = vmatpush1.msra.mxu0 %v1501
    %1717 = vmatprep.subr.mxu0 0.0
    %1718 = vmatpush1.msra.mxu0 %v1500
    %1719 = vmatprep.subr.mxu0 0.0
    %1720 = vmatpush1.msra.mxu0 %v1499
    %1721 = vmatprep.subr.mxu0 0.0
    %1722 = vmatpush1.msra.mxu0 %v1498
    %1723 = vmatprep.subr.mxu0 0.0
    %1724 = vmatpush1.msra.mxu0 %v1497
    %1725 = vmatprep.subr.mxu0 0.0
    %1726 = vmatpush1.msra.mxu0 %v1496
    %1727 = vmatprep.subr.mxu0 0.0
    %1728 = vmatpush1.msra.mxu0 %v1495
    %1729 = vmatprep.subr.mxu0 0.0
    %1730 = vmatpush1.msra.mxu0 %v1494
    %1731 = vmatprep.subr.mxu0 0.0
    %1732 = vmatpush1.msra.mxu0 %v1493
    %1733 = vmatprep.subr.mxu0 0.0
    %1734 = vmatpush1.msra.mxu0 %v1492
    %1735 = vmatprep.subr.mxu0 0.0
    %1736 = vmatpush1.msra.mxu0 %v1491
    %1737 = vmatprep.subr.mxu0 0.0
    %1738 = vmatpush1.msra.mxu0 %v1490
    %1739 = vmatprep.subr.mxu0 0.0
    %1740 = vmatpush1.msra.mxu0 %v1489
    %1741 = vmatprep.subr.mxu0 0.0
    %1742 = vmatpush1.msra.mxu0 %v1488
    %1743 = vmatprep.subr.mxu0 0.0
    %1744 = vmatpush1.msra.mxu0 %v1487
    %1745 = vmatprep.subr.mxu0 0.0
    %1746 = vmatpush2.msra.mxu0 0.0
    %1747 = vmatprep.subr.mxu0 0.0
    %1748 = vmatpush2.msra.mxu0 0.0
    %1749 = vmatprep.subr.mxu0 0.0
    %1750 = vmatpush2.msra.mxu0 0.0
    %1751 = vmatprep.subr.mxu0 0.0
    %1752 = vmatpush2.msra.mxu0 0.0
    %1753 = vmatprep.subr.mxu0 0.0
    %1754 = vmatpush2.msra.mxu0 0.0
    %1755 = vmatprep.subr.mxu0 0.0
    %1756 = vmatpush2.msra.mxu0 0.0
    %1757 = vmatprep.subr.mxu0 0.0
    %1758 = vmatpush2.msra.mxu0 0.0
    %1759 = vmatprep.subr.mxu0 0.0
    %1760 = vmatpush2.msra.mxu0 0.0
    %1761 = vmatprep.subr.mxu0 0.0
    %1762 = vmatpush2.msra.mxu0 0.0
    %1763 = vmatprep.subr.mxu0 0.0
    %1764 = vmatpush2.msra.mxu0 0.0
    %1765 = vmatprep.subr.mxu0 0.0
    %1766 = vmatpush2.msra.mxu0 0.0
    %1767 = vmatprep.subr.mxu0 0.0
    %1768 = vmatpush2.msra.mxu0 0.0
    %1769 = vmatprep.subr.mxu0 0.0
    %1770 = vmatpush2.msra.mxu0 0.0
    %1771 = vmatprep.subr.mxu0 0.0
    %1772 = vmatpush2.msra.mxu0 0.0
    %1773 = vmatprep.subr.mxu0 0.0
    %1774 = vmatpush2.msra.mxu0 0.0
    %1775 = vmatprep.subr.mxu0 0.0
    %1776 = vmatpush2.msra.mxu0 0.0
    %1777 = vmatprep.mubr.f32.mxu0 0.0
    %1778 = vmatmul.mubr.f32.gmra.mxu0 %v1454
    %v1779 = vpop.f32.mrf.mxu0
    %v1780 = vadd.f32 %v1710, %v1779
    %v1781 = vpop.f32.mrf.mxu0
    %1782 = vdwg.mxu0
    %v1783 = vrcp.pop 1152.0
    %v1784 = vmul.f32 %v1640, %v1783
    %v1785 = vmul.f32 %v1780, %v1783
    %v1786 = vmul.f32 %v1784, %v1784
    %v1787 = vsub.f32 %v1785, %v1786
    %v1788 = vld [vmem:[%s4] sm:$0x1]
    %v1789 = vadd.f32 %v1787, 1e-05
    %v1790 = vrsqrt.pop %v1789
    %v1791 = vmul.f32 %v1788, %v1790
    %v1792 = vld [vmem:[%s5] sm:$0x1]
    %v1793 = vmul.f32 %v1784, %v1791
    %v1794 = vsub.f32 %v1792, %v1793
    %v1795 = vld [vmem:[#allocation2] sm:$0xff]
    %v1796 = vld [vmem:[#allocation2 + $0x8] sm:$0xff]
    %v1797 = vld [vmem:[#allocation2 + $0x10] sm:$0xff]
    %v1798 = vld [vmem:[#allocation2 + $0x18] sm:$0xff]
    %v1799 = vld [vmem:[#allocation2 + $0x20] sm:$0xff]
    %v1800 = vld [vmem:[#allocation2 + $0x28] sm:$0xff]
    %vm1801 = vcmask 130048
    %v1803 = vsel %vm1801, %v1791, 0
    %1805 = vmatprep.subr.mxu0 0.0
    %1806 = vmatpush1.msra.mxu0 0.0
    %1807 = vmatprep.subr.mxu0 0.0
    %1808 = vmatpush1.msra.mxu0 0.0
    %1809 = vmatprep.subr.mxu0 0.0
    %1810 = vmatpush1.msra.mxu0 0.0
    %1811 = vmatprep.subr.mxu0 0.0
    %1812 = vmatpush1.msra.mxu0 0.0
    %1813 = vmatprep.subr.mxu0 0.0
    %1814 = vmatpush1.msra.mxu0 0.0
    %1815 = vmatprep.subr.mxu0 0.0
    %1816 = vmatpush1.msra.mxu0 0.0
    %1817 = vmatprep.subr.mxu0 0.0
    %1818 = vmatpush1.msra.mxu0 0.0
    %1819 = vmatprep.subr.mxu0 0.0
    %1820 = vmatpush1.msra.mxu0 0.0
    %1821 = vmatprep.subr.mxu0 0.0
    %1822 = vmatpush1.msra.mxu0 0.0
    %1823 = vmatprep.subr.mxu0 0.0
    %1824 = vmatpush1.msra.mxu0 0.0
    %1825 = vmatprep.subr.mxu0 0.0
    %1826 = vmatpush1.msra.mxu0 0.0
    %1827 = vmatprep.subr.mxu0 0.0
    %1828 = vmatpush1.msra.mxu0 0.0
    %1829 = vmatprep.subr.mxu0 0.0
    %1830 = vmatpush1.msra.mxu0 0.0
    %1831 = vmatprep.subr.mxu0 0.0
    %1832 = vmatpush1.msra.mxu0 0.0
    %1833 = vmatprep.subr.mxu0 %v1799
    %1834 = vmatpush1.msra.mxu0 %v1798
    %1835 = vmatprep.subr.mxu0 %v1796
    %1836 = vmatpush1.msra.mxu0 %v1795
    %1837 = vmatprep.subr.mxu0 0.0
    %1838 = vmatpush2.msra.mxu0 0.0
    %1839 = vmatprep.subr.mxu0 0.0
    %1840 = vmatpush2.msra.mxu0 0.0
    %1841 = vmatprep.subr.mxu0 0.0
    %1842 = vmatpush2.msra.mxu0 0.0
    %1843 = vmatprep.subr.mxu0 0.0
    %1844 = vmatpush2.msra.mxu0 0.0
    %1845 = vmatprep.subr.mxu0 0.0
    %1846 = vmatpush2.msra.mxu0 0.0
    %1847 = vmatprep.subr.mxu0 0.0
    %1848 = vmatpush2.msra.mxu0 0.0
    %1849 = vmatprep.subr.mxu0 0.0
    %1850 = vmatpush2.msra.mxu0 0.0
    %1851 = vmatprep.subr.mxu0 0.0
    %1852 = vmatpush2.msra.mxu0 0.0
    %1853 = vmatprep.subr.mxu0 0.0
    %1854 = vmatpush2.msra.mxu0 0.0
    %1855 = vmatprep.subr.mxu0 0.0
    %1856 = vmatpush2.msra.mxu0 0.0
    %1857 = vmatprep.subr.mxu0 0.0
    %1858 = vmatpush2.msra.mxu0 0.0
    %1859 = vmatprep.subr.mxu0 0.0
    %1860 = vmatpush2.msra.mxu0 0.0
    %1861 = vmatprep.subr.mxu0 0.0
    %1862 = vmatpush2.msra.mxu0 0.0
    %1863 = vmatprep.subr.mxu0 0.0
    %1864 = vmatpush2.msra.mxu0 0.0
    %1865 = vmatprep.subr.mxu0 0.0
    %1866 = vmatpush2.msra.mxu0 0.0
    %1867 = vmatprep.subr.mxu0 0.0
    %1868 = vmatpush2.msra.mxu0 0.0
    %1869 = vmatprep.mubr.f32.mxu0 0.0
    %1870 = vmatmul.mubr.f32.gmra.mxu0 %v1803
    %v1871 = vpop.f32.mrf.mxu0
    %v1872 = vadd.f32 0.0, %v1871
    %v1873 = vpop.f32.mrf.mxu0
    %v1874 = vadd.f32 0.0, %v1873
    %1875 = vdwg.mxu0
    %1876 = vmatprep.subr.mxu0 0.0
    %1877 = vmatpush1.msra.mxu0 0.0
    %1878 = vmatprep.subr.mxu0 0.0
    %1879 = vmatpush1.msra.mxu0 0.0
    %1880 = vmatprep.subr.mxu0 0.0
    %1881 = vmatpush1.msra.mxu0 0.0
    %1882 = vmatprep.subr.mxu0 0.0
    %1883 = vmatpush1.msra.mxu0 0.0
    %1884 = vmatprep.subr.mxu0 0.0
    %1885 = vmatpush1.msra.mxu0 0.0
    %1886 = vmatprep.subr.mxu0 0.0
    %1887 = vmatpush1.msra.mxu0 0.0
    %1888 = vmatprep.subr.mxu0 0.0
    %1889 = vmatpush1.msra.mxu0 0.0
    %1890 = vmatprep.subr.mxu0 0.0
    %1891 = vmatpush1.msra.mxu0 0.0
    %1892 = vmatprep.subr.mxu0 0.0
    %1893 = vmatpush1.msra.mxu0 0.0
    %1894 = vmatprep.subr.mxu0 0.0
    %1895 = vmatpush1.msra.mxu0 0.0
    %1896 = vmatprep.subr.mxu0 0.0
    %1897 = vmatpush1.msra.mxu0 0.0
    %1898 = vmatprep.subr.mxu0 0.0
    %1899 = vmatpush1.msra.mxu0 0.0
    %1900 = vmatprep.subr.mxu0 0.0
    %1901 = vmatpush1.msra.mxu0 0.0
    %1902 = vmatprep.subr.mxu0 0.0
    %1903 = vmatpush1.msra.mxu0 0.0
    %1904 = vmatprep.subr.mxu0 0.0
    %1905 = vmatpush1.msra.mxu0 %v1800
    %1906 = vmatprep.subr.mxu0 0.0
    %1907 = vmatpush1.msra.mxu0 %v1797
    %1908 = vmatprep.subr.mxu0 0.0
    %1909 = vmatpush2.msra.mxu0 0.0
    %1910 = vmatprep.subr.mxu0 0.0
    %1911 = vmatpush2.msra.mxu0 0.0
    %1912 = vmatprep.subr.mxu0 0.0
    %1913 = vmatpush2.msra.mxu0 0.0
    %1914 = vmatprep.subr.mxu0 0.0
    %1915 = vmatpush2.msra.mxu0 0.0
    %1916 = vmatprep.subr.mxu0 0.0
    %1917 = vmatpush2.msra.mxu0 0.0
    %1918 = vmatprep.subr.mxu0 0.0
    %1919 = vmatpush2.msra.mxu0 0.0
    %1920 = vmatprep.subr.mxu0 0.0
    %1921 = vmatpush2.msra.mxu0 0.0
    %1922 = vmatprep.subr.mxu0 0.0
    %1923 = vmatpush2.msra.mxu0 0.0
    %1924 = vmatprep.subr.mxu0 0.0
    %1925 = vmatpush2.msra.mxu0 0.0
    %1926 = vmatprep.subr.mxu0 0.0
    %1927 = vmatpush2.msra.mxu0 0.0
    %1928 = vmatprep.subr.mxu0 0.0
    %1929 = vmatpush2.msra.mxu0 0.0
    %1930 = vmatprep.subr.mxu0 0.0
    %1931 = vmatpush2.msra.mxu0 0.0
    %1932 = vmatprep.subr.mxu0 0.0
    %1933 = vmatpush2.msra.mxu0 0.0
    %1934 = vmatprep.subr.mxu0 0.0
    %1935 = vmatpush2.msra.mxu0 0.0
    %1936 = vmatprep.subr.mxu0 0.0
    %1937 = vmatpush2.msra.mxu0 0.0
    %1938 = vmatprep.subr.mxu0 0.0
    %1939 = vmatpush2.msra.mxu0 0.0
    %1940 = vmatprep.mubr.f32.mxu0 0.0
    %1941 = vmatmul.mubr.f32.gmra.mxu0 %v1803
    %v1942 = vpop.f32.mrf.mxu0
    %v1943 = vadd.f32 0.0, %v1942
    %v1944 = vpop.f32.mrf.mxu0
    %1945 = vdwg.mxu0
    %v1947 = vsel %vm1801, %v1794, 0
    %1949 = vmatprep.subr.mxu0 0.0
    %1950 = vmatpush1.msra.mxu0 0.0
    %1951 = vmatprep.subr.mxu0 0.0
    %1952 = vmatpush1.msra.mxu0 0.0
    %1953 = vmatprep.subr.mxu0 0.0
    %1954 = vmatpush1.msra.mxu0 0.0
    %1955 = vmatprep.subr.mxu0 0.0
    %1956 = vmatpush1.msra.mxu0 0.0
    %1957 = vmatprep.subr.mxu0 0.0
    %1958 = vmatpush1.msra.mxu0 0.0
    %1959 = vmatprep.subr.mxu0 0.0
    %1960 = vmatpush1.msra.mxu0 0.0
    %1961 = vmatprep.subr.mxu0 0.0
    %1962 = vmatpush1.msra.mxu0 0.0
    %1963 = vmatprep.subr.mxu0 0.0
    %1964 = vmatpush1.msra.mxu0 0.0
    %1965 = vmatprep.subr.mxu0 0.0
    %1966 = vmatpush1.msra.mxu0 0.0
    %1967 = vmatprep.subr.mxu0 0.0
    %1968 = vmatpush1.msra.mxu0 0.0
    %1969 = vmatprep.subr.mxu0 0.0
    %1970 = vmatpush1.msra.mxu0 0.0
    %1971 = vmatprep.subr.mxu0 0.0
    %1972 = vmatpush1.msra.mxu0 0.0
    %1973 = vmatprep.subr.mxu0 0.0
    %1974 = vmatpush1.msra.mxu0 0.0
    %1975 = vmatprep.subr.mxu0 0.0
    %1976 = vmatpush1.msra.mxu0 0.0
    %1977 = vmatprep.subr.mxu0 %v1799
    %1978 = vmatpush1.msra.mxu0 %v1798
    %1979 = vmatprep.subr.mxu0 %v1796
    %1980 = vmatpush1.msra.mxu0 %v1795
    %1981 = vmatprep.subr.mxu0 0.0
    %1982 = vmatpush2.msra.mxu0 0.0
    %1983 = vmatprep.subr.mxu0 0.0
    %1984 = vmatpush2.msra.mxu0 0.0
    %1985 = vmatprep.subr.mxu0 0.0
    %1986 = vmatpush2.msra.mxu0 0.0
    %1987 = vmatprep.subr.mxu0 0.0
    %1988 = vmatpush2.msra.mxu0 0.0
    %1989 = vmatprep.subr.mxu0 0.0
    %1990 = vmatpush2.msra.mxu0 0.0
    %1991 = vmatprep.subr.mxu0 0.0
    %1992 = vmatpush2.msra.mxu0 0.0
    %1993 = vmatprep.subr.mxu0 0.0
    %1994 = vmatpush2.msra.mxu0 0.0
    %1995 = vmatprep.subr.mxu0 0.0
    %1996 = vmatpush2.msra.mxu0 0.0
    %1997 = vmatprep.subr.mxu0 0.0
    %1998 = vmatpush2.msra.mxu0 0.0
    %1999 = vmatprep.subr.mxu0 0.0
    %2000 = vmatpush2.msra.mxu0 0.0
    %2001 = vmatprep.subr.mxu0 0.0
    %2002 = vmatpush2.msra.mxu0 0.0
    %2003 = vmatprep.subr.mxu0 0.0
    %2004 = vmatpush2.msra.mxu0 0.0
    %2005 = vmatprep.subr.mxu0 0.0
    %2006 = vmatpush2.msra.mxu0 0.0
    %2007 = vmatprep.subr.mxu0 0.0
    %2008 = vmatpush2.msra.mxu0 0.0
    %2009 = vmatprep.subr.mxu0 0.0
    %2010 = vmatpush2.msra.mxu0 0.0
    %2011 = vmatprep.subr.mxu0 0.0
    %2012 = vmatpush2.msra.mxu0 0.0
    %2013 = vmatprep.mubr.f32.mxu0 0.0
    %2014 = vmatmul.mubr.f32.gmra.mxu0 %v1947
    %v2015 = vpop.f32.mrf.mxu0
    %v2016 = vadd.f32 0.0, %v2015
    %v2017 = vpop.f32.mrf.mxu0
    %v2018 = vadd.f32 0.0, %v2017
    %2019 = vdwg.mxu0
    %2020 = vmatprep.subr.mxu0 0.0
    %2021 = vmatpush1.msra.mxu0 0.0
    %2022 = vmatprep.subr.mxu0 0.0
    %2023 = vmatpush1.msra.mxu0 0.0
    %2024 = vmatprep.subr.mxu0 0.0
    %2025 = vmatpush1.msra.mxu0 0.0
    %2026 = vmatprep.subr.mxu0 0.0
    %2027 = vmatpush1.msra.mxu0 0.0
    %2028 = vmatprep.subr.mxu0 0.0
    %2029 = vmatpush1.msra.mxu0 0.0
    %2030 = vmatprep.subr.mxu0 0.0
    %2031 = vmatpush1.msra.mxu0 0.0
    %2032 = vmatprep.subr.mxu0 0.0
    %2033 = vmatpush1.msra.mxu0 0.0
    %2034 = vmatprep.subr.mxu0 0.0
    %2035 = vmatpush1.msra.mxu0 0.0
    %2036 = vmatprep.subr.mxu0 0.0
    %2037 = vmatpush1.msra.mxu0 0.0
    %2038 = vmatprep.subr.mxu0 0.0
    %2039 = vmatpush1.msra.mxu0 0.0
    %2040 = vmatprep.subr.mxu0 0.0
    %2041 = vmatpush1.msra.mxu0 0.0
    %2042 = vmatprep.subr.mxu0 0.0
    %2043 = vmatpush1.msra.mxu0 0.0
    %2044 = vmatprep.subr.mxu0 0.0
    %2045 = vmatpush1.msra.mxu0 0.0
    %2046 = vmatprep.subr.mxu0 0.0
    %2047 = vmatpush1.msra.mxu0 0.0
    %2048 = vmatprep.subr.mxu0 0.0
    %2049 = vmatpush1.msra.mxu0 %v1800
    %2050 = vmatprep.subr.mxu0 0.0
    %2051 = vmatpush1.msra.mxu0 %v1797
    %2052 = vmatprep.subr.mxu0 0.0
    %2053 = vmatpush2.msra.mxu0 0.0
    %2054 = vmatprep.subr.mxu0 0.0
    %2055 = vmatpush2.msra.mxu0 0.0
    %2056 = vmatprep.subr.mxu0 0.0
    %2057 = vmatpush2.msra.mxu0 0.0
    %2058 = vmatprep.subr.mxu0 0.0
    %2059 = vmatpush2.msra.mxu0 0.0
    %2060 = vmatprep.subr.mxu0 0.0
    %2061 = vmatpush2.msra.mxu0 0.0
    %2062 = vmatprep.subr.mxu0 0.0
    %2063 = vmatpush2.msra.mxu0 0.0
    %2064 = vmatprep.subr.mxu0 0.0
    %2065 = vmatpush2.msra.mxu0 0.0
    %2066 = vmatprep.subr.mxu0 0.0
    %2067 = vmatpush2.msra.mxu0 0.0
    %2068 = vmatprep.subr.mxu0 0.0
    %2069 = vmatpush2.msra.mxu0 0.0
    %2070 = vmatprep.subr.mxu0 0.0
    %2071 = vmatpush2.msra.mxu0 0.0
    %2072 = vmatprep.subr.mxu0 0.0
    %2073 = vmatpush2.msra.mxu0 0.0
    %2074 = vmatprep.subr.mxu0 0.0
    %2075 = vmatpush2.msra.mxu0 0.0
    %2076 = vmatprep.subr.mxu0 0.0
    %2077 = vmatpush2.msra.mxu0 0.0
    %2078 = vmatprep.subr.mxu0 0.0
    %2079 = vmatpush2.msra.mxu0 0.0
    %2080 = vmatprep.subr.mxu0 0.0
    %2081 = vmatpush2.msra.mxu0 0.0
    %2082 = vmatprep.subr.mxu0 0.0
    %2083 = vmatpush2.msra.mxu0 0.0
    %2084 = vmatprep.mubr.f32.mxu0 0.0
    %2085 = vmatmul.mubr.f32.gmra.mxu0 %v1947
    %v2086 = vpop.f32.mrf.mxu0
    %v2087 = vadd.f32 0.0, %v2086
    %v2088 = vpop.f32.mrf.mxu0
    %2089 = vdwg.mxu0
    %v2090 = vlaneseq
    %v2091 = vshrl.u32 %v2090, 7
    %v2092 = vsub.s32 0, %v2091
    %v2093 = vrot.slane %v1872, %v2092
    %v2094 = vlaneseq
    %v2095 = vshrl.u32 %v2094, 7
    %v2096 = vsub.s32 0, %v2095
    %v2097 = vrot.slane %v1874, %v2096
    %v2098 = vlaneseq
    %v2099 = vshrl.u32 %v2098, 7
    %v2100 = vsub.s32 0, %v2099
    %v2101 = vrot.slane %v1943, %v2100
    %v2102 = vmul.f32 %v1353, %v2093
    %v2103 = vmul.f32 %v1354, %v2097
    %v2104 = vmul.f32 %v1355, %v2101
    %v2105 = vmul.f32 %v1356, %v2093
    %v2106 = vmul.f32 %v1357, %v2097
    %v2107 = vmul.f32 %v1358, %v2101
    %v2108 = vmul.f32 %v1359, %v2093
    %v2109 = vmul.f32 %v1360, %v2097
    %v2110 = vmul.f32 %v1361, %v2101
    %v2111 = vmul.f32 %v1362, %v2093
    %v2112 = vmul.f32 %v1363, %v2097
    %v2113 = vmul.f32 %v1364, %v2101
    %v2114 = vmul.f32 %v1365, %v2093
    %v2115 = vmul.f32 %v1366, %v2097
    %v2116 = vmul.f32 %v1367, %v2101
    %v2117 = vmul.f32 %v1368, %v2093
    %v2118 = vmul.f32 %v1369, %v2097
    %v2119 = vmul.f32 %v1370, %v2101
    %v2120 = vlaneseq
    %v2121 = vshrl.u32 %v2120, 7
    %v2122 = vsub.s32 0, %v2121
    %v2123 = vrot.slane %v2016, %v2122
    %v2124 = vlaneseq
    %v2125 = vshrl.u32 %v2124, 7
    %v2126 = vsub.s32 0, %v2125
    %v2127 = vrot.slane %v2018, %v2126
    %v2128 = vlaneseq
    %v2129 = vshrl.u32 %v2128, 7
    %v2130 = vsub.s32 0, %v2129
    %v2131 = vrot.slane %v2087, %v2130
    %v2132 = vadd.f32 %v2102, %v2123
    %v2133 = vadd.f32 %v2103, %v2127
    %v2134 = vadd.f32 %v2104, %v2131
    %v2135 = vadd.f32 %v2105, %v2123
    %v2136 = vadd.f32 %v2106, %v2127
    %v2137 = vadd.f32 %v2107, %v2131
    %v2138 = vadd.f32 %v2108, %v2123
    %v2139 = vadd.f32 %v2109, %v2127
    %v2140 = vadd.f32 %v2110, %v2131
    %v2141 = vadd.f32 %v2111, %v2123
    %v2142 = vadd.f32 %v2112, %v2127
    %v2143 = vadd.f32 %v2113, %v2131
    %v2144 = vadd.f32 %v2114, %v2123
    %v2145 = vadd.f32 %v2115, %v2127
    %v2146 = vadd.f32 %v2116, %v2131
    %v2147 = vadd.f32 %v2117, %v2123
    %v2148 = vadd.f32 %v2118, %v2127
    %v2149 = vadd.f32 %v2119, %v2131
    %v2150 = vmax.f32 %v2132, 0.0
    %v2151 = vmax.f32 %v2133, 0.0
    %v2152 = vmax.f32 %v2134, 0.0
    %v2153 = vmax.f32 %v2135, 0.0
    %v2154 = vmax.f32 %v2136, 0.0
    %v2155 = vmax.f32 %v2137, 0.0
    %v2156 = vmax.f32 %v2138, 0.0
    %v2157 = vmax.f32 %v2139, 0.0
    %v2158 = vmax.f32 %v2140, 0.0
    %v2159 = vmax.f32 %v2141, 0.0
    %v2160 = vmax.f32 %v2142, 0.0
    %v2161 = vmax.f32 %v2143, 0.0
    %v2162 = vmax.f32 %v2144, 0.0
    %v2163 = vmax.f32 %v2145, 0.0
    %v2164 = vmax.f32 %v2146, 0.0
    %v2165 = vmax.f32 %v2147, 0.0
    %v2166 = vmax.f32 %v2148, 0.0
    %v2167 = vmax.f32 %v2149, 0.0
    %v2186 = vcombine.low %v2150, %v2151
    %v2187 = vcombine.high %v2150, %v2151
    %v2188 = vcombine.high %v2152, %v2152
    %v2190 = vunpack.c.l.s4 1983009808
    %v2191 = vunpack.c.0.s8 %v2190
    %v2192 = vlaneseq
    %v2193 = vshrl.u32 %v2192, 7
    %v2194 = vsub.s32 %v2191, %v2193
    %v2195 = vrot.slane %v2186, %v2194
    %v2197 = vunpack.c.l.s4 1983009808
    %v2198 = vunpack.c.0.s8 %v2197
    %v2199 = vlaneseq
    %v2200 = vshrl.u32 %v2199, 7
    %v2201 = vsub.s32 %v2198, %v2200
    %v2202 = vrot.slane %v2187, %v2201
    %v2204 = vunpack.c.l.s4 1983009808
    %v2205 = vunpack.c.0.s8 %v2204
    %v2206 = vlaneseq
    %v2207 = vshrl.u32 %v2206, 7
    %v2208 = vsub.s32 %v2205, %v2207
    %v2209 = vrot.slane %v2152, %v2208
    %v2211 = vunpack.c.l.s4 1983009808
    %v2212 = vunpack.c.0.s8 %v2211
    %v2213 = vlaneseq
    %v2214 = vshrl.u32 %v2213, 7
    %v2215 = vsub.s32 %v2212, %v2214
    %v2216 = vrot.slane %v2188, %v2215
    %v2217 = vcombine.low %v2195, %v2209
    %v2218 = vcombine.high %v2195, %v2209
    %v2219 = vcombine.low %v2202, %v2216
    %v2220 = vcombine.high %v2202, %v2216
    %v2221 = vcombine.low %v2153, %v2154
    %v2222 = vcombine.high %v2153, %v2154
    %v2223 = vcombine.high %v2155, %v2155
    %v2225 = vunpack.c.l.s4 1983009808
    %v2226 = vunpack.c.0.s8 %v2225
    %v2227 = vlaneseq
    %v2228 = vshrl.u32 %v2227, 7
    %v2229 = vsub.s32 %v2226, %v2228
    %v2230 = vrot.slane %v2221, %v2229
    %v2232 = vunpack.c.l.s4 1983009808
    %v2233 = vunpack.c.0.s8 %v2232
    %v2234 = vlaneseq
    %v2235 = vshrl.u32 %v2234, 7
    %v2236 = vsub.s32 %v2233, %v2235
    %v2237 = vrot.slane %v2222, %v2236
    %v2239 = vunpack.c.l.s4 1983009808
    %v2240 = vunpack.c.0.s8 %v2239
    %v2241 = vlaneseq
    %v2242 = vshrl.u32 %v2241, 7
    %v2243 = vsub.s32 %v2240, %v2242
    %v2244 = vrot.slane %v2155, %v2243
    %v2246 = vunpack.c.l.s4 1983009808
    %v2247 = vunpack.c.0.s8 %v2246
    %v2248 = vlaneseq
    %v2249 = vshrl.u32 %v2248, 7
    %v2250 = vsub.s32 %v2247, %v2249
    %v2251 = vrot.slane %v2223, %v2250
    %v2252 = vcombine.low %v2230, %v2244
    %v2253 = vcombine.high %v2230, %v2244
    %v2254 = vcombine.low %v2237, %v2251
    %v2255 = vcombine.high %v2237, %v2251
    %v2256 = vcombine.low %v2156, %v2157
    %v2257 = vcombine.high %v2156, %v2157
    %v2258 = vcombine.high %v2158, %v2158
    %v2260 = vunpack.c.l.s4 1983009808
    %v2261 = vunpack.c.0.s8 %v2260
    %v2262 = vlaneseq
    %v2263 = vshrl.u32 %v2262, 7
    %v2264 = vsub.s32 %v2261, %v2263
    %v2265 = vrot.slane %v2256, %v2264
    %v2267 = vunpack.c.l.s4 1983009808
    %v2268 = vunpack.c.0.s8 %v2267
    %v2269 = vlaneseq
    %v2270 = vshrl.u32 %v2269, 7
    %v2271 = vsub.s32 %v2268, %v2270
    %v2272 = vrot.slane %v2257, %v2271
    %v2274 = vunpack.c.l.s4 1983009808
    %v2275 = vunpack.c.0.s8 %v2274
    %v2276 = vlaneseq
    %v2277 = vshrl.u32 %v2276, 7
    %v2278 = vsub.s32 %v2275, %v2277
    %v2279 = vrot.slane %v2158, %v2278
    %v2281 = vunpack.c.l.s4 1983009808
    %v2282 = vunpack.c.0.s8 %v2281
    %v2283 = vlaneseq
    %v2284 = vshrl.u32 %v2283, 7
    %v2285 = vsub.s32 %v2282, %v2284
    %v2286 = vrot.slane %v2258, %v2285
    %v2287 = vcombine.low %v2265, %v2279
    %v2288 = vcombine.high %v2265, %v2279
    %v2289 = vcombine.low %v2272, %v2286
    %v2290 = vcombine.high %v2272, %v2286
    %v2291 = vcombine.low %v2159, %v2160
    %v2292 = vcombine.high %v2159, %v2160
    %v2293 = vcombine.high %v2161, %v2161
    %v2295 = vunpack.c.l.s4 1983009808
    %v2296 = vunpack.c.0.s8 %v2295
    %v2297 = vlaneseq
    %v2298 = vshrl.u32 %v2297, 7
    %v2299 = vsub.s32 %v2296, %v2298
    %v2300 = vrot.slane %v2291, %v2299
    %v2302 = vunpack.c.l.s4 1983009808
    %v2303 = vunpack.c.0.s8 %v2302
    %v2304 = vlaneseq
    %v2305 = vshrl.u32 %v2304, 7
    %v2306 = vsub.s32 %v2303, %v2305
    %v2307 = vrot.slane %v2292, %v2306
    %v2309 = vunpack.c.l.s4 1983009808
    %v2310 = vunpack.c.0.s8 %v2309
    %v2311 = vlaneseq
    %v2312 = vshrl.u32 %v2311, 7
    %v2313 = vsub.s32 %v2310, %v2312
    %v2314 = vrot.slane %v2161, %v2313
    %v2316 = vunpack.c.l.s4 1983009808
    %v2317 = vunpack.c.0.s8 %v2316
    %v2318 = vlaneseq
    %v2319 = vshrl.u32 %v2318, 7
    %v2320 = vsub.s32 %v2317, %v2319
    %v2321 = vrot.slane %v2293, %v2320
    %v2322 = vcombine.low %v2300, %v2314
    %v2323 = vcombine.high %v2300, %v2314
    %v2324 = vcombine.low %v2307, %v2321
    %v2325 = vcombine.high %v2307, %v2321
    %v2326 = vcombine.low %v2162, %v2163
    %v2327 = vcombine.high %v2162, %v2163
    %v2328 = vcombine.high %v2164, %v2164
    %v2330 = vunpack.c.l.s4 1983009808
    %v2331 = vunpack.c.0.s8 %v2330
    %v2332 = vlaneseq
    %v2333 = vshrl.u32 %v2332, 7
    %v2334 = vsub.s32 %v2331, %v2333
    %v2335 = vrot.slane %v2326, %v2334
    %v2337 = vunpack.c.l.s4 1983009808
    %v2338 = vunpack.c.0.s8 %v2337
    %v2339 = vlaneseq
    %v2340 = vshrl.u32 %v2339, 7
    %v2341 = vsub.s32 %v2338, %v2340
    %v2342 = vrot.slane %v2327, %v2341
    %v2344 = vunpack.c.l.s4 1983009808
    %v2345 = vunpack.c.0.s8 %v2344
    %v2346 = vlaneseq
    %v2347 = vshrl.u32 %v2346, 7
    %v2348 = vsub.s32 %v2345, %v2347
    %v2349 = vrot.slane %v2164, %v2348
    %v2351 = vunpack.c.l.s4 1983009808
    %v2352 = vunpack.c.0.s8 %v2351
    %v2353 = vlaneseq
    %v2354 = vshrl.u32 %v2353, 7
    %v2355 = vsub.s32 %v2352, %v2354
    %v2356 = vrot.slane %v2328, %v2355
    %v2357 = vcombine.low %v2335, %v2349
    %v2358 = vcombine.high %v2335, %v2349
    %v2359 = vcombine.low %v2342, %v2356
    %v2360 = vcombine.high %v2342, %v2356
    %v2361 = vcombine.low %v2165, %v2166
    %v2362 = vcombine.high %v2165, %v2166
    %v2363 = vcombine.high %v2167, %v2167
    %v2365 = vunpack.c.l.s4 1983009808
    %v2366 = vunpack.c.0.s8 %v2365
    %v2367 = vlaneseq
    %v2368 = vshrl.u32 %v2367, 7
    %v2369 = vsub.s32 %v2366, %v2368
    %v2370 = vrot.slane %v2361, %v2369
    %v2372 = vunpack.c.l.s4 1983009808
    %v2373 = vunpack.c.0.s8 %v2372
    %v2374 = vlaneseq
    %v2375 = vshrl.u32 %v2374, 7
    %v2376 = vsub.s32 %v2373, %v2375
    %v2377 = vrot.slane %v2362, %v2376
    %v2379 = vunpack.c.l.s4 1983009808
    %v2380 = vunpack.c.0.s8 %v2379
    %v2381 = vlaneseq
    %v2382 = vshrl.u32 %v2381, 7
    %v2383 = vsub.s32 %v2380, %v2382
    %v2384 = vrot.slane %v2167, %v2383
    %v2386 = vunpack.c.l.s4 1983009808
    %v2387 = vunpack.c.0.s8 %v2386
    %v2388 = vlaneseq
    %v2389 = vshrl.u32 %v2388, 7
    %v2390 = vsub.s32 %v2387, %v2389
    %v2391 = vrot.slane %v2363, %v2390
    %v2392 = vcombine.low %v2370, %v2384
    %v2393 = vcombine.high %v2370, %v2384
    %v2394 = vcombine.low %v2377, %v2391
    %v2395 = vcombine.high %v2377, %v2391
    %v2420 = vrot.slane %v2217, 7
    %v2421 = vrot.slane %v2420, 2
    %v2422 = vrot.slane %v2218, 7
    %v2423 = vrot.slane %v2422, 2
    %v2424 = vrot.slane %v2219, 7
    %v2425 = vrot.slane %v2424, 2
    %v2426 = vrot.slane %v2220, 7
    %v2427 = vrot.slane %v2426, 2
    %v2428 = vrot.slane %v2252, 7
    %v2429 = vrot.slane %v2428, 2
    %v2430 = vrot.slane %v2253, 7
    %v2431 = vrot.slane %v2430, 2
    %v2432 = vrot.slane %v2254, 7
    %v2433 = vrot.slane %v2432, 2
    %v2434 = vrot.slane %v2255, 7
    %v2435 = vrot.slane %v2434, 2
    %v2436 = vrot.slane %v2287, 7
    %v2437 = vrot.slane %v2436, 2
    %v2438 = vrot.slane %v2288, 7
    %v2439 = vrot.slane %v2438, 2
    %v2440 = vrot.slane %v2289, 7
    %v2441 = vrot.slane %v2440, 2
    %v2442 = vrot.slane %v2290, 7
    %v2443 = vrot.slane %v2442, 2
    %v2444 = vrot.slane %v2322, 7
    %v2445 = vrot.slane %v2444, 2
    %v2446 = vrot.slane %v2323, 7
    %v2447 = vrot.slane %v2446, 2
    %v2448 = vrot.slane %v2324, 7
    %v2449 = vrot.slane %v2448, 2
    %v2450 = vrot.slane %v2325, 7
    %v2451 = vrot.slane %v2450, 2
    %v2452 = vrot.slane %v2357, 7
    %v2453 = vrot.slane %v2452, 2
    %v2454 = vrot.slane %v2358, 7
    %v2455 = vrot.slane %v2454, 2
    %v2456 = vrot.slane %v2359, 7
    %v2457 = vrot.slane %v2456, 2
    %v2458 = vrot.slane %v2360, 7
    %v2459 = vrot.slane %v2458, 2
    %v2460 = vrot.slane %v2392, 7
    %v2461 = vrot.slane %v2460, 2
    %v2462 = vrot.slane %v2393, 7
    %v2463 = vrot.slane %v2462, 2
    %v2464 = vrot.slane %v2394, 7
    %v2465 = vrot.slane %v2464, 2
    %v2466 = vrot.slane %v2395, 7
    %v2467 = vrot.slane %v2466, 2
    %v2492 = vmax.f32 %v2217, %v2421
    %v2493 = vmax.f32 %v2218, %v2423
    %v2494 = vmax.f32 %v2219, %v2425
    %v2495 = vmax.f32 %v2220, %v2427
    %v2496 = vmax.f32 %v2252, %v2429
    %v2497 = vmax.f32 %v2253, %v2431
    %v2498 = vmax.f32 %v2254, %v2433
    %v2499 = vmax.f32 %v2255, %v2435
    %v2500 = vmax.f32 %v2287, %v2437
    %v2501 = vmax.f32 %v2288, %v2439
    %v2502 = vmax.f32 %v2289, %v2441
    %v2503 = vmax.f32 %v2290, %v2443
    %v2504 = vmax.f32 %v2322, %v2445
    %v2505 = vmax.f32 %v2323, %v2447
    %v2506 = vmax.f32 %v2324, %v2449
    %v2507 = vmax.f32 %v2325, %v2451
    %v2508 = vmax.f32 %v2357, %v2453
    %v2509 = vmax.f32 %v2358, %v2455
    %v2510 = vmax.f32 %v2359, %v2457
    %v2511 = vmax.f32 %v2360, %v2459
    %v2512 = vmax.f32 %v2392, %v2461
    %v2513 = vmax.f32 %v2393, %v2463
    %v2514 = vmax.f32 %v2394, %v2465
    %v2515 = vmax.f32 %v2395, %v2467
    %v2516 = vld [vmem:[%s6] sm:$0xff]
    %v2517 = vld [vmem:[%s6 + $0x8] sm:$0xff]
    %v2518 = vld [vmem:[%s6 + $0x10] sm:$0xff]
    %v2519 = vld [vmem:[%s6 + $0x18] sm:$0xff]
    %v2520 = vld [vmem:[%s6 + $0x20] sm:$0xff]
    %v2521 = vld [vmem:[%s6 + $0x28] sm:$0xff]
    %v2522 = vld [vmem:[%s6 + $0x30] sm:$0xff]
    %v2523 = vld [vmem:[%s6 + $0x38] sm:$0xff]
    %v2524 = vld [vmem:[%s6 + $0x40] sm:$0xff]
    %v2525 = vld [vmem:[%s6 + $0x48] sm:$0xff]
    %v2526 = vld [vmem:[%s6 + $0x50] sm:$0xff]
    %v2527 = vld [vmem:[%s6 + $0x58] sm:$0xff]
    %v2528 = vld [vmem:[%s6 + $0x60] sm:$0xff]
    %v2529 = vld [vmem:[%s6 + $0x68] sm:$0xff]
    %v2530 = vld [vmem:[%s6 + $0x70] sm:$0xff]
    %v2531 = vld [vmem:[%s6 + $0x78] sm:$0xff]
    %v2532 = vld [vmem:[%s6 + $0x80] sm:$0xff]
    %v2533 = vld [vmem:[%s6 + $0x88] sm:$0xff]
    %v2534 = vld [vmem:[%s6 + $0x90] sm:$0xff]
    %v2535 = vld [vmem:[%s6 + $0x98] sm:$0xff]
    %v2536 = vld [vmem:[%s6 + $0xa0] sm:$0xff]
    %v2537 = vld [vmem:[%s6 + $0xa8] sm:$0xff]
    %v2538 = vld [vmem:[%s6 + $0xb0] sm:$0xff]
    %v2539 = vld [vmem:[%s6 + $0xb8] sm:$0xff]
    %v2540 = vld [vmem:[%s6 + $0xc0] sm:$0xff]
    %v2541 = vld [vmem:[%s6 + $0xc8] sm:$0xff]
    %v2542 = vld [vmem:[%s6 + $0xd0] sm:$0xff]
    %v2543 = vld [vmem:[%s6 + $0xd8] sm:$0xff]
    %v2544 = vld [vmem:[%s6 + $0xe0] sm:$0xff]
    %v2545 = vld [vmem:[%s6 + $0xe8] sm:$0xff]
    %v2546 = vld [vmem:[%s6 + $0xf0] sm:$0xff]
    %v2547 = vld [vmem:[%s6 + $0xf8] sm:$0xff]
    %v2548 = vld [vmem:[%s6 + $0x100] sm:$0xff]
    %v2549 = vld [vmem:[%s6 + $0x108] sm:$0xff]
    %v2550 = vld [vmem:[%s6 + $0x110] sm:$0xff]
    %v2551 = vld [vmem:[%s6 + $0x118] sm:$0xff]
    %v2552 = vld [vmem:[%s6 + $0x120] sm:$0xff]
    %v2553 = vld [vmem:[%s6 + $0x128] sm:$0xff]
    %v2554 = vld [vmem:[%s6 + $0x130] sm:$0xff]
    %v2555 = vld [vmem:[%s6 + $0x138] sm:$0xff]
    %v2556 = vld [vmem:[%s6 + $0x140] sm:$0xff]
    %v2557 = vld [vmem:[%s6 + $0x148] sm:$0xff]
    %v2558 = vld [vmem:[%s6 + $0x150] sm:$0xff]
    %v2559 = vld [vmem:[%s6 + $0x158] sm:$0xff]
    %v2560 = vld [vmem:[%s6 + $0x160] sm:$0xff]
    %v2561 = vld [vmem:[%s6 + $0x168] sm:$0xff]
    %v2562 = vld [vmem:[%s6 + $0x170] sm:$0xff]
    %v2563 = vld [vmem:[%s6 + $0x178] sm:$0xff]
    %v2564 = vld [vmem:[%s6 + $0x180] sm:$0xff]
    %v2565 = vld [vmem:[%s6 + $0x188] sm:$0xff]
    %v2566 = vld [vmem:[%s6 + $0x190] sm:$0xff]
    %v2567 = vld [vmem:[%s6 + $0x198] sm:$0xff]
    %v2568 = vld [vmem:[%s6 + $0x1a0] sm:$0xff]
    %v2569 = vld [vmem:[%s6 + $0x1a8] sm:$0xff]
    %v2570 = vld [vmem:[%s6 + $0x1b0] sm:$0xff]
    %v2571 = vld [vmem:[%s6 + $0x1b8] sm:$0xff]
    %v2572 = vld [vmem:[%s6 + $0x1c0] sm:$0xff]
    %v2573 = vld [vmem:[%s6 + $0x1c8] sm:$0xff]
    %v2574 = vld [vmem:[%s6 + $0x1d0] sm:$0xff]
    %v2575 = vld [vmem:[%s6 + $0x1d8] sm:$0xff]
    %v2576 = vld [vmem:[%s6 + $0x1e0] sm:$0xff]
    %v2577 = vld [vmem:[%s6 + $0x1e8] sm:$0xff]
    %v2578 = vld [vmem:[%s6 + $0x1f0] sm:$0xff]
    %v2579 = vld [vmem:[%s6 + $0x1f8] sm:$0xff]
    %v2580 = vld [vmem:[%s6 + $0x200] sm:$0xff]
    %v2581 = vld [vmem:[%s6 + $0x208] sm:$0xff]
    %v2582 = vld [vmem:[%s6 + $0x210] sm:$0xff]
    %v2583 = vld [vmem:[%s6 + $0x218] sm:$0xff]
    %v2584 = vld [vmem:[%s6 + $0x220] sm:$0xff]
    %v2585 = vld [vmem:[%s6 + $0x228] sm:$0xff]
    %v2586 = vld [vmem:[%s6 + $0x230] sm:$0xff]
    %v2587 = vld [vmem:[%s6 + $0x238] sm:$0xff]
    %v2588 = vld [vmem:[%s6 + $0x240] sm:$0xff]
    %v2589 = vld [vmem:[%s6 + $0x248] sm:$0xff]
    %v2590 = vld [vmem:[%s6 + $0x250] sm:$0xff]
    %v2591 = vld [vmem:[%s6 + $0x258] sm:$0xff]
    %v2592 = vld [vmem:[%s6 + $0x260] sm:$0xff]
    %v2593 = vld [vmem:[%s6 + $0x268] sm:$0xff]
    %v2594 = vld [vmem:[%s6 + $0x270] sm:$0xff]
    %v2595 = vld [vmem:[%s6 + $0x278] sm:$0xff]
    %v2596 = vld [vmem:[%s6 + $0x280] sm:$0xff]
    %v2597 = vld [vmem:[%s6 + $0x288] sm:$0xff]
    %v2598 = vld [vmem:[%s6 + $0x290] sm:$0xff]
    %v2599 = vld [vmem:[%s6 + $0x298] sm:$0xff]
    %v2600 = vld [vmem:[%s6 + $0x2a0] sm:$0xff]
    %v2601 = vld [vmem:[%s6 + $0x2a8] sm:$0xff]
    %v2602 = vld [vmem:[%s6 + $0x2b0] sm:$0xff]
    %v2603 = vld [vmem:[%s6 + $0x2b8] sm:$0xff]
    %v2604 = vld [vmem:[%s6 + $0x2c0] sm:$0xff]
    %v2605 = vld [vmem:[%s6 + $0x2c8] sm:$0xff]
    %v2606 = vld [vmem:[%s6 + $0x2d0] sm:$0xff]
    %v2607 = vld [vmem:[%s6 + $0x2d8] sm:$0xff]
    %v2608 = vld [vmem:[%s6 + $0x2e0] sm:$0xff]
    %v2609 = vld [vmem:[%s6 + $0x2e8] sm:$0xff]
    %v2610 = vld [vmem:[%s6 + $0x2f0] sm:$0xff]
    %v2611 = vld [vmem:[%s6 + $0x2f8] sm:$0xff]
    %v2636 = vlaneseq
    %v2637 = vshrl.u32 %v2636, 7
    %v2638 = vsub.s32 0, %v2637
    %v2639 = vrot.slane %v2492, %v2638
    %v2640 = vlaneseq
    %v2641 = vshrl.u32 %v2640, 7
    %v2642 = vsub.s32 2, %v2641
    %v2643 = vrot.slane %v2492, %v2642
    %v2644 = vlaneseq
    %v2645 = vshrl.u32 %v2644, 7
    %v2646 = vsub.s32 4, %v2645
    %v2647 = vrot.slane %v2492, %v2646
    %v2648 = vlaneseq
    %v2649 = vshrl.u32 %v2648, 7
    %v2650 = vsub.s32 0, %v2649
    %v2651 = vrot.slane %v2493, %v2650
    %v2652 = vlaneseq
    %v2653 = vshrl.u32 %v2652, 7
    %v2654 = vsub.s32 2, %v2653
    %v2655 = vrot.slane %v2493, %v2654
    %v2656 = vlaneseq
    %v2657 = vshrl.u32 %v2656, 7
    %v2658 = vsub.s32 4, %v2657
    %v2659 = vrot.slane %v2493, %v2658
    %v2660 = vlaneseq
    %v2661 = vshrl.u32 %v2660, 7
    %v2662 = vsub.s32 0, %v2661
    %v2663 = vrot.slane %v2494, %v2662
    %v2664 = vlaneseq
    %v2665 = vshrl.u32 %v2664, 7
    %v2666 = vsub.s32 2, %v2665
    %v2667 = vrot.slane %v2494, %v2666
    %v2668 = vlaneseq
    %v2669 = vshrl.u32 %v2668, 7
    %v2670 = vsub.s32 4, %v2669
    %v2671 = vrot.slane %v2494, %v2670
    %v2672 = vlaneseq
    %v2673 = vshrl.u32 %v2672, 7
    %v2674 = vsub.s32 0, %v2673
    %v2675 = vrot.slane %v2495, %v2674
    %v2676 = vlaneseq
    %v2677 = vshrl.u32 %v2676, 7
    %v2678 = vsub.s32 2, %v2677
    %v2679 = vrot.slane %v2495, %v2678
    %v2680 = vlaneseq
    %v2681 = vshrl.u32 %v2680, 7
    %v2682 = vsub.s32 4, %v2681
    %v2683 = vrot.slane %v2495, %v2682
    %v2684 = vlaneseq
    %v2685 = vshrl.u32 %v2684, 7
    %v2686 = vsub.s32 0, %v2685
    %v2687 = vrot.slane %v2496, %v2686
    %v2688 = vlaneseq
    %v2689 = vshrl.u32 %v2688, 7
    %v2690 = vsub.s32 2, %v2689
    %v2691 = vrot.slane %v2496, %v2690
    %v2692 = vlaneseq
    %v2693 = vshrl.u32 %v2692, 7
    %v2694 = vsub.s32 4, %v2693
    %v2695 = vrot.slane %v2496, %v2694
    %v2696 = vlaneseq
    %v2697 = vshrl.u32 %v2696, 7
    %v2698 = vsub.s32 0, %v2697
    %v2699 = vrot.slane %v2497, %v2698
    %v2700 = vlaneseq
    %v2701 = vshrl.u32 %v2700, 7
    %v2702 = vsub.s32 2, %v2701
    %v2703 = vrot.slane %v2497, %v2702
    %v2704 = vlaneseq
    %v2705 = vshrl.u32 %v2704, 7
    %v2706 = vsub.s32 4, %v2705
    %v2707 = vrot.slane %v2497, %v2706
    %v2708 = vlaneseq
    %v2709 = vshrl.u32 %v2708, 7
    %v2710 = vsub.s32 0, %v2709
    %v2711 = vrot.slane %v2498, %v2710
    %v2712 = vlaneseq
    %v2713 = vshrl.u32 %v2712, 7
    %v2714 = vsub.s32 2, %v2713
    %v2715 = vrot.slane %v2498, %v2714
    %v2716 = vlaneseq
    %v2717 = vshrl.u32 %v2716, 7
    %v2718 = vsub.s32 4, %v2717
    %v2719 = vrot.slane %v2498, %v2718
    %v2720 = vlaneseq
    %v2721 = vshrl.u32 %v2720, 7
    %v2722 = vsub.s32 0, %v2721
    %v2723 = vrot.slane %v2499, %v2722
    %v2724 = vlaneseq
    %v2725 = vshrl.u32 %v2724, 7
    %v2726 = vsub.s32 2, %v2725
    %v2727 = vrot.slane %v2499, %v2726
    %v2728 = vlaneseq
    %v2729 = vshrl.u32 %v2728, 7
    %v2730 = vsub.s32 4, %v2729
    %v2731 = vrot.slane %v2499, %v2730
    %v2732 = vlaneseq
    %v2733 = vshrl.u32 %v2732, 7
    %v2734 = vsub.s32 0, %v2733
    %v2735 = vrot.slane %v2500, %v2734
    %v2736 = vlaneseq
    %v2737 = vshrl.u32 %v2736, 7
    %v2738 = vsub.s32 2, %v2737
    %v2739 = vrot.slane %v2500, %v2738
    %v2740 = vlaneseq
    %v2741 = vshrl.u32 %v2740, 7
    %v2742 = vsub.s32 4, %v2741
    %v2743 = vrot.slane %v2500, %v2742
    %v2744 = vlaneseq
    %v2745 = vshrl.u32 %v2744, 7
    %v2746 = vsub.s32 0, %v2745
    %v2747 = vrot.slane %v2501, %v2746
    %v2748 = vlaneseq
    %v2749 = vshrl.u32 %v2748, 7
    %v2750 = vsub.s32 2, %v2749
    %v2751 = vrot.slane %v2501, %v2750
    %v2752 = vlaneseq
    %v2753 = vshrl.u32 %v2752, 7
    %v2754 = vsub.s32 4, %v2753
    %v2755 = vrot.slane %v2501, %v2754
    %v2756 = vlaneseq
    %v2757 = vshrl.u32 %v2756, 7
    %v2758 = vsub.s32 0, %v2757
    %v2759 = vrot.slane %v2502, %v2758
    %v2760 = vlaneseq
    %v2761 = vshrl.u32 %v2760, 7
    %v2762 = vsub.s32 2, %v2761
    %v2763 = vrot.slane %v2502, %v2762
    %v2764 = vlaneseq
    %v2765 = vshrl.u32 %v2764, 7
    %v2766 = vsub.s32 4, %v2765
    %v2767 = vrot.slane %v2502, %v2766
    %v2768 = vlaneseq
    %v2769 = vshrl.u32 %v2768, 7
    %v2770 = vsub.s32 0, %v2769
    %v2771 = vrot.slane %v2503, %v2770
    %v2772 = vlaneseq
    %v2773 = vshrl.u32 %v2772, 7
    %v2774 = vsub.s32 2, %v2773
    %v2775 = vrot.slane %v2503, %v2774
    %v2776 = vlaneseq
    %v2777 = vshrl.u32 %v2776, 7
    %v2778 = vsub.s32 4, %v2777
    %v2779 = vrot.slane %v2503, %v2778
    %v2780 = vlaneseq
    %v2781 = vshrl.u32 %v2780, 7
    %v2782 = vsub.s32 0, %v2781
    %v2783 = vrot.slane %v2504, %v2782
    %v2784 = vlaneseq
    %v2785 = vshrl.u32 %v2784, 7
    %v2786 = vsub.s32 2, %v2785
    %v2787 = vrot.slane %v2504, %v2786
    %v2788 = vlaneseq
    %v2789 = vshrl.u32 %v2788, 7
    %v2790 = vsub.s32 4, %v2789
    %v2791 = vrot.slane %v2504, %v2790
    %v2792 = vlaneseq
    %v2793 = vshrl.u32 %v2792, 7
    %v2794 = vsub.s32 0, %v2793
    %v2795 = vrot.slane %v2505, %v2794
    %v2796 = vlaneseq
    %v2797 = vshrl.u32 %v2796, 7
    %v2798 = vsub.s32 2, %v2797
    %v2799 = vrot.slane %v2505, %v2798
    %v2800 = vlaneseq
    %v2801 = vshrl.u32 %v2800, 7
    %v2802 = vsub.s32 4, %v2801
    %v2803 = vrot.slane %v2505, %v2802
    %v2804 = vlaneseq
    %v2805 = vshrl.u32 %v2804, 7
    %v2806 = vsub.s32 0, %v2805
    %v2807 = vrot.slane %v2506, %v2806
    %v2808 = vlaneseq
    %v2809 = vshrl.u32 %v2808, 7
    %v2810 = vsub.s32 2, %v2809
    %v2811 = vrot.slane %v2506, %v2810
    %v2812 = vlaneseq
    %v2813 = vshrl.u32 %v2812, 7
    %v2814 = vsub.s32 4, %v2813
    %v2815 = vrot.slane %v2506, %v2814
    %v2816 = vlaneseq
    %v2817 = vshrl.u32 %v2816, 7
    %v2818 = vsub.s32 0, %v2817
    %v2819 = vrot.slane %v2507, %v2818
    %v2820 = vlaneseq
    %v2821 = vshrl.u32 %v2820, 7
    %v2822 = vsub.s32 2, %v2821
    %v2823 = vrot.slane %v2507, %v2822
    %v2824 = vlaneseq
    %v2825 = vshrl.u32 %v2824, 7
    %v2826 = vsub.s32 4, %v2825
    %v2827 = vrot.slane %v2507, %v2826
    %v2828 = vlaneseq
    %v2829 = vshrl.u32 %v2828, 7
    %v2830 = vsub.s32 0, %v2829
    %v2831 = vrot.slane %v2508, %v2830
    %v2832 = vlaneseq
    %v2833 = vshrl.u32 %v2832, 7
    %v2834 = vsub.s32 2, %v2833
    %v2835 = vrot.slane %v2508, %v2834
    %v2836 = vlaneseq
    %v2837 = vshrl.u32 %v2836, 7
    %v2838 = vsub.s32 4, %v2837
    %v2839 = vrot.slane %v2508, %v2838
    %v2840 = vlaneseq
    %v2841 = vshrl.u32 %v2840, 7
    %v2842 = vsub.s32 0, %v2841
    %v2843 = vrot.slane %v2509, %v2842
    %v2844 = vlaneseq
    %v2845 = vshrl.u32 %v2844, 7
    %v2846 = vsub.s32 2, %v2845
    %v2847 = vrot.slane %v2509, %v2846
    %v2848 = vlaneseq
    %v2849 = vshrl.u32 %v2848, 7
    %v2850 = vsub.s32 4, %v2849
    %v2851 = vrot.slane %v2509, %v2850
    %v2852 = vlaneseq
    %v2853 = vshrl.u32 %v2852, 7
    %v2854 = vsub.s32 0, %v2853
    %v2855 = vrot.slane %v2510, %v2854
    %v2856 = vlaneseq
    %v2857 = vshrl.u32 %v2856, 7
    %v2858 = vsub.s32 2, %v2857
    %v2859 = vrot.slane %v2510, %v2858
    %v2860 = vlaneseq
    %v2861 = vshrl.u32 %v2860, 7
    %v2862 = vsub.s32 4, %v2861
    %v2863 = vrot.slane %v2510, %v2862
    %v2864 = vlaneseq
    %v2865 = vshrl.u32 %v2864, 7
    %v2866 = vsub.s32 0, %v2865
    %v2867 = vrot.slane %v2511, %v2866
    %v2868 = vlaneseq
    %v2869 = vshrl.u32 %v2868, 7
    %v2870 = vsub.s32 2, %v2869
    %v2871 = vrot.slane %v2511, %v2870
    %v2872 = vlaneseq
    %v2873 = vshrl.u32 %v2872, 7
    %v2874 = vsub.s32 4, %v2873
    %v2875 = vrot.slane %v2511, %v2874
    %v2876 = vlaneseq
    %v2877 = vshrl.u32 %v2876, 7
    %v2878 = vsub.s32 0, %v2877
    %v2879 = vrot.slane %v2512, %v2878
    %v2880 = vlaneseq
    %v2881 = vshrl.u32 %v2880, 7
    %v2882 = vsub.s32 2, %v2881
    %v2883 = vrot.slane %v2512, %v2882
    %v2884 = vlaneseq
    %v2885 = vshrl.u32 %v2884, 7
    %v2886 = vsub.s32 4, %v2885
    %v2887 = vrot.slane %v2512, %v2886
    %v2888 = vlaneseq
    %v2889 = vshrl.u32 %v2888, 7
    %v2890 = vsub.s32 0, %v2889
    %v2891 = vrot.slane %v2513, %v2890
    %v2892 = vlaneseq
    %v2893 = vshrl.u32 %v2892, 7
    %v2894 = vsub.s32 2, %v2893
    %v2895 = vrot.slane %v2513, %v2894
    %v2896 = vlaneseq
    %v2897 = vshrl.u32 %v2896, 7
    %v2898 = vsub.s32 4, %v2897
    %v2899 = vrot.slane %v2513, %v2898
    %v2900 = vlaneseq
    %v2901 = vshrl.u32 %v2900, 7
    %v2902 = vsub.s32 0, %v2901
    %v2903 = vrot.slane %v2514, %v2902
    %v2904 = vlaneseq
    %v2905 = vshrl.u32 %v2904, 7
    %v2906 = vsub.s32 2, %v2905
    %v2907 = vrot.slane %v2514, %v2906
    %v2908 = vlaneseq
    %v2909 = vshrl.u32 %v2908, 7
    %v2910 = vsub.s32 4, %v2909
    %v2911 = vrot.slane %v2514, %v2910
    %v2912 = vlaneseq
    %v2913 = vshrl.u32 %v2912, 7
    %v2914 = vsub.s32 0, %v2913
    %v2915 = vrot.slane %v2515, %v2914
    %v2916 = vlaneseq
    %v2917 = vshrl.u32 %v2916, 7
    %v2918 = vsub.s32 2, %v2917
    %v2919 = vrot.slane %v2515, %v2918
    %v2920 = vlaneseq
    %v2921 = vshrl.u32 %v2920, 7
    %v2922 = vsub.s32 4, %v2921
    %v2923 = vrot.slane %v2515, %v2922
    %vm2924 = vcmask 1041409
    %v2925 = vsel %vm2924, %v2651, %v2639
    %vm2926 = vcmask 1042434
    %v2927 = vsel %vm2926, %v2663, %v2925
    %vm2928 = vcmask 1043459
    %v2929 = vsel %vm2928, %v2675, %v2927
    %vm2930 = vcmask 1044484
    %v2931 = vsel %vm2930, %v2687, %v2929
    %vm2932 = vcmask 1045509
    %v2933 = vsel %vm2932, %v2699, %v2931
    %vm2934 = vcmask 1046534
    %v2935 = vsel %vm2934, %v2711, %v2933
    %vm2936 = vcmask 1047559
    %v2937 = vsel %vm2936, %v2723, %v2935
    %v2938 = vsel %vm2924, %v2655, %v2643
    %v2939 = vsel %vm2926, %v2667, %v2938
    %v2940 = vsel %vm2928, %v2679, %v2939
    %v2941 = vsel %vm2930, %v2691, %v2940
    %v2942 = vsel %vm2932, %v2703, %v2941
    %v2943 = vsel %vm2934, %v2715, %v2942
    %v2944 = vsel %vm2936, %v2727, %v2943
    %v2945 = vsel %vm2924, %v2659, %v2647
    %v2946 = vsel %vm2926, %v2671, %v2945
    %v2947 = vsel %vm2928, %v2683, %v2946
    %v2948 = vsel %vm2930, %v2695, %v2947
    %v2949 = vsel %vm2932, %v2707, %v2948
    %v2950 = vsel %vm2934, %v2719, %v2949
    %v2951 = vsel %vm2936, %v2731, %v2950
    %v2952 = vsel %vm2924, %v2747, %v2735
    %v2953 = vsel %vm2926, %v2759, %v2952
    %v2954 = vsel %vm2928, %v2771, %v2953
    %v2955 = vsel %vm2930, %v2783, %v2954
    %v2956 = vsel %vm2932, %v2795, %v2955
    %v2957 = vsel %vm2934, %v2807, %v2956
    %v2958 = vsel %vm2936, %v2819, %v2957
    %v2959 = vsel %vm2924, %v2751, %v2739
    %v2960 = vsel %vm2926, %v2763, %v2959
    %v2961 = vsel %vm2928, %v2775, %v2960
    %v2962 = vsel %vm2930, %v2787, %v2961
    %v2963 = vsel %vm2932, %v2799, %v2962
    %v2964 = vsel %vm2934, %v2811, %v2963
    %v2965 = vsel %vm2936, %v2823, %v2964
    %v2966 = vsel %vm2924, %v2755, %v2743
    %v2967 = vsel %vm2926, %v2767, %v2966
    %v2968 = vsel %vm2928, %v2779, %v2967
    %v2969 = vsel %vm2930, %v2791, %v2968
    %v2970 = vsel %vm2932, %v2803, %v2969
    %v2971 = vsel %vm2934, %v2815, %v2970
    %v2972 = vsel %vm2936, %v2827, %v2971
    %v2973 = vsel %vm2924, %v2843, %v2831
    %v2974 = vsel %vm2926, %v2855, %v2973
    %v2975 = vsel %vm2928, %v2867, %v2974
    %v2976 = vsel %vm2930, %v2879, %v2975
    %v2977 = vsel %vm2932, %v2891, %v2976
    %v2978 = vsel %vm2934, %v2903, %v2977
    %v2979 = vsel %vm2936, %v2915, %v2978
    %v2980 = vsel %vm2924, %v2847, %v2835
    %v2981 = vsel %vm2926, %v2859, %v2980
    %v2982 = vsel %vm2928, %v2871, %v2981
    %v2983 = vsel %vm2930, %v2883, %v2982
    %v2984 = vsel %vm2932, %v2895, %v2983
    %v2985 = vsel %vm2934, %v2907, %v2984
    %v2986 = vsel %vm2936, %v2919, %v2985
    %v2987 = vsel %vm2924, %v2851, %v2839
    %v2988 = vsel %vm2926, %v2863, %v2987
    %v2989 = vsel %vm2928, %v2875, %v2988
    %v2990 = vsel %vm2930, %v2887, %v2989
    %v2991 = vsel %vm2932, %v2899, %v2990
    %v2992 = vsel %vm2934, %v2911, %v2991
    %v2993 = vsel %vm2936, %v2923, %v2992
    %3003 = vmatprep.subr.mxu0 %v2547
    %3004 = vmatpush1.msra.mxu0 %v2546
    %3005 = vmatprep.subr.mxu0 %v2545
    %3006 = vmatpush1.msra.mxu0 %v2544
    %3007 = vmatprep.subr.mxu0 %v2543
    %3008 = vmatpush1.msra.mxu0 %v2542
    %3009 = vmatprep.subr.mxu0 %v2541
    %3010 = vmatpush1.msra.mxu0 %v2540
    %3011 = vmatprep.subr.mxu0 %v2539
    %3012 = vmatpush1.msra.mxu0 %v2538
    %3013 = vmatprep.subr.mxu0 %v2537
    %3014 = vmatpush1.msra.mxu0 %v2536
    %3015 = vmatprep.subr.mxu0 %v2535
    %3016 = vmatpush1.msra.mxu0 %v2534
    %3017 = vmatprep.subr.mxu0 %v2533
    %3018 = vmatpush1.msra.mxu0 %v2532
    %3019 = vmatprep.subr.mxu0 %v2531
    %3020 = vmatpush1.msra.mxu0 %v2530
    %3021 = vmatprep.subr.mxu0 %v2529
    %3022 = vmatpush1.msra.mxu0 %v2528
    %3023 = vmatprep.subr.mxu0 %v2527
    %3024 = vmatpush1.msra.mxu0 %v2526
    %3025 = vmatprep.subr.mxu0 %v2525
    %3026 = vmatpush1.msra.mxu0 %v2524
    %3027 = vmatprep.subr.mxu0 %v2523
    %3028 = vmatpush1.msra.mxu0 %v2522
    %3029 = vmatprep.subr.mxu0 %v2521
    %3030 = vmatpush1.msra.mxu0 %v2520
    %3031 = vmatprep.subr.mxu0 %v2519
    %3032 = vmatpush1.msra.mxu0 %v2518
    %3033 = vmatprep.subr.mxu0 %v2517
    %3034 = vmatpush1.msra.mxu0 %v2516
    %3035 = vmatprep.subr.mxu0 %v2579
    %3036 = vmatpush2.msra.mxu0 %v2578
    %3037 = vmatprep.subr.mxu0 %v2577
    %3038 = vmatpush2.msra.mxu0 %v2576
    %3039 = vmatprep.subr.mxu0 %v2575
    %3040 = vmatpush2.msra.mxu0 %v2574
    %3041 = vmatprep.subr.mxu0 %v2573
    %3042 = vmatpush2.msra.mxu0 %v2572
    %3043 = vmatprep.subr.mxu0 %v2571
    %3044 = vmatpush2.msra.mxu0 %v2570
    %3045 = vmatprep.subr.mxu0 %v2569
    %3046 = vmatpush2.msra.mxu0 %v2568
    %3047 = vmatprep.subr.mxu0 %v2567
    %3048 = vmatpush2.msra.mxu0 %v2566
    %3049 = vmatprep.subr.mxu0 %v2565
    %3050 = vmatpush2.msra.mxu0 %v2564
    %3051 = vmatprep.subr.mxu0 %v2563
    %3052 = vmatpush2.msra.mxu0 %v2562
    %3053 = vmatprep.subr.mxu0 %v2561
    %3054 = vmatpush2.msra.mxu0 %v2560
    %3055 = vmatprep.subr.mxu0 %v2559
    %3056 = vmatpush2.msra.mxu0 %v2558
    %3057 = vmatprep.subr.mxu0 %v2557
    %3058 = vmatpush2.msra.mxu0 %v2556
    %3059 = vmatprep.subr.mxu0 %v2555
    %3060 = vmatpush2.msra.mxu0 %v2554
    %3061 = vmatprep.subr.mxu0 %v2553
    %3062 = vmatpush2.msra.mxu0 %v2552
    %3063 = vmatprep.subr.mxu0 %v2551
    %3064 = vmatpush2.msra.mxu0 %v2550
    %3065 = vmatprep.subr.mxu0 %v2549
    %3066 = vmatpush2.msra.mxu0 %v2548
    %3067 = vmatprep.mubr.f32.mxu0 %v2944
    %3068 = vmatmul.mubr.f32.gmra.mxu0 %v2937
    %v3069 = vpop.f32.mrf.mxu0
    %v3070 = vadd.f32 0.0, %v3069
    %v3071 = vpop.f32.mrf.mxu0
    %v3072 = vadd.f32 0.0, %v3071
    %3073 = vmatprep.mubr.f32.mxu0 %v2965
    %3074 = vmatmul.mubr.f32.gmra.mxu0 %v2958
    %v3075 = vpop.f32.mrf.mxu0
    %v3076 = vadd.f32 0.0, %v3075
    %v3077 = vpop.f32.mrf.mxu0
    %v3078 = vadd.f32 0.0, %v3077
    %3079 = vmatprep.mubr.f32.mxu0 %v2986
    %3080 = vmatmul.mubr.f32.gmra.mxu0 %v2979
    %v3081 = vpop.f32.mrf.mxu0
    %v3082 = vadd.f32 0.0, %v3081
    %v3083 = vpop.f32.mrf.mxu0
    %v3084 = vadd.f32 0.0, %v3083
    %3085 = vdwg.mxu0
    %3086 = vmatprep.subr.mxu0 %v2611
    %3087 = vmatpush1.msra.mxu0 %v2610
    %3088 = vmatprep.subr.mxu0 %v2609
    %3089 = vmatpush1.msra.mxu0 %v2608
    %3090 = vmatprep.subr.mxu0 %v2607
    %3091 = vmatpush1.msra.mxu0 %v2606
    %3092 = vmatprep.subr.mxu0 %v2605
    %3093 = vmatpush1.msra.mxu0 %v2604
    %3094 = vmatprep.subr.mxu0 %v2603
    %3095 = vmatpush1.msra.mxu0 %v2602
    %3096 = vmatprep.subr.mxu0 %v2601
    %3097 = vmatpush1.msra.mxu0 %v2600
    %3098 = vmatprep.subr.mxu0 %v2599
    %3099 = vmatpush1.msra.mxu0 %v2598
    %3100 = vmatprep.subr.mxu0 %v2597
    %3101 = vmatpush1.msra.mxu0 %v2596
    %3102 = vmatprep.subr.mxu0 %v2595
    %3103 = vmatpush1.msra.mxu0 %v2594
    %3104 = vmatprep.subr.mxu0 %v2593
    %3105 = vmatpush1.msra.mxu0 %v2592
    %3106 = vmatprep.subr.mxu0 %v2591
    %3107 = vmatpush1.msra.mxu0 %v2590
    %3108 = vmatprep.subr.mxu0 %v2589
    %3109 = vmatpush1.msra.mxu0 %v2588
    %3110 = vmatprep.subr.mxu0 %v2587
    %3111 = vmatpush1.msra.mxu0 %v2586
    %3112 = vmatprep.subr.mxu0 %v2585
    %3113 = vmatpush1.msra.mxu0 %v2584
    %3114 = vmatprep.subr.mxu0 %v2583
    %3115 = vmatpush1.msra.mxu0 %v2582
    %3116 = vmatprep.subr.mxu0 %v2581
    %3117 = vmatpush1.msra.mxu0 %v2580
    %3118 = vmatprep.subr.mxu0 0.0
    %3119 = vmatpush2.msra.mxu0 0.0
    %3120 = vmatprep.subr.mxu0 0.0
    %3121 = vmatpush2.msra.mxu0 0.0
    %3122 = vmatprep.subr.mxu0 0.0
    %3123 = vmatpush2.msra.mxu0 0.0
    %3124 = vmatprep.subr.mxu0 0.0
    %3125 = vmatpush2.msra.mxu0 0.0
    %3126 = vmatprep.subr.mxu0 0.0
    %3127 = vmatpush2.msra.mxu0 0.0
    %3128 = vmatprep.subr.mxu0 0.0
    %3129 = vmatpush2.msra.mxu0 0.0
    %3130 = vmatprep.subr.mxu0 0.0
    %3131 = vmatpush2.msra.mxu0 0.0
    %3132 = vmatprep.subr.mxu0 0.0
    %3133 = vmatpush2.msra.mxu0 0.0
    %3134 = vmatprep.subr.mxu0 0.0
    %3135 = vmatpush2.msra.mxu0 0.0
    %3136 = vmatprep.subr.mxu0 0.0
    %3137 = vmatpush2.msra.mxu0 0.0
    %3138 = vmatprep.subr.mxu0 0.0
    %3139 = vmatpush2.msra.mxu0 0.0
    %3140 = vmatprep.subr.mxu0 0.0
    %3141 = vmatpush2.msra.mxu0 0.0
    %3142 = vmatprep.subr.mxu0 0.0
    %3143 = vmatpush2.msra.mxu0 0.0
    %3144 = vmatprep.subr.mxu0 0.0
    %3145 = vmatpush2.msra.mxu0 0.0
    %3146 = vmatprep.subr.mxu0 0.0
    %3147 = vmatpush2.msra.mxu0 0.0
    %3148 = vmatprep.subr.mxu0 0.0
    %3149 = vmatpush2.msra.mxu0 0.0
    %3150 = vmatprep.mubr.f32.mxu0 0.0
    %3151 = vmatmul.mubr.f32.gmra.mxu0 %v2951
    %v3152 = vpop.f32.mrf.mxu0
    %v3153 = vadd.f32 %v3070, %v3152
    %v3154 = vpop.f32.mrf.mxu0
    %v3155 = vadd.f32 %v3072, %v3154
    %3156 = vmatprep.mubr.f32.mxu0 0.0
    %3157 = vmatmul.mubr.f32.gmra.mxu0 %v2972
    %v3158 = vpop.f32.mrf.mxu0
    %v3159 = vadd.f32 %v3076, %v3158
    %v3160 = vpop.f32.mrf.mxu0
    %v3161 = vadd.f32 %v3078, %v3160
    %3162 = vmatprep.mubr.f32.mxu0 0.0
    %3163 = vmatmul.mubr.f32.gmra.mxu0 %v2993
    %v3164 = vpop.f32.mrf.mxu0
    %v3165 = vadd.f32 %v3082, %v3164
    %v3166 = vpop.f32.mrf.mxu0
    %v3167 = vadd.f32 %v3084, %v3166
    %3168 = vdwg.mxu0
    %v3169 = vld [vmem:[%s7] sm:$0xff]
    %v3170 = vld [vmem:[%s7 + $0x8] sm:$0xff]
    %v3171 = vld [vmem:[%s7 + $0x10] sm:$0xff]
    %v3172 = vld [vmem:[%s7 + $0x18] sm:$0xff]
    %v3173 = vld [vmem:[%s7 + $0x20] sm:$0xff]
    %v3174 = vld [vmem:[%s7 + $0x28] sm:$0xff]
    %v3175 = vld [vmem:[%s7 + $0x30] sm:$0xff]
    %v3176 = vld [vmem:[%s7 + $0x38] sm:$0xff]
    %v3177 = vld [vmem:[%s7 + $0x40] sm:$0xff]
    %v3178 = vld [vmem:[%s7 + $0x48] sm:$0xff]
    %v3179 = vld [vmem:[%s7 + $0x50] sm:$0xff]
    %v3180 = vld [vmem:[%s7 + $0x58] sm:$0xff]
    %v3181 = vld [vmem:[%s7 + $0x60] sm:$0xff]
    %v3182 = vld [vmem:[%s7 + $0x68] sm:$0xff]
    %v3183 = vld [vmem:[%s7 + $0x70] sm:$0xff]
    %v3184 = vld [vmem:[%s7 + $0x78] sm:$0xff]
    %v3185 = vld [vmem:[%s7 + $0x80] sm:$0xff]
    %v3186 = vld [vmem:[%s7 + $0x88] sm:$0xff]
    %v3187 = vld [vmem:[%s7 + $0x90] sm:$0xff]
    %v3188 = vld [vmem:[%s7 + $0x98] sm:$0xff]
    %v3189 = vld [vmem:[%s7 + $0xa0] sm:$0xff]
    %v3190 = vld [vmem:[%s7 + $0xa8] sm:$0xff]
    %v3191 = vld [vmem:[%s7 + $0xb0] sm:$0xff]
    %v3192 = vld [vmem:[%s7 + $0xb8] sm:$0xff]
    %v3193 = vld [vmem:[%s7 + $0xc0] sm:$0xff]
    %v3194 = vld [vmem:[%s7 + $0xc8] sm:$0xff]
    %v3195 = vld [vmem:[%s7 + $0xd0] sm:$0xff]
    %v3196 = vld [vmem:[%s7 + $0xd8] sm:$0xff]
    %v3197 = vld [vmem:[%s7 + $0xe0] sm:$0xff]
    %v3198 = vld [vmem:[%s7 + $0xe8] sm:$0xff]
    %v3199 = vld [vmem:[%s7 + $0xf0] sm:$0xff]
    %v3200 = vld [vmem:[%s7 + $0xf8] sm:$0xff]
    %v3201 = vld [vmem:[%s7 + $0x100] sm:$0xff]
    %v3202 = vld [vmem:[%s7 + $0x108] sm:$0xff]
    %v3203 = vld [vmem:[%s7 + $0x110] sm:$0xff]
    %v3204 = vld [vmem:[%s7 + $0x118] sm:$0xff]
    %v3205 = vld [vmem:[%s7 + $0x120] sm:$0xff]
    %v3206 = vld [vmem:[%s7 + $0x128] sm:$0xff]
    %v3207 = vld [vmem:[%s7 + $0x130] sm:$0xff]
    %v3208 = vld [vmem:[%s7 + $0x138] sm:$0xff]
    %v3209 = vld [vmem:[%s7 + $0x140] sm:$0xff]
    %v3210 = vld [vmem:[%s7 + $0x148] sm:$0xff]
    %v3211 = vld [vmem:[%s7 + $0x150] sm:$0xff]
    %v3212 = vld [vmem:[%s7 + $0x158] sm:$0xff]
    %v3213 = vld [vmem:[%s7 + $0x160] sm:$0xff]
    %v3214 = vld [vmem:[%s7 + $0x168] sm:$0xff]
    %v3215 = vld [vmem:[%s7 + $0x170] sm:$0xff]
    %v3216 = vld [vmem:[%s7 + $0x178] sm:$0xff]
    %v3217 = vld [vmem:[%s7 + $0x180] sm:$0xff]
    %v3218 = vld [vmem:[%s7 + $0x188] sm:$0xff]
    %v3219 = vld [vmem:[%s7 + $0x190] sm:$0xff]
    %v3220 = vld [vmem:[%s7 + $0x198] sm:$0xff]
    %v3221 = vld [vmem:[%s7 + $0x1a0] sm:$0xff]
    %v3222 = vld [vmem:[%s7 + $0x1a8] sm:$0xff]
    %v3223 = vld [vmem:[%s7 + $0x1b0] sm:$0xff]
    %v3224 = vld [vmem:[%s7 + $0x1b8] sm:$0xff]
    %v3225 = vld [vmem:[%s7 + $0x1c0] sm:$0xff]
    %v3226 = vld [vmem:[%s7 + $0x1c8] sm:$0xff]
    %v3227 = vld [vmem:[%s7 + $0x1d0] sm:$0xff]
    %v3228 = vld [vmem:[%s7 + $0x1d8] sm:$0xff]
    %v3229 = vld [vmem:[%s7 + $0x1e0] sm:$0xff]
    %v3230 = vld [vmem:[%s7 + $0x1e8] sm:$0xff]
    %v3231 = vld [vmem:[%s7 + $0x1f0] sm:$0xff]
    %v3232 = vld [vmem:[%s7 + $0x1f8] sm:$0xff]
    %v3233 = vld [vmem:[%s7 + $0x200] sm:$0xff]
    %v3234 = vld [vmem:[%s7 + $0x208] sm:$0xff]
    %v3235 = vld [vmem:[%s7 + $0x210] sm:$0xff]
    %v3236 = vld [vmem:[%s7 + $0x218] sm:$0xff]
    %v3237 = vld [vmem:[%s7 + $0x220] sm:$0xff]
    %v3238 = vld [vmem:[%s7 + $0x228] sm:$0xff]
    %v3239 = vld [vmem:[%s7 + $0x230] sm:$0xff]
    %v3240 = vld [vmem:[%s7 + $0x238] sm:$0xff]
    %v3241 = vld [vmem:[%s7 + $0x240] sm:$0xff]
    %v3242 = vld [vmem:[%s7 + $0x248] sm:$0xff]
    %v3243 = vld [vmem:[%s7 + $0x250] sm:$0xff]
    %v3244 = vld [vmem:[%s7 + $0x258] sm:$0xff]
    %v3245 = vld [vmem:[%s7 + $0x260] sm:$0xff]
    %v3246 = vld [vmem:[%s7 + $0x268] sm:$0xff]
    %v3247 = vld [vmem:[%s7 + $0x270] sm:$0xff]
    %v3248 = vld [vmem:[%s7 + $0x278] sm:$0xff]
    %v3249 = vld [vmem:[%s7 + $0x280] sm:$0xff]
    %v3250 = vld [vmem:[%s7 + $0x288] sm:$0xff]
    %v3251 = vld [vmem:[%s7 + $0x290] sm:$0xff]
    %v3252 = vld [vmem:[%s7 + $0x298] sm:$0xff]
    %v3253 = vld [vmem:[%s7 + $0x2a0] sm:$0xff]
    %v3254 = vld [vmem:[%s7 + $0x2a8] sm:$0xff]
    %v3255 = vld [vmem:[%s7 + $0x2b0] sm:$0xff]
    %v3256 = vld [vmem:[%s7 + $0x2b8] sm:$0xff]
    %v3257 = vld [vmem:[%s7 + $0x2c0] sm:$0xff]
    %v3258 = vld [vmem:[%s7 + $0x2c8] sm:$0xff]
    %v3259 = vld [vmem:[%s7 + $0x2d0] sm:$0xff]
    %v3260 = vld [vmem:[%s7 + $0x2d8] sm:$0xff]
    %v3261 = vld [vmem:[%s7 + $0x2e0] sm:$0xff]
    %v3262 = vld [vmem:[%s7 + $0x2e8] sm:$0xff]
    %v3263 = vld [vmem:[%s7 + $0x2f0] sm:$0xff]
    %v3264 = vld [vmem:[%s7 + $0x2f8] sm:$0xff]
    %3265 = vmatprep.subr.mxu0 %v3200
    %3266 = vmatpush1.msra.mxu0 %v3199
    %3267 = vmatprep.subr.mxu0 %v3198
    %3268 = vmatpush1.msra.mxu0 %v3197
    %3269 = vmatprep.subr.mxu0 %v3196
    %3270 = vmatpush1.msra.mxu0 %v3195
    %3271 = vmatprep.subr.mxu0 %v3194
    %3272 = vmatpush1.msra.mxu0 %v3193
    %3273 = vmatprep.subr.mxu0 %v3192
    %3274 = vmatpush1.msra.mxu0 %v3191
    %3275 = vmatprep.subr.mxu0 %v3190
    %3276 = vmatpush1.msra.mxu0 %v3189
    %3277 = vmatprep.subr.mxu0 %v3188
    %3278 = vmatpush1.msra.mxu0 %v3187
    %3279 = vmatprep.subr.mxu0 %v3186
    %3280 = vmatpush1.msra.mxu0 %v3185
    %3281 = vmatprep.subr.mxu0 %v3184
    %3282 = vmatpush1.msra.mxu0 %v3183
    %3283 = vmatprep.subr.mxu0 %v3182
    %3284 = vmatpush1.msra.mxu0 %v3181
    %3285 = vmatprep.subr.mxu0 %v3180
    %3286 = vmatpush1.msra.mxu0 %v3179
    %3287 = vmatprep.subr.mxu0 %v3178
    %3288 = vmatpush1.msra.mxu0 %v3177
    %3289 = vmatprep.subr.mxu0 %v3176
    %3290 = vmatpush1.msra.mxu0 %v3175
    %3291 = vmatprep.subr.mxu0 %v3174
    %3292 = vmatpush1.msra.mxu0 %v3173
    %3293 = vmatprep.subr.mxu0 %v3172
    %3294 = vmatpush1.msra.mxu0 %v3171
    %3295 = vmatprep.subr.mxu0 %v3170
    %3296 = vmatpush1.msra.mxu0 %v3169
    %3297 = vmatprep.subr.mxu0 %v3232
    %3298 = vmatpush2.msra.mxu0 %v3231
    %3299 = vmatprep.subr.mxu0 %v3230
    %3300 = vmatpush2.msra.mxu0 %v3229
    %3301 = vmatprep.subr.mxu0 %v3228
    %3302 = vmatpush2.msra.mxu0 %v3227
    %3303 = vmatprep.subr.mxu0 %v3226
    %3304 = vmatpush2.msra.mxu0 %v3225
    %3305 = vmatprep.subr.mxu0 %v3224
    %3306 = vmatpush2.msra.mxu0 %v3223
    %3307 = vmatprep.subr.mxu0 %v3222
    %3308 = vmatpush2.msra.mxu0 %v3221
    %3309 = vmatprep.subr.mxu0 %v3220
    %3310 = vmatpush2.msra.mxu0 %v3219
    %3311 = vmatprep.subr.mxu0 %v3218
    %3312 = vmatpush2.msra.mxu0 %v3217
    %3313 = vmatprep.subr.mxu0 %v3216
    %3314 = vmatpush2.msra.mxu0 %v3215
    %3315 = vmatprep.subr.mxu0 %v3214
    %3316 = vmatpush2.msra.mxu0 %v3213
    %3317 = vmatprep.subr.mxu0 %v3212
    %3318 = vmatpush2.msra.mxu0 %v3211
    %3319 = vmatprep.subr.mxu0 %v3210
    %3320 = vmatpush2.msra.mxu0 %v3209
    %3321 = vmatprep.subr.mxu0 %v3208
    %3322 = vmatpush2.msra.mxu0 %v3207
    %3323 = vmatprep.subr.mxu0 %v3206
    %3324 = vmatpush2.msra.mxu0 %v3205
    %3325 = vmatprep.subr.mxu0 %v3204
    %3326 = vmatpush2.msra.mxu0 %v3203
    %3327 = vmatprep.subr.mxu0 %v3202
    %3328 = vmatpush2.msra.mxu0 %v3201
    %3329 = vmatprep.mubr.f32.mxu0 %v2944
    %3330 = vmatmul.mubr.f32.gmra.mxu0 %v2937
    %v3331 = vpop.f32.mrf.mxu0
    %v3332 = vadd.f32 0.0, %v3331
    %v3333 = vpop.f32.mrf.mxu0
    %v3334 = vadd.f32 0.0, %v3333
    %3335 = vmatprep.mubr.f32.mxu0 %v2965
    %3336 = vmatmul.mubr.f32.gmra.mxu0 %v2958
    %v3337 = vpop.f32.mrf.mxu0
    %v3338 = vadd.f32 0.0, %v3337
    %v3339 = vpop.f32.mrf.mxu0
    %v3340 = vadd.f32 0.0, %v3339
    %3341 = vmatprep.mubr.f32.mxu0 %v2986
    %3342 = vmatmul.mubr.f32.gmra.mxu0 %v2979
    %v3343 = vpop.f32.mrf.mxu0
    %v3344 = vadd.f32 0.0, %v3343
    %v3345 = vpop.f32.mrf.mxu0
    %v3346 = vadd.f32 0.0, %v3345
    %3347 = vdwg.mxu0
    %3348 = vmatprep.subr.mxu0 %v3264
    %3349 = vmatpush1.msra.mxu0 %v3263
    %3350 = vmatprep.subr.mxu0 %v3262
    %3351 = vmatpush1.msra.mxu0 %v3261
    %3352 = vmatprep.subr.mxu0 %v3260
    %3353 = vmatpush1.msra.mxu0 %v3259
    %3354 = vmatprep.subr.mxu0 %v3258
    %3355 = vmatpush1.msra.mxu0 %v3257
    %3356 = vmatprep.subr.mxu0 %v3256
    %3357 = vmatpush1.msra.mxu0 %v3255
    %3358 = vmatprep.subr.mxu0 %v3254
    %3359 = vmatpush1.msra.mxu0 %v3253
    %3360 = vmatprep.subr.mxu0 %v3252
    %3361 = vmatpush1.msra.mxu0 %v3251
    %3362 = vmatprep.subr.mxu0 %v3250
    %3363 = vmatpush1.msra.mxu0 %v3249
    %3364 = vmatprep.subr.mxu0 %v3248
    %3365 = vmatpush1.msra.mxu0 %v3247
    %3366 = vmatprep.subr.mxu0 %v3246
    %3367 = vmatpush1.msra.mxu0 %v3245
    %3368 = vmatprep.subr.mxu0 %v3244
    %3369 = vmatpush1.msra.mxu0 %v3243
    %3370 = vmatprep.subr.mxu0 %v3242
    %3371 = vmatpush1.msra.mxu0 %v3241
    %3372 = vmatprep.subr.mxu0 %v3240
    %3373 = vmatpush1.msra.mxu0 %v3239
    %3374 = vmatprep.subr.mxu0 %v3238
    %3375 = vmatpush1.msra.mxu0 %v3237
    %3376 = vmatprep.subr.mxu0 %v3236
    %3377 = vmatpush1.msra.mxu0 %v3235
    %3378 = vmatprep.subr.mxu0 %v3234
    %3379 = vmatpush1.msra.mxu0 %v3233
    %3380 = vmatprep.subr.mxu0 0.0
    %3381 = vmatpush2.msra.mxu0 0.0
    %3382 = vmatprep.subr.mxu0 0.0
    %3383 = vmatpush2.msra.mxu0 0.0
    %3384 = vmatprep.subr.mxu0 0.0
    %3385 = vmatpush2.msra.mxu0 0.0
    %3386 = vmatprep.subr.mxu0 0.0
    %3387 = vmatpush2.msra.mxu0 0.0
    %3388 = vmatprep.subr.mxu0 0.0
    %3389 = vmatpush2.msra.mxu0 0.0
    %3390 = vmatprep.subr.mxu0 0.0
    %3391 = vmatpush2.msra.mxu0 0.0
    %3392 = vmatprep.subr.mxu0 0.0
    %3393 = vmatpush2.msra.mxu0 0.0
    %3394 = vmatprep.subr.mxu0 0.0
    %3395 = vmatpush2.msra.mxu0 0.0
    %3396 = vmatprep.subr.mxu0 0.0
    %3397 = vmatpush2.msra.mxu0 0.0
    %3398 = vmatprep.subr.mxu0 0.0
    %3399 = vmatpush2.msra.mxu0 0.0
    %3400 = vmatprep.subr.mxu0 0.0
    %3401 = vmatpush2.msra.mxu0 0.0
    %3402 = vmatprep.subr.mxu0 0.0
    %3403 = vmatpush2.msra.mxu0 0.0
    %3404 = vmatprep.subr.mxu0 0.0
    %3405 = vmatpush2.msra.mxu0 0.0
    %3406 = vmatprep.subr.mxu0 0.0
    %3407 = vmatpush2.msra.mxu0 0.0
    %3408 = vmatprep.subr.mxu0 0.0
    %3409 = vmatpush2.msra.mxu0 0.0
    %3410 = vmatprep.subr.mxu0 0.0
    %3411 = vmatpush2.msra.mxu0 0.0
    %3412 = vmatprep.mubr.f32.mxu0 0.0
    %3413 = vmatmul.mubr.f32.gmra.mxu0 %v2951
    %v3414 = vpop.f32.mrf.mxu0
    %v3415 = vadd.f32 %v3332, %v3414
    %v3416 = vpop.f32.mrf.mxu0
    %v3417 = vadd.f32 %v3334, %v3416
    %3418 = vmatprep.mubr.f32.mxu0 0.0
    %3419 = vmatmul.mubr.f32.gmra.mxu0 %v2972
    %v3420 = vpop.f32.mrf.mxu0
    %v3421 = vadd.f32 %v3338, %v3420
    %v3422 = vpop.f32.mrf.mxu0
    %v3423 = vadd.f32 %v3340, %v3422
    %3424 = vmatprep.mubr.f32.mxu0 0.0
    %3425 = vmatmul.mubr.f32.gmra.mxu0 %v2993
    %v3426 = vpop.f32.mrf.mxu0
    %v3427 = vadd.f32 %v3344, %v3426
    %v3428 = vpop.f32.mrf.mxu0
    %v3429 = vadd.f32 %v3346, %v3428
    %3430 = vdwg.mxu0
    %v3431 = vmax.f32 %v3153, %v3415
    %v3432 = vmax.f32 %v3155, %v3417
    %v3433 = vmax.f32 %v3159, %v3421
    %v3434 = vmax.f32 %v3161, %v3423
    %v3435 = vmax.f32 %v3165, %v3427
    %v3436 = vmax.f32 %v3167, %v3429
    %v3443 = vcombine.low %v3431, %v3432
    %v3444 = vcombine.high %v3431, %v3432
    %v3445 = vcombine.low %v3433, %v3434
    %v3446 = vcombine.high %v3433, %v3434
    %v3447 = vcombine.low %v3435, %v3436
    %v3448 = vcombine.high %v3435, %v3436
    %v3449 = vld [vmem:[%s8] sm:$0xff]
    %v3450 = vld [vmem:[%s8 + $0x8] sm:$0xff]
    %v3451 = vld [vmem:[%s8 + $0x10] sm:$0xff]
    %v3452 = vld [vmem:[%s8 + $0x18] sm:$0xff]
    %v3453 = vld [vmem:[%s8 + $0x20] sm:$0xff]
    %v3454 = vld [vmem:[%s8 + $0x28] sm:$0xff]
    %v3455 = vld [vmem:[%s8 + $0x30] sm:$0xff]
    %v3456 = vld [vmem:[%s8 + $0x38] sm:$0xff]
    %v3457 = vld [vmem:[%s8 + $0x40] sm:$0xff]
    %v3458 = vld [vmem:[%s8 + $0x48] sm:$0xff]
    %v3459 = vld [vmem:[%s8 + $0x50] sm:$0xff]
    %v3460 = vld [vmem:[%s8 + $0x58] sm:$0xff]
    %v3461 = vld [vmem:[%s8 + $0x60] sm:$0xff]
    %v3462 = vld [vmem:[%s8 + $0x68] sm:$0xff]
    %v3463 = vld [vmem:[%s8 + $0x70] sm:$0xff]
    %v3464 = vld [vmem:[%s8 + $0x78] sm:$0xff]
    %v3465 = vld [vmem:[%s8 + $0x80] sm:$0xff]
    %v3466 = vld [vmem:[%s8 + $0x88] sm:$0xff]
    %v3467 = vld [vmem:[%s8 + $0x90] sm:$0xff]
    %v3468 = vld [vmem:[%s8 + $0x98] sm:$0xff]
    %v3469 = vld [vmem:[%s8 + $0xa0] sm:$0xff]
    %v3470 = vld [vmem:[%s8 + $0xa8] sm:$0xff]
    %v3471 = vld [vmem:[%s8 + $0xb0] sm:$0xff]
    %v3472 = vld [vmem:[%s8 + $0xb8] sm:$0xff]
    %v3473 = vld [vmem:[%s8 + $0xc0] sm:$0xff]
    %v3474 = vld [vmem:[%s8 + $0xc8] sm:$0xff]
    %v3475 = vld [vmem:[%s8 + $0xd0] sm:$0xff]
    %v3476 = vld [vmem:[%s8 + $0xd8] sm:$0xff]
    %v3477 = vld [vmem:[%s8 + $0xe0] sm:$0xff]
    %v3478 = vld [vmem:[%s8 + $0xe8] sm:$0xff]
    %v3479 = vld [vmem:[%s8 + $0xf0] sm:$0xff]
    %v3480 = vld [vmem:[%s8 + $0xf8] sm:$0xff]
    %v3481 = vld [vmem:[%s8 + $0x100] sm:$0xff]
    %v3482 = vld [vmem:[%s8 + $0x108] sm:$0xff]
    %v3483 = vld [vmem:[%s8 + $0x110] sm:$0xff]
    %v3484 = vld [vmem:[%s8 + $0x118] sm:$0xff]
    %v3485 = vld [vmem:[%s8 + $0x120] sm:$0xff]
    %v3486 = vld [vmem:[%s8 + $0x128] sm:$0xff]
    %v3487 = vld [vmem:[%s8 + $0x130] sm:$0xff]
    %v3488 = vld [vmem:[%s8 + $0x138] sm:$0xff]
    %v3489 = vld [vmem:[%s8 + $0x140] sm:$0xff]
    %v3490 = vld [vmem:[%s8 + $0x148] sm:$0xff]
    %v3491 = vld [vmem:[%s8 + $0x150] sm:$0xff]
    %v3492 = vld [vmem:[%s8 + $0x158] sm:$0xff]
    %v3493 = vld [vmem:[%s8 + $0x160] sm:$0xff]
    %v3494 = vld [vmem:[%s8 + $0x168] sm:$0xff]
    %v3495 = vld [vmem:[%s8 + $0x170] sm:$0xff]
    %v3496 = vld [vmem:[%s8 + $0x178] sm:$0xff]
    %vm3497 = vcmask 1042432
    %vm3498 = vcmask 1046532
    %vm3499 = vmor %vm3497, %vm3498
    %v3500 = vrot.slane %v3443, 5
    %v3501 = vrot.slane %v3500, 4
    %v3502 = vrot.slane %v3444, 5
    %v3503 = vsel %vm3499, %v3501, %v3502
    %v3504 = vrot.slane %v3502, 4
    %v3505 = vrot.slane %v3445, 5
    %v3506 = vsel %vm3499, %v3504, %v3505
    %v3507 = vrot.slane %v3446, 5
    %v3508 = vrot.slane %v3507, 4
    %v3509 = vrot.slane %v3447, 5
    %v3510 = vsel %vm3499, %v3508, %v3509
    %v3511 = vrot.slane %v3509, 4
    %v3512 = vrot.slane %v3448, 5
    %v3513 = vsel %vm3499, %v3511, %v3512
    %s3514 = scalar_lea.vmem %s8, 384
    %v3515 = vld [vmem:[%s3514] sm:$0xff]
    %v3516 = vld [vmem:[%s3514 + $0x8] sm:$0xff]
    %v3517 = vld [vmem:[%s3514 + $0x10] sm:$0xff]
    %v3518 = vld [vmem:[%s3514 + $0x18] sm:$0xff]
    %v3519 = vld [vmem:[%s3514 + $0x20] sm:$0xff]
    %v3520 = vld [vmem:[%s3514 + $0x28] sm:$0xff]
    %v3521 = vld [vmem:[%s3514 + $0x30] sm:$0xff]
    %v3522 = vld [vmem:[%s3514 + $0x38] sm:$0xff]
    %v3523 = vld [vmem:[%s3514 + $0x40] sm:$0xff]
    %v3524 = vld [vmem:[%s3514 + $0x48] sm:$0xff]
    %v3525 = vld [vmem:[%s3514 + $0x50] sm:$0xff]
    %v3526 = vld [vmem:[%s3514 + $0x58] sm:$0xff]
    %v3527 = vld [vmem:[%s3514 + $0x60] sm:$0xff]
    %v3528 = vld [vmem:[%s3514 + $0x68] sm:$0xff]
    %v3529 = vld [vmem:[%s3514 + $0x70] sm:$0xff]
    %v3530 = vld [vmem:[%s3514 + $0x78] sm:$0xff]
    %v3531 = vld [vmem:[%s3514 + $0x80] sm:$0xff]
    %v3532 = vld [vmem:[%s3514 + $0x88] sm:$0xff]
    %v3533 = vld [vmem:[%s3514 + $0x90] sm:$0xff]
    %v3534 = vld [vmem:[%s3514 + $0x98] sm:$0xff]
    %v3535 = vld [vmem:[%s3514 + $0xa0] sm:$0xff]
    %v3536 = vld [vmem:[%s3514 + $0xa8] sm:$0xff]
    %v3537 = vld [vmem:[%s3514 + $0xb0] sm:$0xff]
    %v3538 = vld [vmem:[%s3514 + $0xb8] sm:$0xff]
    %v3539 = vld [vmem:[%s3514 + $0xc0] sm:$0xff]
    %v3540 = vld [vmem:[%s3514 + $0xc8] sm:$0xff]
    %v3541 = vld [vmem:[%s3514 + $0xd0] sm:$0xff]
    %v3542 = vld [vmem:[%s3514 + $0xd8] sm:$0xff]
    %v3543 = vld [vmem:[%s3514 + $0xe0] sm:$0xff]
    %v3544 = vld [vmem:[%s3514 + $0xe8] sm:$0xff]
    %v3545 = vld [vmem:[%s3514 + $0xf0] sm:$0xff]
    %v3546 = vld [vmem:[%s3514 + $0xf8] sm:$0xff]
    %v3547 = vld [vmem:[%s3514 + $0x100] sm:$0xff]
    %v3548 = vld [vmem:[%s3514 + $0x108] sm:$0xff]
    %v3549 = vld [vmem:[%s3514 + $0x110] sm:$0xff]
    %v3550 = vld [vmem:[%s3514 + $0x118] sm:$0xff]
    %v3551 = vld [vmem:[%s3514 + $0x120] sm:$0xff]
    %v3552 = vld [vmem:[%s3514 + $0x128] sm:$0xff]
    %v3553 = vld [vmem:[%s3514 + $0x130] sm:$0xff]
    %v3554 = vld [vmem:[%s3514 + $0x138] sm:$0xff]
    %v3555 = vld [vmem:[%s3514 + $0x140] sm:$0xff]
    %v3556 = vld [vmem:[%s3514 + $0x148] sm:$0xff]
    %v3557 = vld [vmem:[%s3514 + $0x150] sm:$0xff]
    %v3558 = vld [vmem:[%s3514 + $0x158] sm:$0xff]
    %v3559 = vld [vmem:[%s3514 + $0x160] sm:$0xff]
    %v3560 = vld [vmem:[%s3514 + $0x168] sm:$0xff]
    %v3561 = vld [vmem:[%s3514 + $0x170] sm:$0xff]
    %v3562 = vld [vmem:[%s3514 + $0x178] sm:$0xff]
    %v3563 = vcombine.low %v3503, %v3506
    %v3564 = vcombine.high %v3503, %v3506
    %v3565 = vcombine.low %v3510, %v3513
    %v3566 = vcombine.high %v3510, %v3513
    %vm3569 = vcmask 523264
    %v3570 = vsel %vm3569, %v3564, 0
    %v3572 = vsel %vm3569, %v3566, 0
    %3574 = vmatprep.subr.mxu0 %v3546
    %3575 = vmatpush1.msra.mxu0 %v3545
    %3576 = vmatprep.subr.mxu0 %v3544
    %3577 = vmatpush1.msra.mxu0 %v3543
    %3578 = vmatprep.subr.mxu0 %v3542
    %3579 = vmatpush1.msra.mxu0 %v3541
    %3580 = vmatprep.subr.mxu0 %v3540
    %3581 = vmatpush1.msra.mxu0 %v3539
    %3582 = vmatprep.subr.mxu0 %v3538
    %3583 = vmatpush1.msra.mxu0 %v3537
    %3584 = vmatprep.subr.mxu0 %v3536
    %3585 = vmatpush1.msra.mxu0 %v3535
    %3586 = vmatprep.subr.mxu0 %v3534
    %3587 = vmatpush1.msra.mxu0 %v3533
    %3588 = vmatprep.subr.mxu0 %v3532
    %3589 = vmatpush1.msra.mxu0 %v3531
    %3590 = vmatprep.subr.mxu0 %v3530
    %3591 = vmatpush1.msra.mxu0 %v3529
    %3592 = vmatprep.subr.mxu0 %v3528
    %3593 = vmatpush1.msra.mxu0 %v3527
    %3594 = vmatprep.subr.mxu0 %v3526
    %3595 = vmatpush1.msra.mxu0 %v3525
    %3596 = vmatprep.subr.mxu0 %v3524
    %3597 = vmatpush1.msra.mxu0 %v3523
    %3598 = vmatprep.subr.mxu0 %v3522
    %3599 = vmatpush1.msra.mxu0 %v3521
    %3600 = vmatprep.subr.mxu0 %v3520
    %3601 = vmatpush1.msra.mxu0 %v3519
    %3602 = vmatprep.subr.mxu0 %v3518
    %3603 = vmatpush1.msra.mxu0 %v3517
    %3604 = vmatprep.subr.mxu0 %v3516
    %3605 = vmatpush1.msra.mxu0 %v3515
    %3606 = vmatprep.subr.mxu0 0.0
    %3607 = vmatpush2.msra.mxu0 0.0
    %3608 = vmatprep.subr.mxu0 0.0
    %3609 = vmatpush2.msra.mxu0 0.0
    %3610 = vmatprep.subr.mxu0 0.0
    %3611 = vmatpush2.msra.mxu0 0.0
    %3612 = vmatprep.subr.mxu0 0.0
    %3613 = vmatpush2.msra.mxu0 0.0
    %3614 = vmatprep.subr.mxu0 0.0
    %3615 = vmatpush2.msra.mxu0 0.0
    %3616 = vmatprep.subr.mxu0 0.0
    %3617 = vmatpush2.msra.mxu0 0.0
    %3618 = vmatprep.subr.mxu0 0.0
    %3619 = vmatpush2.msra.mxu0 0.0
    %3620 = vmatprep.subr.mxu0 0.0
    %3621 = vmatpush2.msra.mxu0 0.0
    %3622 = vmatprep.subr.mxu0 %v3562
    %3623 = vmatpush2.msra.mxu0 %v3561
    %3624 = vmatprep.subr.mxu0 %v3560
    %3625 = vmatpush2.msra.mxu0 %v3559
    %3626 = vmatprep.subr.mxu0 %v3558
    %3627 = vmatpush2.msra.mxu0 %v3557
    %3628 = vmatprep.subr.mxu0 %v3556
    %3629 = vmatpush2.msra.mxu0 %v3555
    %3630 = vmatprep.subr.mxu0 %v3554
    %3631 = vmatpush2.msra.mxu0 %v3553
    %3632 = vmatprep.subr.mxu0 %v3552
    %3633 = vmatpush2.msra.mxu0 %v3551
    %3634 = vmatprep.subr.mxu0 %v3550
    %3635 = vmatpush2.msra.mxu0 %v3549
    %3636 = vmatprep.subr.mxu0 %v3548
    %3637 = vmatpush2.msra.mxu0 %v3547
    %3638 = vmatprep.mubr.f32.mxu0 %v3570
    %3639 = vmatmul.mubr.f32.gmra.mxu0 %v3563
    %v3640 = vpop.f32.mrf.mxu0
    %v3641 = vadd.f32 0.0, %v3640
    %v3642 = vpop.f32.mrf.mxu0
    %v3643 = vadd.f32 0.0, %v3642
    %3644 = vmatprep.mubr.f32.mxu0 %v3572
    %3645 = vmatmul.mubr.f32.gmra.mxu0 %v3565
    %v3646 = vpop.f32.mrf.mxu0
    %v3647 = vadd.f32 0.0, %v3646
    %v3648 = vpop.f32.mrf.mxu0
    %v3649 = vadd.f32 0.0, %v3648
    %3650 = vdwg.mxu0
    %v3651 = vcombine.low %v3443, %v3444
    %v3652 = vcombine.high %v3443, %v3444
    %v3653 = vcombine.low %v3446, %v3447
    %v3654 = vcombine.high %v3446, %v3447
    %v3657 = vsel %vm3569, %v3652, 0
    %v3659 = vsel %vm3569, %v3654, 0
    %3661 = vmatprep.subr.mxu0 %v3480
    %3662 = vmatpush1.msra.mxu0 %v3479
    %3663 = vmatprep.subr.mxu0 %v3478
    %3664 = vmatpush1.msra.mxu0 %v3477
    %3665 = vmatprep.subr.mxu0 %v3476
    %3666 = vmatpush1.msra.mxu0 %v3475
    %3667 = vmatprep.subr.mxu0 %v3474
    %3668 = vmatpush1.msra.mxu0 %v3473
    %3669 = vmatprep.subr.mxu0 %v3472
    %3670 = vmatpush1.msra.mxu0 %v3471
    %3671 = vmatprep.subr.mxu0 %v3470
    %3672 = vmatpush1.msra.mxu0 %v3469
    %3673 = vmatprep.subr.mxu0 %v3468
    %3674 = vmatpush1.msra.mxu0 %v3467
    %3675 = vmatprep.subr.mxu0 %v3466
    %3676 = vmatpush1.msra.mxu0 %v3465
    %3677 = vmatprep.subr.mxu0 %v3464
    %3678 = vmatpush1.msra.mxu0 %v3463
    %3679 = vmatprep.subr.mxu0 %v3462
    %3680 = vmatpush1.msra.mxu0 %v3461
    %3681 = vmatprep.subr.mxu0 %v3460
    %3682 = vmatpush1.msra.mxu0 %v3459
    %3683 = vmatprep.subr.mxu0 %v3458
    %3684 = vmatpush1.msra.mxu0 %v3457
    %3685 = vmatprep.subr.mxu0 %v3456
    %3686 = vmatpush1.msra.mxu0 %v3455
    %3687 = vmatprep.subr.mxu0 %v3454
    %3688 = vmatpush1.msra.mxu0 %v3453
    %3689 = vmatprep.subr.mxu0 %v3452
    %3690 = vmatpush1.msra.mxu0 %v3451
    %3691 = vmatprep.subr.mxu0 %v3450
    %3692 = vmatpush1.msra.mxu0 %v3449
    %3693 = vmatprep.subr.mxu0 0.0
    %3694 = vmatpush2.msra.mxu0 0.0
    %3695 = vmatprep.subr.mxu0 0.0
    %3696 = vmatpush2.msra.mxu0 0.0
    %3697 = vmatprep.subr.mxu0 0.0
    %3698 = vmatpush2.msra.mxu0 0.0
    %3699 = vmatprep.subr.mxu0 0.0
    %3700 = vmatpush2.msra.mxu0 0.0
    %3701 = vmatprep.subr.mxu0 0.0
    %3702 = vmatpush2.msra.mxu0 0.0
    %3703 = vmatprep.subr.mxu0 0.0
    %3704 = vmatpush2.msra.mxu0 0.0
    %3705 = vmatprep.subr.mxu0 0.0
    %3706 = vmatpush2.msra.mxu0 0.0
    %3707 = vmatprep.subr.mxu0 0.0
    %3708 = vmatpush2.msra.mxu0 0.0
    %3709 = vmatprep.subr.mxu0 %v3496
    %3710 = vmatpush2.msra.mxu0 %v3495
    %3711 = vmatprep.subr.mxu0 %v3494
    %3712 = vmatpush2.msra.mxu0 %v3493
    %3713 = vmatprep.subr.mxu0 %v3492
    %3714 = vmatpush2.msra.mxu0 %v3491
    %3715 = vmatprep.subr.mxu0 %v3490
    %3716 = vmatpush2.msra.mxu0 %v3489
    %3717 = vmatprep.subr.mxu0 %v3488
    %3718 = vmatpush2.msra.mxu0 %v3487
    %3719 = vmatprep.subr.mxu0 %v3486
    %3720 = vmatpush2.msra.mxu0 %v3485
    %3721 = vmatprep.subr.mxu0 %v3484
    %3722 = vmatpush2.msra.mxu0 %v3483
    %3723 = vmatprep.subr.mxu0 %v3482
    %3724 = vmatpush2.msra.mxu0 %v3481
    %3725 = vmatprep.mubr.f32.mxu0 %v3657
    %3726 = vmatmul.mubr.f32.gmra.mxu0 %v3651
    %v3727 = vpop.f32.mrf.mxu0
    %v3728 = vadd.f32 %v3641, %v3727
    %v3729 = vpop.f32.mrf.mxu0
    %v3730 = vadd.f32 %v3643, %v3729
    %3731 = vmatprep.mubr.f32.mxu0 %v3659
    %3732 = vmatmul.mubr.f32.gmra.mxu0 %v3653
    %v3733 = vpop.f32.mrf.mxu0
    %v3734 = vadd.f32 %v3647, %v3733
    %v3735 = vpop.f32.mrf.mxu0
    %v3736 = vadd.f32 %v3649, %v3735
    %3737 = vdwg.mxu0
    %vm3738 = vcmask 1041408
    %vm3739 = vcmask 1045508
    %vm3740 = vmor %vm3738, %vm3739
    %v3741 = vrot.slane %v3443, 6
    %v3742 = vrot.slane %v3741, 4
    %v3743 = vrot.slane %v3444, 6
    %v3744 = vsel %vm3740, %v3742, %v3743
    %v3745 = vrot.slane %v3743, 4
    %v3746 = vrot.slane %v3445, 6
    %v3747 = vsel %vm3740, %v3745, %v3746
    %v3748 = vrot.slane %v3446, 6
    %v3749 = vrot.slane %v3748, 4
    %v3750 = vrot.slane %v3447, 6
    %v3751 = vsel %vm3740, %v3749, %v3750
    %v3752 = vrot.slane %v3750, 4
    %v3753 = vrot.slane %v3448, 6
    %v3754 = vsel %vm3740, %v3752, %v3753
    %s3755 = scalar_lea.vmem %s8, 768
    %v3756 = vld [vmem:[%s3755] sm:$0xff]
    %v3757 = vld [vmem:[%s3755 + $0x8] sm:$0xff]
    %v3758 = vld [vmem:[%s3755 + $0x10] sm:$0xff]
    %v3759 = vld [vmem:[%s3755 + $0x18] sm:$0xff]
    %v3760 = vld [vmem:[%s3755 + $0x20] sm:$0xff]
    %v3761 = vld [vmem:[%s3755 + $0x28] sm:$0xff]
    %v3762 = vld [vmem:[%s3755 + $0x30] sm:$0xff]
    %v3763 = vld [vmem:[%s3755 + $0x38] sm:$0xff]
    %v3764 = vld [vmem:[%s3755 + $0x40] sm:$0xff]
    %v3765 = vld [vmem:[%s3755 + $0x48] sm:$0xff]
    %v3766 = vld [vmem:[%s3755 + $0x50] sm:$0xff]
    %v3767 = vld [vmem:[%s3755 + $0x58] sm:$0xff]
    %v3768 = vld [vmem:[%s3755 + $0x60] sm:$0xff]
    %v3769 = vld [vmem:[%s3755 + $0x68] sm:$0xff]
    %v3770 = vld [vmem:[%s3755 + $0x70] sm:$0xff]
    %v3771 = vld [vmem:[%s3755 + $0x78] sm:$0xff]
    %v3772 = vld [vmem:[%s3755 + $0x80] sm:$0xff]
    %v3773 = vld [vmem:[%s3755 + $0x88] sm:$0xff]
    %v3774 = vld [vmem:[%s3755 + $0x90] sm:$0xff]
    %v3775 = vld [vmem:[%s3755 + $0x98] sm:$0xff]
    %v3776 = vld [vmem:[%s3755 + $0xa0] sm:$0xff]
    %v3777 = vld [vmem:[%s3755 + $0xa8] sm:$0xff]
    %v3778 = vld [vmem:[%s3755 + $0xb0] sm:$0xff]
    %v3779 = vld [vmem:[%s3755 + $0xb8] sm:$0xff]
    %v3780 = vld [vmem:[%s3755 + $0xc0] sm:$0xff]
    %v3781 = vld [vmem:[%s3755 + $0xc8] sm:$0xff]
    %v3782 = vld [vmem:[%s3755 + $0xd0] sm:$0xff]
    %v3783 = vld [vmem:[%s3755 + $0xd8] sm:$0xff]
    %v3784 = vld [vmem:[%s3755 + $0xe0] sm:$0xff]
    %v3785 = vld [vmem:[%s3755 + $0xe8] sm:$0xff]
    %v3786 = vld [vmem:[%s3755 + $0xf0] sm:$0xff]
    %v3787 = vld [vmem:[%s3755 + $0xf8] sm:$0xff]
    %v3788 = vld [vmem:[%s3755 + $0x100] sm:$0xff]
    %v3789 = vld [vmem:[%s3755 + $0x108] sm:$0xff]
    %v3790 = vld [vmem:[%s3755 + $0x110] sm:$0xff]
    %v3791 = vld [vmem:[%s3755 + $0x118] sm:$0xff]
    %v3792 = vld [vmem:[%s3755 + $0x120] sm:$0xff]
    %v3793 = vld [vmem:[%s3755 + $0x128] sm:$0xff]
    %v3794 = vld [vmem:[%s3755 + $0x130] sm:$0xff]
    %v3795 = vld [vmem:[%s3755 + $0x138] sm:$0xff]
    %v3796 = vld [vmem:[%s3755 + $0x140] sm:$0xff]
    %v3797 = vld [vmem:[%s3755 + $0x148] sm:$0xff]
    %v3798 = vld [vmem:[%s3755 + $0x150] sm:$0xff]
    %v3799 = vld [vmem:[%s3755 + $0x158] sm:$0xff]
    %v3800 = vld [vmem:[%s3755 + $0x160] sm:$0xff]
    %v3801 = vld [vmem:[%s3755 + $0x168] sm:$0xff]
    %v3802 = vld [vmem:[%s3755 + $0x170] sm:$0xff]
    %v3803 = vld [vmem:[%s3755 + $0x178] sm:$0xff]
    %v3804 = vcombine.low %v3744, %v3747
    %v3805 = vcombine.high %v3744, %v3747
    %v3806 = vcombine.low %v3751, %v3754
    %v3807 = vcombine.high %v3751, %v3754
    %v3810 = vsel %vm3569, %v3805, 0
    %v3812 = vsel %vm3569, %v3807, 0
    %3814 = vmatprep.subr.mxu0 %v3787
    %3815 = vmatpush1.msra.mxu0 %v3786
    %3816 = vmatprep.subr.mxu0 %v3785
    %3817 = vmatpush1.msra.mxu0 %v3784
    %3818 = vmatprep.subr.mxu0 %v3783
    %3819 = vmatpush1.msra.mxu0 %v3782
    %3820 = vmatprep.subr.mxu0 %v3781
    %3821 = vmatpush1.msra.mxu0 %v3780
    %3822 = vmatprep.subr.mxu0 %v3779
    %3823 = vmatpush1.msra.mxu0 %v3778
    %3824 = vmatprep.subr.mxu0 %v3777
    %3825 = vmatpush1.msra.mxu0 %v3776
    %3826 = vmatprep.subr.mxu0 %v3775
    %3827 = vmatpush1.msra.mxu0 %v3774
    %3828 = vmatprep.subr.mxu0 %v3773
    %3829 = vmatpush1.msra.mxu0 %v3772
    %3830 = vmatprep.subr.mxu0 %v3771
    %3831 = vmatpush1.msra.mxu0 %v3770
    %3832 = vmatprep.subr.mxu0 %v3769
    %3833 = vmatpush1.msra.mxu0 %v3768
    %3834 = vmatprep.subr.mxu0 %v3767
    %3835 = vmatpush1.msra.mxu0 %v3766
    %3836 = vmatprep.subr.mxu0 %v3765
    %3837 = vmatpush1.msra.mxu0 %v3764
    %3838 = vmatprep.subr.mxu0 %v3763
    %3839 = vmatpush1.msra.mxu0 %v3762
    %3840 = vmatprep.subr.mxu0 %v3761
    %3841 = vmatpush1.msra.mxu0 %v3760
    %3842 = vmatprep.subr.mxu0 %v3759
    %3843 = vmatpush1.msra.mxu0 %v3758
    %3844 = vmatprep.subr.mxu0 %v3757
    %3845 = vmatpush1.msra.mxu0 %v3756
    %3846 = vmatprep.subr.mxu0 0.0
    %3847 = vmatpush2.msra.mxu0 0.0
    %3848 = vmatprep.subr.mxu0 0.0
    %3849 = vmatpush2.msra.mxu0 0.0
    %3850 = vmatprep.subr.mxu0 0.0
    %3851 = vmatpush2.msra.mxu0 0.0
    %3852 = vmatprep.subr.mxu0 0.0
    %3853 = vmatpush2.msra.mxu0 0.0
    %3854 = vmatprep.subr.mxu0 0.0
    %3855 = vmatpush2.msra.mxu0 0.0
    %3856 = vmatprep.subr.mxu0 0.0
    %3857 = vmatpush2.msra.mxu0 0.0
    %3858 = vmatprep.subr.mxu0 0.0
    %3859 = vmatpush2.msra.mxu0 0.0
    %3860 = vmatprep.subr.mxu0 0.0
    %3861 = vmatpush2.msra.mxu0 0.0
    %3862 = vmatprep.subr.mxu0 %v3803
    %3863 = vmatpush2.msra.mxu0 %v3802
    %3864 = vmatprep.subr.mxu0 %v3801
    %3865 = vmatpush2.msra.mxu0 %v3800
    %3866 = vmatprep.subr.mxu0 %v3799
    %3867 = vmatpush2.msra.mxu0 %v3798
    %3868 = vmatprep.subr.mxu0 %v3797
    %3869 = vmatpush2.msra.mxu0 %v3796
    %3870 = vmatprep.subr.mxu0 %v3795
    %3871 = vmatpush2.msra.mxu0 %v3794
    %3872 = vmatprep.subr.mxu0 %v3793
    %3873 = vmatpush2.msra.mxu0 %v3792
    %3874 = vmatprep.subr.mxu0 %v3791
    %3875 = vmatpush2.msra.mxu0 %v3790
    %3876 = vmatprep.subr.mxu0 %v3789
    %3877 = vmatpush2.msra.mxu0 %v3788
    %3878 = vmatprep.mubr.f32.mxu0 %v3810
    %3879 = vmatmul.mubr.f32.gmra.mxu0 %v3804
    %v3880 = vpop.f32.mrf.mxu0
    %v3881 = vadd.f32 0.0, %v3880
    %v3882 = vpop.f32.mrf.mxu0
    %v3883 = vadd.f32 0.0, %v3882
    %3884 = vmatprep.mubr.f32.mxu0 %v3812
    %3885 = vmatmul.mubr.f32.gmra.mxu0 %v3806
    %v3886 = vpop.f32.mrf.mxu0
    %v3887 = vadd.f32 0.0, %v3886
    %v3888 = vpop.f32.mrf.mxu0
    %v3889 = vadd.f32 0.0, %v3888
    %3890 = vdwg.mxu0
    %v3891 = vadd.f32 %v3728, %v3881
    %v3892 = vadd.f32 %v3730, %v3883
    %v3893 = vadd.f32 %v3734, %v3887
    %v3894 = vadd.f32 %v3736, %v3889
    %vm3895 = vcmask 1040384
    %vm3896 = vmor %vm3895, %vm2930
    %v3897 = vrot.slane %v3443, 7
    %v3898 = vrot.slane %v3897, 4
    %v3899 = vrot.slane %v3444, 7
    %v3900 = vsel %vm3896, %v3898, %v3899
    %v3901 = vrot.slane %v3899, 4
    %v3902 = vrot.slane %v3445, 7
    %v3903 = vsel %vm3896, %v3901, %v3902
    %v3904 = vrot.slane %v3446, 7
    %v3905 = vrot.slane %v3904, 4
    %v3906 = vrot.slane %v3447, 7
    %v3907 = vsel %vm3896, %v3905, %v3906
    %v3908 = vrot.slane %v3906, 4
    %v3909 = vrot.slane %v3448, 7
    %v3910 = vsel %vm3896, %v3908, %v3909
    %s3911 = scalar_lea.vmem %s8, 1152
    %v3912 = vld [vmem:[%s3911] sm:$0xff]
    %v3913 = vld [vmem:[%s3911 + $0x8] sm:$0xff]
    %v3914 = vld [vmem:[%s3911 + $0x10] sm:$0xff]
    %v3915 = vld [vmem:[%s3911 + $0x18] sm:$0xff]
    %v3916 = vld [vmem:[%s3911 + $0x20] sm:$0xff]
    %v3917 = vld [vmem:[%s3911 + $0x28] sm:$0xff]
    %v3918 = vld [vmem:[%s3911 + $0x30] sm:$0xff]
    %v3919 = vld [vmem:[%s3911 + $0x38] sm:$0xff]
    %v3920 = vld [vmem:[%s3911 + $0x40] sm:$0xff]
    %v3921 = vld [vmem:[%s3911 + $0x48] sm:$0xff]
    %v3922 = vld [vmem:[%s3911 + $0x50] sm:$0xff]
    %v3923 = vld [vmem:[%s3911 + $0x58] sm:$0xff]
    %v3924 = vld [vmem:[%s3911 + $0x60] sm:$0xff]
    %v3925 = vld [vmem:[%s3911 + $0x68] sm:$0xff]
    %v3926 = vld [vmem:[%s3911 + $0x70] sm:$0xff]
    %v3927 = vld [vmem:[%s3911 + $0x78] sm:$0xff]
    %v3928 = vld [vmem:[%s3911 + $0x80] sm:$0xff]
    %v3929 = vld [vmem:[%s3911 + $0x88] sm:$0xff]
    %v3930 = vld [vmem:[%s3911 + $0x90] sm:$0xff]
    %v3931 = vld [vmem:[%s3911 + $0x98] sm:$0xff]
    %v3932 = vld [vmem:[%s3911 + $0xa0] sm:$0xff]
    %v3933 = vld [vmem:[%s3911 + $0xa8] sm:$0xff]
    %v3934 = vld [vmem:[%s3911 + $0xb0] sm:$0xff]
    %v3935 = vld [vmem:[%s3911 + $0xb8] sm:$0xff]
    %v3936 = vld [vmem:[%s3911 + $0xc0] sm:$0xff]
    %v3937 = vld [vmem:[%s3911 + $0xc8] sm:$0xff]
    %v3938 = vld [vmem:[%s3911 + $0xd0] sm:$0xff]
    %v3939 = vld [vmem:[%s3911 + $0xd8] sm:$0xff]
    %v3940 = vld [vmem:[%s3911 + $0xe0] sm:$0xff]
    %v3941 = vld [vmem:[%s3911 + $0xe8] sm:$0xff]
    %v3942 = vld [vmem:[%s3911 + $0xf0] sm:$0xff]
    %v3943 = vld [vmem:[%s3911 + $0xf8] sm:$0xff]
    %v3944 = vld [vmem:[%s3911 + $0x100] sm:$0xff]
    %v3945 = vld [vmem:[%s3911 + $0x108] sm:$0xff]
    %v3946 = vld [vmem:[%s3911 + $0x110] sm:$0xff]
    %v3947 = vld [vmem:[%s3911 + $0x118] sm:$0xff]
    %v3948 = vld [vmem:[%s3911 + $0x120] sm:$0xff]
    %v3949 = vld [vmem:[%s3911 + $0x128] sm:$0xff]
    %v3950 = vld [vmem:[%s3911 + $0x130] sm:$0xff]
    %v3951 = vld [vmem:[%s3911 + $0x138] sm:$0xff]
    %v3952 = vld [vmem:[%s3911 + $0x140] sm:$0xff]
    %v3953 = vld [vmem:[%s3911 + $0x148] sm:$0xff]
    %v3954 = vld [vmem:[%s3911 + $0x150] sm:$0xff]
    %v3955 = vld [vmem:[%s3911 + $0x158] sm:$0xff]
    %v3956 = vld [vmem:[%s3911 + $0x160] sm:$0xff]
    %v3957 = vld [vmem:[%s3911 + $0x168] sm:$0xff]
    %v3958 = vld [vmem:[%s3911 + $0x170] sm:$0xff]
    %v3959 = vld [vmem:[%s3911 + $0x178] sm:$0xff]
    %v3960 = vcombine.low %v3900, %v3903
    %v3961 = vcombine.high %v3900, %v3903
    %v3962 = vcombine.low %v3907, %v3910
    %v3963 = vcombine.high %v3907, %v3910
    %v3966 = vsel %vm3569, %v3961, 0
    %v3968 = vsel %vm3569, %v3963, 0
    %3970 = vmatprep.subr.mxu0 %v3943
    %3971 = vmatpush1.msra.mxu0 %v3942
    %3972 = vmatprep.subr.mxu0 %v3941
    %3973 = vmatpush1.msra.mxu0 %v3940
    %3974 = vmatprep.subr.mxu0 %v3939
    %3975 = vmatpush1.msra.mxu0 %v3938
    %3976 = vmatprep.subr.mxu0 %v3937
    %3977 = vmatpush1.msra.mxu0 %v3936
    %3978 = vmatprep.subr.mxu0 %v3935
    %3979 = vmatpush1.msra.mxu0 %v3934
    %3980 = vmatprep.subr.mxu0 %v3933
    %3981 = vmatpush1.msra.mxu0 %v3932
    %3982 = vmatprep.subr.mxu0 %v3931
    %3983 = vmatpush1.msra.mxu0 %v3930
    %3984 = vmatprep.subr.mxu0 %v3929
    %3985 = vmatpush1.msra.mxu0 %v3928
    %3986 = vmatprep.subr.mxu0 %v3927
    %3987 = vmatpush1.msra.mxu0 %v3926
    %3988 = vmatprep.subr.mxu0 %v3925
    %3989 = vmatpush1.msra.mxu0 %v3924
    %3990 = vmatprep.subr.mxu0 %v3923
    %3991 = vmatpush1.msra.mxu0 %v3922
    %3992 = vmatprep.subr.mxu0 %v3921
    %3993 = vmatpush1.msra.mxu0 %v3920
    %3994 = vmatprep.subr.mxu0 %v3919
    %3995 = vmatpush1.msra.mxu0 %v3918
    %3996 = vmatprep.subr.mxu0 %v3917
    %3997 = vmatpush1.msra.mxu0 %v3916
    %3998 = vmatprep.subr.mxu0 %v3915
    %3999 = vmatpush1.msra.mxu0 %v3914
    %4000 = vmatprep.subr.mxu0 %v3913
    %4001 = vmatpush1.msra.mxu0 %v3912
    %4002 = vmatprep.subr.mxu0 0.0
    %4003 = vmatpush2.msra.mxu0 0.0
    %4004 = vmatprep.subr.mxu0 0.0
    %4005 = vmatpush2.msra.mxu0 0.0
    %4006 = vmatprep.subr.mxu0 0.0
    %4007 = vmatpush2.msra.mxu0 0.0
    %4008 = vmatprep.subr.mxu0 0.0
    %4009 = vmatpush2.msra.mxu0 0.0
    %4010 = vmatprep.subr.mxu0 0.0
    %4011 = vmatpush2.msra.mxu0 0.0
    %4012 = vmatprep.subr.mxu0 0.0
    %4013 = vmatpush2.msra.mxu0 0.0
    %4014 = vmatprep.subr.mxu0 0.0
    %4015 = vmatpush2.msra.mxu0 0.0
    %4016 = vmatprep.subr.mxu0 0.0
    %4017 = vmatpush2.msra.mxu0 0.0
    %4018 = vmatprep.subr.mxu0 %v3959
    %4019 = vmatpush2.msra.mxu0 %v3958
    %4020 = vmatprep.subr.mxu0 %v3957
    %4021 = vmatpush2.msra.mxu0 %v3956
    %4022 = vmatprep.subr.mxu0 %v3955
    %4023 = vmatpush2.msra.mxu0 %v3954
    %4024 = vmatprep.subr.mxu0 %v3953
    %4025 = vmatpush2.msra.mxu0 %v3952
    %4026 = vmatprep.subr.mxu0 %v3951
    %4027 = vmatpush2.msra.mxu0 %v3950
    %4028 = vmatprep.subr.mxu0 %v3949
    %4029 = vmatpush2.msra.mxu0 %v3948
    %4030 = vmatprep.subr.mxu0 %v3947
    %4031 = vmatpush2.msra.mxu0 %v3946
    %4032 = vmatprep.subr.mxu0 %v3945
    %4033 = vmatpush2.msra.mxu0 %v3944
    %4034 = vmatprep.mubr.f32.mxu0 %v3966
    %4035 = vmatmul.mubr.f32.gmra.mxu0 %v3960
    %v4036 = vpop.f32.mrf.mxu0
    %v4037 = vadd.f32 0.0, %v4036
    %v4038 = vpop.f32.mrf.mxu0
    %v4039 = vadd.f32 0.0, %v4038
    %4040 = vmatprep.mubr.f32.mxu0 %v3968
    %4041 = vmatmul.mubr.f32.gmra.mxu0 %v3962
    %v4042 = vpop.f32.mrf.mxu0
    %v4043 = vadd.f32 0.0, %v4042
    %v4044 = vpop.f32.mrf.mxu0
    %v4045 = vadd.f32 0.0, %v4044
    %4046 = vdwg.mxu0
    %v4047 = vadd.f32 %v3891, %v4037
    %v4048 = vadd.f32 %v3892, %v4039
    %v4049 = vadd.f32 %v3893, %v4043
    %v4050 = vadd.f32 %v3894, %v4045
    %s4051 = scalar_lea.vmem %s8, 1536
    %v4052 = vld [vmem:[%s4051] sm:$0xff]
    %v4053 = vld [vmem:[%s4051 + $0x8] sm:$0xff]
    %v4054 = vld [vmem:[%s4051 + $0x10] sm:$0xff]
    %v4055 = vld [vmem:[%s4051 + $0x18] sm:$0xff]
    %v4056 = vld [vmem:[%s4051 + $0x20] sm:$0xff]
    %v4057 = vld [vmem:[%s4051 + $0x28] sm:$0xff]
    %v4058 = vld [vmem:[%s4051 + $0x30] sm:$0xff]
    %v4059 = vld [vmem:[%s4051 + $0x38] sm:$0xff]
    %v4060 = vld [vmem:[%s4051 + $0x40] sm:$0xff]
    %v4061 = vld [vmem:[%s4051 + $0x48] sm:$0xff]
    %v4062 = vld [vmem:[%s4051 + $0x50] sm:$0xff]
    %v4063 = vld [vmem:[%s4051 + $0x58] sm:$0xff]
    %v4064 = vld [vmem:[%s4051 + $0x60] sm:$0xff]
    %v4065 = vld [vmem:[%s4051 + $0x68] sm:$0xff]
    %v4066 = vld [vmem:[%s4051 + $0x70] sm:$0xff]
    %v4067 = vld [vmem:[%s4051 + $0x78] sm:$0xff]
    %v4068 = vld [vmem:[%s4051 + $0x80] sm:$0xff]
    %v4069 = vld [vmem:[%s4051 + $0x88] sm:$0xff]
    %v4070 = vld [vmem:[%s4051 + $0x90] sm:$0xff]
    %v4071 = vld [vmem:[%s4051 + $0x98] sm:$0xff]
    %v4072 = vld [vmem:[%s4051 + $0xa0] sm:$0xff]
    %v4073 = vld [vmem:[%s4051 + $0xa8] sm:$0xff]
    %v4074 = vld [vmem:[%s4051 + $0xb0] sm:$0xff]
    %v4075 = vld [vmem:[%s4051 + $0xb8] sm:$0xff]
    %v4076 = vld [vmem:[%s4051 + $0xc0] sm:$0xff]
    %v4077 = vld [vmem:[%s4051 + $0xc8] sm:$0xff]
    %v4078 = vld [vmem:[%s4051 + $0xd0] sm:$0xff]
    %v4079 = vld [vmem:[%s4051 + $0xd8] sm:$0xff]
    %v4080 = vld [vmem:[%s4051 + $0xe0] sm:$0xff]
    %v4081 = vld [vmem:[%s4051 + $0xe8] sm:$0xff]
    %v4082 = vld [vmem:[%s4051 + $0xf0] sm:$0xff]
    %v4083 = vld [vmem:[%s4051 + $0xf8] sm:$0xff]
    %v4084 = vld [vmem:[%s4051 + $0x100] sm:$0xff]
    %v4085 = vld [vmem:[%s4051 + $0x108] sm:$0xff]
    %v4086 = vld [vmem:[%s4051 + $0x110] sm:$0xff]
    %v4087 = vld [vmem:[%s4051 + $0x118] sm:$0xff]
    %v4088 = vld [vmem:[%s4051 + $0x120] sm:$0xff]
    %v4089 = vld [vmem:[%s4051 + $0x128] sm:$0xff]
    %v4090 = vld [vmem:[%s4051 + $0x130] sm:$0xff]
    %v4091 = vld [vmem:[%s4051 + $0x138] sm:$0xff]
    %v4092 = vld [vmem:[%s4051 + $0x140] sm:$0xff]
    %v4093 = vld [vmem:[%s4051 + $0x148] sm:$0xff]
    %v4094 = vld [vmem:[%s4051 + $0x150] sm:$0xff]
    %v4095 = vld [vmem:[%s4051 + $0x158] sm:$0xff]
    %v4096 = vld [vmem:[%s4051 + $0x160] sm:$0xff]
    %v4097 = vld [vmem:[%s4051 + $0x168] sm:$0xff]
    %v4098 = vld [vmem:[%s4051 + $0x170] sm:$0xff]
    %v4099 = vld [vmem:[%s4051 + $0x178] sm:$0xff]
    %v4100 = vcombine.low %v3444, %v3445
    %v4101 = vcombine.high %v3444, %v3445
    %v4102 = vcombine.low %v3447, %v3448
    %v4103 = vcombine.high %v3447, %v3448
    %v4106 = vsel %vm3569, %v4101, 0
    %v4108 = vsel %vm3569, %v4103, 0
    %4110 = vmatprep.subr.mxu0 %v4083
    %4111 = vmatpush1.msra.mxu0 %v4082
    %4112 = vmatprep.subr.mxu0 %v4081
    %4113 = vmatpush1.msra.mxu0 %v4080
    %4114 = vmatprep.subr.mxu0 %v4079
    %4115 = vmatpush1.msra.mxu0 %v4078
    %4116 = vmatprep.subr.mxu0 %v4077
    %4117 = vmatpush1.msra.mxu0 %v4076
    %4118 = vmatprep.subr.mxu0 %v4075
    %4119 = vmatpush1.msra.mxu0 %v4074
    %4120 = vmatprep.subr.mxu0 %v4073
    %4121 = vmatpush1.msra.mxu0 %v4072
    %4122 = vmatprep.subr.mxu0 %v4071
    %4123 = vmatpush1.msra.mxu0 %v4070
    %4124 = vmatprep.subr.mxu0 %v4069
    %4125 = vmatpush1.msra.mxu0 %v4068
    %4126 = vmatprep.subr.mxu0 %v4067
    %4127 = vmatpush1.msra.mxu0 %v4066
    %4128 = vmatprep.subr.mxu0 %v4065
    %4129 = vmatpush1.msra.mxu0 %v4064
    %4130 = vmatprep.subr.mxu0 %v4063
    %4131 = vmatpush1.msra.mxu0 %v4062
    %4132 = vmatprep.subr.mxu0 %v4061
    %4133 = vmatpush1.msra.mxu0 %v4060
    %4134 = vmatprep.subr.mxu0 %v4059
    %4135 = vmatpush1.msra.mxu0 %v4058
    %4136 = vmatprep.subr.mxu0 %v4057
    %4137 = vmatpush1.msra.mxu0 %v4056
    %4138 = vmatprep.subr.mxu0 %v4055
    %4139 = vmatpush1.msra.mxu0 %v4054
    %4140 = vmatprep.subr.mxu0 %v4053
    %4141 = vmatpush1.msra.mxu0 %v4052
    %4142 = vmatprep.subr.mxu0 0.0
    %4143 = vmatpush2.msra.mxu0 0.0
    %4144 = vmatprep.subr.mxu0 0.0
    %4145 = vmatpush2.msra.mxu0 0.0
    %4146 = vmatprep.subr.mxu0 0.0
    %4147 = vmatpush2.msra.mxu0 0.0
    %4148 = vmatprep.subr.mxu0 0.0
    %4149 = vmatpush2.msra.mxu0 0.0
    %4150 = vmatprep.subr.mxu0 0.0
    %4151 = vmatpush2.msra.mxu0 0.0
    %4152 = vmatprep.subr.mxu0 0.0
    %4153 = vmatpush2.msra.mxu0 0.0
    %4154 = vmatprep.subr.mxu0 0.0
    %4155 = vmatpush2.msra.mxu0 0.0
    %4156 = vmatprep.subr.mxu0 0.0
    %4157 = vmatpush2.msra.mxu0 0.0
    %4158 = vmatprep.subr.mxu0 %v4099
    %4159 = vmatpush2.msra.mxu0 %v4098
    %4160 = vmatprep.subr.mxu0 %v4097
    %4161 = vmatpush2.msra.mxu0 %v4096
    %4162 = vmatprep.subr.mxu0 %v4095
    %4163 = vmatpush2.msra.mxu0 %v4094
    %4164 = vmatprep.subr.mxu0 %v4093
    %4165 = vmatpush2.msra.mxu0 %v4092
    %4166 = vmatprep.subr.mxu0 %v4091
    %4167 = vmatpush2.msra.mxu0 %v4090
    %4168 = vmatprep.subr.mxu0 %v4089
    %4169 = vmatpush2.msra.mxu0 %v4088
    %4170 = vmatprep.subr.mxu0 %v4087
    %4171 = vmatpush2.msra.mxu0 %v4086
    %4172 = vmatprep.subr.mxu0 %v4085
    %4173 = vmatpush2.msra.mxu0 %v4084
    %4174 = vmatprep.mubr.f32.mxu0 %v4106
    %4175 = vmatmul.mubr.f32.gmra.mxu0 %v4100
    %v4176 = vpop.f32.mrf.mxu0
    %v4177 = vadd.f32 0.0, %v4176
    %v4178 = vpop.f32.mrf.mxu0
    %v4179 = vadd.f32 0.0, %v4178
    %4180 = vmatprep.mubr.f32.mxu0 %v4108
    %4181 = vmatmul.mubr.f32.gmra.mxu0 %v4102
    %v4182 = vpop.f32.mrf.mxu0
    %v4183 = vadd.f32 0.0, %v4182
    %v4184 = vpop.f32.mrf.mxu0
    %v4185 = vadd.f32 0.0, %v4184
    %4186 = vdwg.mxu0
    %v4187 = vadd.f32 %v4047, %v4177
    %v4188 = vadd.f32 %v4048, %v4179
    %v4189 = vadd.f32 %v4049, %v4183
    %v4190 = vadd.f32 %v4050, %v4185
    %v4191 = vadd.f32 %v4187, %v4189
    %v4192 = vrot.slane %v4191, 4
    %v4193 = vadd.f32 %v4191, %v4192
    %v4194 = vrot.slane %v4193, 2
    %v4195 = vadd.f32 %v4193, %v4194
    %v4196 = vrot.slane %v4195, 1
    %v4197 = vadd.f32 %v4195, %v4196
    %v4198 = vadd.f32 %v4188, %v4190
    %v4199 = vrot.slane %v4198, 4
    %v4200 = vadd.f32 %v4198, %v4199
    %v4201 = vrot.slane %v4200, 2
    %v4202 = vadd.f32 %v4200, %v4201
    %v4203 = vrot.slane %v4202, 1
    %v4204 = vadd.f32 %v4202, %v4203
    %v4205 = vmul.f32 %v4187, %v4187
    %v4206 = vmul.f32 %v4188, %v4188
    %v4207 = vmul.f32 %v4189, %v4189
    %v4208 = vmul.f32 %v4190, %v4190
    %v4209 = vadd.f32 %v4205, %v4207
    %v4210 = vrot.slane %v4209, 4
    %v4211 = vadd.f32 %v4209, %v4210
    %v4212 = vrot.slane %v4211, 2
    %v4213 = vadd.f32 %v4211, %v4212
    %v4214 = vrot.slane %v4213, 1
    %v4215 = vadd.f32 %v4213, %v4214
    %v4216 = vadd.f32 %v4206, %v4208
    %v4217 = vrot.slane %v4216, 4
    %v4218 = vadd.f32 %v4216, %v4217
    %v4219 = vrot.slane %v4218, 2
    %v4220 = vadd.f32 %v4218, %v4219
    %v4221 = vrot.slane %v4220, 1
    %v4222 = vadd.f32 %v4220, %v4221
    %v4223 = vld [vmem:[%s9] sm:$0xff]
    %v4224 = vld [vmem:[%s9 + $0x8] sm:$0xff]
    %v4225 = vld [vmem:[%s9 + $0x10] sm:$0xff]
    %v4226 = vld [vmem:[%s9 + $0x18] sm:$0xff]
    %v4227 = vld [vmem:[%s9 + $0x20] sm:$0xff]
    %v4228 = vld [vmem:[%s9 + $0x28] sm:$0xff]
    %v4229 = vld [vmem:[%s9 + $0x30] sm:$0xff]
    %v4230 = vld [vmem:[%s9 + $0x38] sm:$0xff]
    %v4231 = vld [vmem:[%s9 + $0x40] sm:$0xff]
    %v4232 = vld [vmem:[%s9 + $0x48] sm:$0xff]
    %v4233 = vld [vmem:[%s9 + $0x50] sm:$0xff]
    %v4234 = vld [vmem:[%s9 + $0x58] sm:$0xff]
    %v4235 = vld [vmem:[%s9 + $0x60] sm:$0xff]
    %v4236 = vld [vmem:[%s9 + $0x68] sm:$0xff]
    %v4237 = vld [vmem:[%s9 + $0x70] sm:$0xff]
    %v4238 = vld [vmem:[%s9 + $0x78] sm:$0xff]
    %v4239 = vld [vmem:[%s9 + $0x80] sm:$0xff]
    %v4240 = vld [vmem:[%s9 + $0x88] sm:$0xff]
    %v4241 = vld [vmem:[%s9 + $0x90] sm:$0xff]
    %v4242 = vld [vmem:[%s9 + $0x98] sm:$0xff]
    %v4243 = vld [vmem:[%s9 + $0xa0] sm:$0xff]
    %v4244 = vld [vmem:[%s9 + $0xa8] sm:$0xff]
    %v4245 = vld [vmem:[%s9 + $0xb0] sm:$0xff]
    %v4246 = vld [vmem:[%s9 + $0xb8] sm:$0xff]
    %v4247 = vld [vmem:[%s9 + $0xc0] sm:$0xff]
    %v4248 = vld [vmem:[%s9 + $0xc8] sm:$0xff]
    %v4249 = vld [vmem:[%s9 + $0xd0] sm:$0xff]
    %v4250 = vld [vmem:[%s9 + $0xd8] sm:$0xff]
    %v4251 = vld [vmem:[%s9 + $0xe0] sm:$0xff]
    %v4252 = vld [vmem:[%s9 + $0xe8] sm:$0xff]
    %v4253 = vld [vmem:[%s9 + $0xf0] sm:$0xff]
    %v4254 = vld [vmem:[%s9 + $0xf8] sm:$0xff]
    %4255 = vmatprep.subr.mxu0 0.0
    %4256 = vmatpush1.msra.mxu0 %v4238
    %4257 = vmatprep.subr.mxu0 0.0
    %4258 = vmatpush1.msra.mxu0 %v4237
    %4259 = vmatprep.subr.mxu0 0.0
    %4260 = vmatpush1.msra.mxu0 %v4236
    %4261 = vmatprep.subr.mxu0 0.0
    %4262 = vmatpush1.msra.mxu0 %v4235
    %4263 = vmatprep.subr.mxu0 0.0
    %4264 = vmatpush1.msra.mxu0 %v4234
    %4265 = vmatprep.subr.mxu0 0.0
    %4266 = vmatpush1.msra.mxu0 %v4233
    %4267 = vmatprep.subr.mxu0 0.0
    %4268 = vmatpush1.msra.mxu0 %v4232
    %4269 = vmatprep.subr.mxu0 0.0
    %4270 = vmatpush1.msra.mxu0 %v4231
    %4271 = vmatprep.subr.mxu0 0.0
    %4272 = vmatpush1.msra.mxu0 %v4230
    %4273 = vmatprep.subr.mxu0 0.0
    %4274 = vmatpush1.msra.mxu0 %v4229
    %4275 = vmatprep.subr.mxu0 0.0
    %4276 = vmatpush1.msra.mxu0 %v4228
    %4277 = vmatprep.subr.mxu0 0.0
    %4278 = vmatpush1.msra.mxu0 %v4227
    %4279 = vmatprep.subr.mxu0 0.0
    %4280 = vmatpush1.msra.mxu0 %v4226
    %4281 = vmatprep.subr.mxu0 0.0
    %4282 = vmatpush1.msra.mxu0 %v4225
    %4283 = vmatprep.subr.mxu0 0.0
    %4284 = vmatpush1.msra.mxu0 %v4224
    %4285 = vmatprep.subr.mxu0 0.0
    %4286 = vmatpush1.msra.mxu0 %v4223
    %4287 = vmatprep.subr.mxu0 0.0
    %4288 = vmatpush2.msra.mxu0 %v4254
    %4289 = vmatprep.subr.mxu0 0.0
    %4290 = vmatpush2.msra.mxu0 %v4253
    %4291 = vmatprep.subr.mxu0 0.0
    %4292 = vmatpush2.msra.mxu0 %v4252
    %4293 = vmatprep.subr.mxu0 0.0
    %4294 = vmatpush2.msra.mxu0 %v4251
    %4295 = vmatprep.subr.mxu0 0.0
    %4296 = vmatpush2.msra.mxu0 %v4250
    %4297 = vmatprep.subr.mxu0 0.0
    %4298 = vmatpush2.msra.mxu0 %v4249
    %4299 = vmatprep.subr.mxu0 0.0
    %4300 = vmatpush2.msra.mxu0 %v4248
    %4301 = vmatprep.subr.mxu0 0.0
    %4302 = vmatpush2.msra.mxu0 %v4247
    %4303 = vmatprep.subr.mxu0 0.0
    %4304 = vmatpush2.msra.mxu0 %v4246
    %4305 = vmatprep.subr.mxu0 0.0
    %4306 = vmatpush2.msra.mxu0 %v4245
    %4307 = vmatprep.subr.mxu0 0.0
    %4308 = vmatpush2.msra.mxu0 %v4244
    %4309 = vmatprep.subr.mxu0 0.0
    %4310 = vmatpush2.msra.mxu0 %v4243
    %4311 = vmatprep.subr.mxu0 0.0
    %4312 = vmatpush2.msra.mxu0 %v4242
    %4313 = vmatprep.subr.mxu0 0.0
    %4314 = vmatpush2.msra.mxu0 %v4241
    %4315 = vmatprep.subr.mxu0 0.0
    %4316 = vmatpush2.msra.mxu0 %v4240
    %4317 = vmatprep.subr.mxu0 0.0
    %4318 = vmatpush2.msra.mxu0 %v4239
    %4319 = vmatprep.mubr.f32.mxu0 %v4204
    %4320 = vmatmul.mubr.f32.gmra.mxu0 %v4197
    %v4321 = vpop.f32.mrf.mxu0
    %v4322 = vadd.f32 0.0, %v4321
    %v4323 = vpop.f32.mrf.mxu0
    %4324 = vdwg.mxu0
    %4325 = vmatprep.subr.mxu0 0.0
    %4326 = vmatpush1.msra.mxu0 %v4238
    %4327 = vmatprep.subr.mxu0 0.0
    %4328 = vmatpush1.msra.mxu0 %v4237
    %4329 = vmatprep.subr.mxu0 0.0
    %4330 = vmatpush1.msra.mxu0 %v4236
    %4331 = vmatprep.subr.mxu0 0.0
    %4332 = vmatpush1.msra.mxu0 %v4235
    %4333 = vmatprep.subr.mxu0 0.0
    %4334 = vmatpush1.msra.mxu0 %v4234
    %4335 = vmatprep.subr.mxu0 0.0
    %4336 = vmatpush1.msra.mxu0 %v4233
    %4337 = vmatprep.subr.mxu0 0.0
    %4338 = vmatpush1.msra.mxu0 %v4232
    %4339 = vmatprep.subr.mxu0 0.0
    %4340 = vmatpush1.msra.mxu0 %v4231
    %4341 = vmatprep.subr.mxu0 0.0
    %4342 = vmatpush1.msra.mxu0 %v4230
    %4343 = vmatprep.subr.mxu0 0.0
    %4344 = vmatpush1.msra.mxu0 %v4229
    %4345 = vmatprep.subr.mxu0 0.0
    %4346 = vmatpush1.msra.mxu0 %v4228
    %4347 = vmatprep.subr.mxu0 0.0
    %4348 = vmatpush1.msra.mxu0 %v4227
    %4349 = vmatprep.subr.mxu0 0.0
    %4350 = vmatpush1.msra.mxu0 %v4226
    %4351 = vmatprep.subr.mxu0 0.0
    %4352 = vmatpush1.msra.mxu0 %v4225
    %4353 = vmatprep.subr.mxu0 0.0
    %4354 = vmatpush1.msra.mxu0 %v4224
    %4355 = vmatprep.subr.mxu0 0.0
    %4356 = vmatpush1.msra.mxu0 %v4223
    %4357 = vmatprep.subr.mxu0 0.0
    %4358 = vmatpush2.msra.mxu0 %v4254
    %4359 = vmatprep.subr.mxu0 0.0
    %4360 = vmatpush2.msra.mxu0 %v4253
    %4361 = vmatprep.subr.mxu0 0.0
    %4362 = vmatpush2.msra.mxu0 %v4252
    %4363 = vmatprep.subr.mxu0 0.0
    %4364 = vmatpush2.msra.mxu0 %v4251
    %4365 = vmatprep.subr.mxu0 0.0
    %4366 = vmatpush2.msra.mxu0 %v4250
    %4367 = vmatprep.subr.mxu0 0.0
    %4368 = vmatpush2.msra.mxu0 %v4249
    %4369 = vmatprep.subr.mxu0 0.0
    %4370 = vmatpush2.msra.mxu0 %v4248
    %4371 = vmatprep.subr.mxu0 0.0
    %4372 = vmatpush2.msra.mxu0 %v4247
    %4373 = vmatprep.subr.mxu0 0.0
    %4374 = vmatpush2.msra.mxu0 %v4246
    %4375 = vmatprep.subr.mxu0 0.0
    %4376 = vmatpush2.msra.mxu0 %v4245
    %4377 = vmatprep.subr.mxu0 0.0
    %4378 = vmatpush2.msra.mxu0 %v4244
    %4379 = vmatprep.subr.mxu0 0.0
    %4380 = vmatpush2.msra.mxu0 %v4243
    %4381 = vmatprep.subr.mxu0 0.0
    %4382 = vmatpush2.msra.mxu0 %v4242
    %4383 = vmatprep.subr.mxu0 0.0
    %4384 = vmatpush2.msra.mxu0 %v4241
    %4385 = vmatprep.subr.mxu0 0.0
    %4386 = vmatpush2.msra.mxu0 %v4240
    %4387 = vmatprep.subr.mxu0 0.0
    %4388 = vmatpush2.msra.mxu0 %v4239
    %4389 = vmatprep.mubr.f32.mxu0 %v4222
    %4390 = vmatmul.mubr.f32.gmra.mxu0 %v4215
    %v4391 = vpop.f32.mrf.mxu0
    %v4392 = vadd.f32 0.0, %v4391
    %v4393 = vpop.f32.mrf.mxu0
    %4394 = vdwg.mxu0
    %v4395 = vrcp.pop 128.0
    %v4396 = vmul.f32 %v4322, %v4395
    %v4397 = vmul.f32 %v4392, %v4395
    %v4398 = vmul.f32 %v4396, %v4396
    %v4399 = vsub.f32 %v4397, %v4398
    %v4400 = vld [vmem:[#allocation5] sm:$0x1]
    %v4401 = vadd.f32 %v4399, 1e-05
    %v4402 = vrsqrt.pop %v4401
    %v4403 = vmul.f32 %v4400, %v4402
    %v4404 = vld [vmem:[#allocation7] sm:$0x1]
    %v4405 = vmul.f32 %v4396, %v4403
    %v4406 = vsub.f32 %v4404, %v4405
    %v4407 = vld [vmem:[%s10] sm:$0xff]
    %v4408 = vld [vmem:[%s10 + $0x8] sm:$0xff]
    %v4409 = vld [vmem:[%s10 + $0x10] sm:$0xff]
    %v4410 = vld [vmem:[%s10 + $0x18] sm:$0xff]
    %v4411 = vld [vmem:[%s10 + $0x20] sm:$0xff]
    %v4412 = vld [vmem:[%s10 + $0x28] sm:$0xff]
    %v4413 = vld [vmem:[%s10 + $0x30] sm:$0xff]
    %v4414 = vld [vmem:[%s10 + $0x38] sm:$0xff]
    %vm4415 = vcmask 261120
    %v4417 = vsel %vm4415, %v4403, 0
    %4419 = vmatprep.subr.mxu0 0.0
    %4420 = vmatpush1.msra.mxu0 0.0
    %4421 = vmatprep.subr.mxu0 0.0
    %4422 = vmatpush1.msra.mxu0 0.0
    %4423 = vmatprep.subr.mxu0 0.0
    %4424 = vmatpush1.msra.mxu0 0.0
    %4425 = vmatprep.subr.mxu0 0.0
    %4426 = vmatpush1.msra.mxu0 0.0
    %4427 = vmatprep.subr.mxu0 0.0
    %4428 = vmatpush1.msra.mxu0 0.0
    %4429 = vmatprep.subr.mxu0 0.0
    %4430 = vmatpush1.msra.mxu0 0.0
    %4431 = vmatprep.subr.mxu0 0.0
    %4432 = vmatpush1.msra.mxu0 0.0
    %4433 = vmatprep.subr.mxu0 0.0
    %4434 = vmatpush1.msra.mxu0 0.0
    %4435 = vmatprep.subr.mxu0 0.0
    %4436 = vmatpush1.msra.mxu0 0.0
    %4437 = vmatprep.subr.mxu0 0.0
    %4438 = vmatpush1.msra.mxu0 0.0
    %4439 = vmatprep.subr.mxu0 0.0
    %4440 = vmatpush1.msra.mxu0 0.0
    %4441 = vmatprep.subr.mxu0 0.0
    %4442 = vmatpush1.msra.mxu0 0.0
    %4443 = vmatprep.subr.mxu0 %v4414
    %4444 = vmatpush1.msra.mxu0 %v4413
    %4445 = vmatprep.subr.mxu0 %v4412
    %4446 = vmatpush1.msra.mxu0 %v4411
    %4447 = vmatprep.subr.mxu0 %v4410
    %4448 = vmatpush1.msra.mxu0 %v4409
    %4449 = vmatprep.subr.mxu0 %v4408
    %4450 = vmatpush1.msra.mxu0 %v4407
    %4451 = vmatprep.subr.mxu0 0.0
    %4452 = vmatpush2.msra.mxu0 0.0
    %4453 = vmatprep.subr.mxu0 0.0
    %4454 = vmatpush2.msra.mxu0 0.0
    %4455 = vmatprep.subr.mxu0 0.0
    %4456 = vmatpush2.msra.mxu0 0.0
    %4457 = vmatprep.subr.mxu0 0.0
    %4458 = vmatpush2.msra.mxu0 0.0
    %4459 = vmatprep.subr.mxu0 0.0
    %4460 = vmatpush2.msra.mxu0 0.0
    %4461 = vmatprep.subr.mxu0 0.0
    %4462 = vmatpush2.msra.mxu0 0.0
    %4463 = vmatprep.subr.mxu0 0.0
    %4464 = vmatpush2.msra.mxu0 0.0
    %4465 = vmatprep.subr.mxu0 0.0
    %4466 = vmatpush2.msra.mxu0 0.0
    %4467 = vmatprep.subr.mxu0 0.0
    %4468 = vmatpush2.msra.mxu0 0.0
    %4469 = vmatprep.subr.mxu0 0.0
    %4470 = vmatpush2.msra.mxu0 0.0
    %4471 = vmatprep.subr.mxu0 0.0
    %4472 = vmatpush2.msra.mxu0 0.0
    %4473 = vmatprep.subr.mxu0 0.0
    %4474 = vmatpush2.msra.mxu0 0.0
    %4475 = vmatprep.subr.mxu0 0.0
    %4476 = vmatpush2.msra.mxu0 0.0
    %4477 = vmatprep.subr.mxu0 0.0
    %4478 = vmatpush2.msra.mxu0 0.0
    %4479 = vmatprep.subr.mxu0 0.0
    %4480 = vmatpush2.msra.mxu0 0.0
    %4481 = vmatprep.subr.mxu0 0.0
    %4482 = vmatpush2.msra.mxu0 0.0
    %4483 = vmatprep.mubr.f32.mxu0 0.0
    %4484 = vmatmul.mubr.f32.gmra.mxu0 %v4417
    %v4485 = vpop.f32.mrf.mxu0
    %v4486 = vadd.f32 0.0, %v4485
    %v4487 = vpop.f32.mrf.mxu0
    %v4488 = vadd.f32 0.0, %v4487
    %4489 = vdwg.mxu0
    %v4491 = vsel %vm4415, %v4406, 0
    %4493 = vmatprep.subr.mxu0 0.0
    %4494 = vmatpush1.msra.mxu0 0.0
    %4495 = vmatprep.subr.mxu0 0.0
    %4496 = vmatpush1.msra.mxu0 0.0
    %4497 = vmatprep.subr.mxu0 0.0
    %4498 = vmatpush1.msra.mxu0 0.0
    %4499 = vmatprep.subr.mxu0 0.0
    %4500 = vmatpush1.msra.mxu0 0.0
    %4501 = vmatprep.subr.mxu0 0.0
    %4502 = vmatpush1.msra.mxu0 0.0
    %4503 = vmatprep.subr.mxu0 0.0
    %4504 = vmatpush1.msra.mxu0 0.0
    %4505 = vmatprep.subr.mxu0 0.0
    %4506 = vmatpush1.msra.mxu0 0.0
    %4507 = vmatprep.subr.mxu0 0.0
    %4508 = vmatpush1.msra.mxu0 0.0
    %4509 = vmatprep.subr.mxu0 0.0
    %4510 = vmatpush1.msra.mxu0 0.0
    %4511 = vmatprep.subr.mxu0 0.0
    %4512 = vmatpush1.msra.mxu0 0.0
    %4513 = vmatprep.subr.mxu0 0.0
    %4514 = vmatpush1.msra.mxu0 0.0
    %4515 = vmatprep.subr.mxu0 0.0
    %4516 = vmatpush1.msra.mxu0 0.0
    %4517 = vmatprep.subr.mxu0 %v4414
    %4518 = vmatpush1.msra.mxu0 %v4413
    %4519 = vmatprep.subr.mxu0 %v4412
    %4520 = vmatpush1.msra.mxu0 %v4411
    %4521 = vmatprep.subr.mxu0 %v4410
    %4522 = vmatpush1.msra.mxu0 %v4409
    %4523 = vmatprep.subr.mxu0 %v4408
    %4524 = vmatpush1.msra.mxu0 %v4407
    %4525 = vmatprep.subr.mxu0 0.0
    %4526 = vmatpush2.msra.mxu0 0.0
    %4527 = vmatprep.subr.mxu0 0.0
    %4528 = vmatpush2.msra.mxu0 0.0
    %4529 = vmatprep.subr.mxu0 0.0
    %4530 = vmatpush2.msra.mxu0 0.0
    %4531 = vmatprep.subr.mxu0 0.0
    %4532 = vmatpush2.msra.mxu0 0.0
    %4533 = vmatprep.subr.mxu0 0.0
    %4534 = vmatpush2.msra.mxu0 0.0
    %4535 = vmatprep.subr.mxu0 0.0
    %4536 = vmatpush2.msra.mxu0 0.0
    %4537 = vmatprep.subr.mxu0 0.0
    %4538 = vmatpush2.msra.mxu0 0.0
    %4539 = vmatprep.subr.mxu0 0.0
    %4540 = vmatpush2.msra.mxu0 0.0
    %4541 = vmatprep.subr.mxu0 0.0
    %4542 = vmatpush2.msra.mxu0 0.0
    %4543 = vmatprep.subr.mxu0 0.0
    %4544 = vmatpush2.msra.mxu0 0.0
    %4545 = vmatprep.subr.mxu0 0.0
    %4546 = vmatpush2.msra.mxu0 0.0
    %4547 = vmatprep.subr.mxu0 0.0
    %4548 = vmatpush2.msra.mxu0 0.0
    %4549 = vmatprep.subr.mxu0 0.0
    %4550 = vmatpush2.msra.mxu0 0.0
    %4551 = vmatprep.subr.mxu0 0.0
    %4552 = vmatpush2.msra.mxu0 0.0
    %4553 = vmatprep.subr.mxu0 0.0
    %4554 = vmatpush2.msra.mxu0 0.0
    %4555 = vmatprep.subr.mxu0 0.0
    %4556 = vmatpush2.msra.mxu0 0.0
    %4557 = vmatprep.mubr.f32.mxu0 0.0
    %4558 = vmatmul.mubr.f32.gmra.mxu0 %v4491
    %v4559 = vpop.f32.mrf.mxu0
    %v4560 = vadd.f32 0.0, %v4559
    %v4561 = vpop.f32.mrf.mxu0
    %v4562 = vadd.f32 0.0, %v4561
    %4563 = vdwg.mxu0
    %v4564 = vlaneseq
    %v4565 = vshrl.u32 %v4564, 7
    %v4566 = vsub.s32 0, %v4565
    %v4567 = vrot.slane %v4486, %v4566
    %v4568 = vlaneseq
    %v4569 = vshrl.u32 %v4568, 7
    %v4570 = vsub.s32 0, %v4569
    %v4571 = vrot.slane %v4488, %v4570
    %v4572 = vmul.f32 %v4187, %v4567
    %v4573 = vmul.f32 %v4188, %v4571
    %v4574 = vmul.f32 %v4189, %v4567
    %v4575 = vmul.f32 %v4190, %v4571
    %v4576 = vlaneseq
    %v4577 = vshrl.u32 %v4576, 7
    %v4578 = vsub.s32 0, %v4577
    %v4579 = vrot.slane %v4560, %v4578
    %v4580 = vlaneseq
    %v4581 = vshrl.u32 %v4580, 7
    %v4582 = vsub.s32 0, %v4581
    %v4583 = vrot.slane %v4562, %v4582
    %v4584 = vadd.f32 %v4572, %v4579
    %v4585 = vadd.f32 %v4573, %v4583
    %v4586 = vadd.f32 %v4574, %v4579
    %v4587 = vadd.f32 %v4575, %v4583
    %v4588 = vmax.f32 %v4584, 0.0
    %v4589 = vmax.f32 %v4585, 0.0
    %v4590 = vmax.f32 %v4586, 0.0
    %v4591 = vmax.f32 %v4587, 0.0
    %v4596 = vcombine.low %v4588, %v4589
    %v4597 = vcombine.high %v4588, %v4589
    %v4599 = vunpack.c.l.s4 1983009808
    %v4600 = vunpack.c.0.s8 %v4599
    %v4601 = vlaneseq
    %v4602 = vshrl.u32 %v4601, 7
    %v4603 = vsub.s32 %v4600, %v4602
    %v4604 = vrot.slane %v4596, %v4603
    %v4606 = vunpack.c.l.s4 1983009808
    %v4607 = vunpack.c.0.s8 %v4606
    %v4608 = vlaneseq
    %v4609 = vshrl.u32 %v4608, 7
    %v4610 = vsub.s32 %v4607, %v4609
    %v4611 = vrot.slane %v4597, %v4610
    %v4612 = vcombine.high %v4604, %v4604
    %v4613 = vcombine.high %v4611, %v4611
    %v4614 = vcombine.low %v4590, %v4591
    %v4615 = vcombine.high %v4590, %v4591
    %v4617 = vunpack.c.l.s4 1983009808
    %v4618 = vunpack.c.0.s8 %v4617
    %v4619 = vlaneseq
    %v4620 = vshrl.u32 %v4619, 7
    %v4621 = vsub.s32 %v4618, %v4620
    %v4622 = vrot.slane %v4614, %v4621
    %v4624 = vunpack.c.l.s4 1983009808
    %v4625 = vunpack.c.0.s8 %v4624
    %v4626 = vlaneseq
    %v4627 = vshrl.u32 %v4626, 7
    %v4628 = vsub.s32 %v4625, %v4627
    %v4629 = vrot.slane %v4615, %v4628
    %v4630 = vcombine.high %v4622, %v4622
    %v4631 = vcombine.high %v4629, %v4629
    %v4640 = vrot.slane %v4604, 7
    %v4641 = vrot.slane %v4640, 2
    %v4642 = vrot.slane %v4612, 7
    %v4643 = vrot.slane %v4642, 2
    %v4644 = vrot.slane %v4611, 7
    %v4645 = vrot.slane %v4644, 2
    %v4646 = vrot.slane %v4613, 7
    %v4647 = vrot.slane %v4646, 2
    %v4648 = vrot.slane %v4622, 7
    %v4649 = vrot.slane %v4648, 2
    %v4650 = vrot.slane %v4630, 7
    %v4651 = vrot.slane %v4650, 2
    %v4652 = vrot.slane %v4629, 7
    %v4653 = vrot.slane %v4652, 2
    %v4654 = vrot.slane %v4631, 7
    %v4655 = vrot.slane %v4654, 2
    %v4664 = vmax.f32 %v4604, %v4641
    %v4665 = vmax.f32 %v4612, %v4643
    %v4666 = vmax.f32 %v4611, %v4645
    %v4667 = vmax.f32 %v4613, %v4647
    %v4668 = vmax.f32 %v4622, %v4649
    %v4669 = vmax.f32 %v4630, %v4651
    %v4670 = vmax.f32 %v4629, %v4653
    %v4671 = vmax.f32 %v4631, %v4655
    %v4672 = vld [vmem:[%s13] sm:$0xff]
    %v4673 = vld [vmem:[%s13 + $0x8] sm:$0xff]
    %v4674 = vld [vmem:[%s13 + $0x10] sm:$0xff]
    %v4675 = vld [vmem:[%s13 + $0x18] sm:$0xff]
    %v4676 = vld [vmem:[%s13 + $0x20] sm:$0xff]
    %v4677 = vld [vmem:[%s13 + $0x28] sm:$0xff]
    %v4678 = vld [vmem:[%s13 + $0x30] sm:$0xff]
    %v4679 = vld [vmem:[%s13 + $0x38] sm:$0xff]
    %v4680 = vld [vmem:[%s13 + $0x40] sm:$0xff]
    %v4681 = vld [vmem:[%s13 + $0x48] sm:$0xff]
    %v4682 = vld [vmem:[%s13 + $0x50] sm:$0xff]
    %v4683 = vld [vmem:[%s13 + $0x58] sm:$0xff]
    %v4684 = vld [vmem:[%s13 + $0x60] sm:$0xff]
    %v4685 = vld [vmem:[%s13 + $0x68] sm:$0xff]
    %v4686 = vld [vmem:[%s13 + $0x70] sm:$0xff]
    %v4687 = vld [vmem:[%s13 + $0x78] sm:$0xff]
    %v4688 = vld [vmem:[%s13 + $0x80] sm:$0xff]
    %v4689 = vld [vmem:[%s13 + $0x88] sm:$0xff]
    %v4690 = vld [vmem:[%s13 + $0x90] sm:$0xff]
    %v4691 = vld [vmem:[%s13 + $0x98] sm:$0xff]
    %v4692 = vld [vmem:[%s13 + $0xa0] sm:$0xff]
    %v4693 = vld [vmem:[%s13 + $0xa8] sm:$0xff]
    %v4694 = vld [vmem:[%s13 + $0xb0] sm:$0xff]
    %v4695 = vld [vmem:[%s13 + $0xb8] sm:$0xff]
    %v4696 = vld [vmem:[%s13 + $0xc0] sm:$0xff]
    %v4697 = vld [vmem:[%s13 + $0xc8] sm:$0xff]
    %v4698 = vld [vmem:[%s13 + $0xd0] sm:$0xff]
    %v4699 = vld [vmem:[%s13 + $0xd8] sm:$0xff]
    %v4700 = vld [vmem:[%s13 + $0xe0] sm:$0xff]
    %v4701 = vld [vmem:[%s13 + $0xe8] sm:$0xff]
    %v4702 = vld [vmem:[%s13 + $0xf0] sm:$0xff]
    %v4703 = vld [vmem:[%s13 + $0xf8] sm:$0xff]
    %v4712 = vlaneseq
    %v4713 = vshrl.u32 %v4712, 7
    %v4714 = vsub.s32 0, %v4713
    %v4715 = vrot.slane %v4664, %v4714
    %v4716 = vlaneseq
    %v4717 = vshrl.u32 %v4716, 7
    %v4718 = vsub.s32 2, %v4717
    %v4719 = vrot.slane %v4664, %v4718
    %v4720 = vlaneseq
    %v4721 = vshrl.u32 %v4720, 7
    %v4722 = vsub.s32 0, %v4721
    %v4723 = vrot.slane %v4665, %v4722
    %v4724 = vlaneseq
    %v4725 = vshrl.u32 %v4724, 7
    %v4726 = vsub.s32 2, %v4725
    %v4727 = vrot.slane %v4665, %v4726
    %v4728 = vlaneseq
    %v4729 = vshrl.u32 %v4728, 7
    %v4730 = vsub.s32 0, %v4729
    %v4731 = vrot.slane %v4666, %v4730
    %v4732 = vlaneseq
    %v4733 = vshrl.u32 %v4732, 7
    %v4734 = vsub.s32 2, %v4733
    %v4735 = vrot.slane %v4666, %v4734
    %v4736 = vlaneseq
    %v4737 = vshrl.u32 %v4736, 7
    %v4738 = vsub.s32 0, %v4737
    %v4739 = vrot.slane %v4667, %v4738
    %v4740 = vlaneseq
    %v4741 = vshrl.u32 %v4740, 7
    %v4742 = vsub.s32 2, %v4741
    %v4743 = vrot.slane %v4667, %v4742
    %v4744 = vlaneseq
    %v4745 = vshrl.u32 %v4744, 7
    %v4746 = vsub.s32 0, %v4745
    %v4747 = vrot.slane %v4668, %v4746
    %v4748 = vlaneseq
    %v4749 = vshrl.u32 %v4748, 7
    %v4750 = vsub.s32 2, %v4749
    %v4751 = vrot.slane %v4668, %v4750
    %v4752 = vlaneseq
    %v4753 = vshrl.u32 %v4752, 7
    %v4754 = vsub.s32 0, %v4753
    %v4755 = vrot.slane %v4669, %v4754
    %v4756 = vlaneseq
    %v4757 = vshrl.u32 %v4756, 7
    %v4758 = vsub.s32 2, %v4757
    %v4759 = vrot.slane %v4669, %v4758
    %v4760 = vlaneseq
    %v4761 = vshrl.u32 %v4760, 7
    %v4762 = vsub.s32 0, %v4761
    %v4763 = vrot.slane %v4670, %v4762
    %v4764 = vlaneseq
    %v4765 = vshrl.u32 %v4764, 7
    %v4766 = vsub.s32 2, %v4765
    %v4767 = vrot.slane %v4670, %v4766
    %v4768 = vlaneseq
    %v4769 = vshrl.u32 %v4768, 7
    %v4770 = vsub.s32 0, %v4769
    %v4771 = vrot.slane %v4671, %v4770
    %v4772 = vlaneseq
    %v4773 = vshrl.u32 %v4772, 7
    %v4774 = vsub.s32 2, %v4773
    %v4775 = vrot.slane %v4671, %v4774
    %v4776 = vsel %vm2924, %v4723, %v4715
    %v4777 = vsel %vm2926, %v4731, %v4776
    %v4778 = vsel %vm2928, %v4739, %v4777
    %v4779 = vsel %vm2930, %v4747, %v4778
    %v4780 = vsel %vm2932, %v4755, %v4779
    %v4781 = vsel %vm2934, %v4763, %v4780
    %v4782 = vsel %vm2936, %v4771, %v4781
    %v4783 = vsel %vm2924, %v4727, %v4719
    %v4784 = vsel %vm2926, %v4735, %v4783
    %v4785 = vsel %vm2928, %v4743, %v4784
    %v4786 = vsel %vm2930, %v4751, %v4785
    %v4787 = vsel %vm2932, %v4759, %v4786
    %v4788 = vsel %vm2934, %v4767, %v4787
    %v4789 = vsel %vm2936, %v4775, %v4788
    %4792 = vmatprep.subr.mxu0 0.0
    %4793 = vmatpush1.msra.mxu0 %v4687
    %4794 = vmatprep.subr.mxu0 0.0
    %4795 = vmatpush1.msra.mxu0 %v4686
    %4796 = vmatprep.subr.mxu0 0.0
    %4797 = vmatpush1.msra.mxu0 %v4685
    %4798 = vmatprep.subr.mxu0 0.0
    %4799 = vmatpush1.msra.mxu0 %v4684
    %4800 = vmatprep.subr.mxu0 0.0
    %4801 = vmatpush1.msra.mxu0 %v4683
    %4802 = vmatprep.subr.mxu0 0.0
    %4803 = vmatpush1.msra.mxu0 %v4682
    %4804 = vmatprep.subr.mxu0 0.0
    %4805 = vmatpush1.msra.mxu0 %v4681
    %4806 = vmatprep.subr.mxu0 0.0
    %4807 = vmatpush1.msra.mxu0 %v4680
    %4808 = vmatprep.subr.mxu0 0.0
    %4809 = vmatpush1.msra.mxu0 %v4679
    %4810 = vmatprep.subr.mxu0 0.0
    %4811 = vmatpush1.msra.mxu0 %v4678
    %4812 = vmatprep.subr.mxu0 0.0
    %4813 = vmatpush1.msra.mxu0 %v4677
    %4814 = vmatprep.subr.mxu0 0.0
    %4815 = vmatpush1.msra.mxu0 %v4676
    %4816 = vmatprep.subr.mxu0 0.0
    %4817 = vmatpush1.msra.mxu0 %v4675
    %4818 = vmatprep.subr.mxu0 0.0
    %4819 = vmatpush1.msra.mxu0 %v4674
    %4820 = vmatprep.subr.mxu0 0.0
    %4821 = vmatpush1.msra.mxu0 %v4673
    %4822 = vmatprep.subr.mxu0 0.0
    %4823 = vmatpush1.msra.mxu0 %v4672
    %4824 = vmatprep.subr.mxu0 0.0
    %4825 = vmatpush2.msra.mxu0 %v4703
    %4826 = vmatprep.subr.mxu0 0.0
    %4827 = vmatpush2.msra.mxu0 %v4702
    %4828 = vmatprep.subr.mxu0 0.0
    %4829 = vmatpush2.msra.mxu0 %v4701
    %4830 = vmatprep.subr.mxu0 0.0
    %4831 = vmatpush2.msra.mxu0 %v4700
    %4832 = vmatprep.subr.mxu0 0.0
    %4833 = vmatpush2.msra.mxu0 %v4699
    %4834 = vmatprep.subr.mxu0 0.0
    %4835 = vmatpush2.msra.mxu0 %v4698
    %4836 = vmatprep.subr.mxu0 0.0
    %4837 = vmatpush2.msra.mxu0 %v4697
    %4838 = vmatprep.subr.mxu0 0.0
    %4839 = vmatpush2.msra.mxu0 %v4696
    %4840 = vmatprep.subr.mxu0 0.0
    %4841 = vmatpush2.msra.mxu0 %v4695
    %4842 = vmatprep.subr.mxu0 0.0
    %4843 = vmatpush2.msra.mxu0 %v4694
    %4844 = vmatprep.subr.mxu0 0.0
    %4845 = vmatpush2.msra.mxu0 %v4693
    %4846 = vmatprep.subr.mxu0 0.0
    %4847 = vmatpush2.msra.mxu0 %v4692
    %4848 = vmatprep.subr.mxu0 0.0
    %4849 = vmatpush2.msra.mxu0 %v4691
    %4850 = vmatprep.subr.mxu0 0.0
    %4851 = vmatpush2.msra.mxu0 %v4690
    %4852 = vmatprep.subr.mxu0 0.0
    %4853 = vmatpush2.msra.mxu0 %v4689
    %4854 = vmatprep.subr.mxu0 0.0
    %4855 = vmatpush2.msra.mxu0 %v4688
    %4856 = vmatprep.mubr.f32.mxu0 %v4789
    %4857 = vmatmul.mubr.f32.gmra.mxu0 %v4782
    %v4858 = vpop.f32.mrf.mxu0
    %v4859 = vadd.f32 0.0, %v4858
    %v4860 = vpop.f32.mrf.mxu0
    %4861 = vdwg.mxu0
    %v4862 = vld [vmem:[%s14] sm:$0xff]
    %v4863 = vld [vmem:[%s14 + $0x8] sm:$0xff]
    %v4864 = vld [vmem:[%s14 + $0x10] sm:$0xff]
    %v4865 = vld [vmem:[%s14 + $0x18] sm:$0xff]
    %v4866 = vld [vmem:[%s14 + $0x20] sm:$0xff]
    %v4867 = vld [vmem:[%s14 + $0x28] sm:$0xff]
    %v4868 = vld [vmem:[%s14 + $0x30] sm:$0xff]
    %v4869 = vld [vmem:[%s14 + $0x38] sm:$0xff]
    %v4870 = vld [vmem:[%s14 + $0x40] sm:$0xff]
    %v4871 = vld [vmem:[%s14 + $0x48] sm:$0xff]
    %v4872 = vld [vmem:[%s14 + $0x50] sm:$0xff]
    %v4873 = vld [vmem:[%s14 + $0x58] sm:$0xff]
    %v4874 = vld [vmem:[%s14 + $0x60] sm:$0xff]
    %v4875 = vld [vmem:[%s14 + $0x68] sm:$0xff]
    %v4876 = vld [vmem:[%s14 + $0x70] sm:$0xff]
    %v4877 = vld [vmem:[%s14 + $0x78] sm:$0xff]
    %v4878 = vld [vmem:[%s14 + $0x80] sm:$0xff]
    %v4879 = vld [vmem:[%s14 + $0x88] sm:$0xff]
    %v4880 = vld [vmem:[%s14 + $0x90] sm:$0xff]
    %v4881 = vld [vmem:[%s14 + $0x98] sm:$0xff]
    %v4882 = vld [vmem:[%s14 + $0xa0] sm:$0xff]
    %v4883 = vld [vmem:[%s14 + $0xa8] sm:$0xff]
    %v4884 = vld [vmem:[%s14 + $0xb0] sm:$0xff]
    %v4885 = vld [vmem:[%s14 + $0xb8] sm:$0xff]
    %v4886 = vld [vmem:[%s14 + $0xc0] sm:$0xff]
    %v4887 = vld [vmem:[%s14 + $0xc8] sm:$0xff]
    %v4888 = vld [vmem:[%s14 + $0xd0] sm:$0xff]
    %v4889 = vld [vmem:[%s14 + $0xd8] sm:$0xff]
    %v4890 = vld [vmem:[%s14 + $0xe0] sm:$0xff]
    %v4891 = vld [vmem:[%s14 + $0xe8] sm:$0xff]
    %v4892 = vld [vmem:[%s14 + $0xf0] sm:$0xff]
    %v4893 = vld [vmem:[%s14 + $0xf8] sm:$0xff]
    %4894 = vmatprep.subr.mxu0 0.0
    %4895 = vmatpush1.msra.mxu0 %v4877
    %4896 = vmatprep.subr.mxu0 0.0
    %4897 = vmatpush1.msra.mxu0 %v4876
    %4898 = vmatprep.subr.mxu0 0.0
    %4899 = vmatpush1.msra.mxu0 %v4875
    %4900 = vmatprep.subr.mxu0 0.0
    %4901 = vmatpush1.msra.mxu0 %v4874
    %4902 = vmatprep.subr.mxu0 0.0
    %4903 = vmatpush1.msra.mxu0 %v4873
    %4904 = vmatprep.subr.mxu0 0.0
    %4905 = vmatpush1.msra.mxu0 %v4872
    %4906 = vmatprep.subr.mxu0 0.0
    %4907 = vmatpush1.msra.mxu0 %v4871
    %4908 = vmatprep.subr.mxu0 0.0
    %4909 = vmatpush1.msra.mxu0 %v4870
    %4910 = vmatprep.subr.mxu0 0.0
    %4911 = vmatpush1.msra.mxu0 %v4869
    %4912 = vmatprep.subr.mxu0 0.0
    %4913 = vmatpush1.msra.mxu0 %v4868
    %4914 = vmatprep.subr.mxu0 0.0
    %4915 = vmatpush1.msra.mxu0 %v4867
    %4916 = vmatprep.subr.mxu0 0.0
    %4917 = vmatpush1.msra.mxu0 %v4866
    %4918 = vmatprep.subr.mxu0 0.0
    %4919 = vmatpush1.msra.mxu0 %v4865
    %4920 = vmatprep.subr.mxu0 0.0
    %4921 = vmatpush1.msra.mxu0 %v4864
    %4922 = vmatprep.subr.mxu0 0.0
    %4923 = vmatpush1.msra.mxu0 %v4863
    %4924 = vmatprep.subr.mxu0 0.0
    %4925 = vmatpush1.msra.mxu0 %v4862
    %4926 = vmatprep.subr.mxu0 0.0
    %4927 = vmatpush2.msra.mxu0 %v4893
    %4928 = vmatprep.subr.mxu0 0.0
    %4929 = vmatpush2.msra.mxu0 %v4892
    %4930 = vmatprep.subr.mxu0 0.0
    %4931 = vmatpush2.msra.mxu0 %v4891
    %4932 = vmatprep.subr.mxu0 0.0
    %4933 = vmatpush2.msra.mxu0 %v4890
    %4934 = vmatprep.subr.mxu0 0.0
    %4935 = vmatpush2.msra.mxu0 %v4889
    %4936 = vmatprep.subr.mxu0 0.0
    %4937 = vmatpush2.msra.mxu0 %v4888
    %4938 = vmatprep.subr.mxu0 0.0
    %4939 = vmatpush2.msra.mxu0 %v4887
    %4940 = vmatprep.subr.mxu0 0.0
    %4941 = vmatpush2.msra.mxu0 %v4886
    %4942 = vmatprep.subr.mxu0 0.0
    %4943 = vmatpush2.msra.mxu0 %v4885
    %4944 = vmatprep.subr.mxu0 0.0
    %4945 = vmatpush2.msra.mxu0 %v4884
    %4946 = vmatprep.subr.mxu0 0.0
    %4947 = vmatpush2.msra.mxu0 %v4883
    %4948 = vmatprep.subr.mxu0 0.0
    %4949 = vmatpush2.msra.mxu0 %v4882
    %4950 = vmatprep.subr.mxu0 0.0
    %4951 = vmatpush2.msra.mxu0 %v4881
    %4952 = vmatprep.subr.mxu0 0.0
    %4953 = vmatpush2.msra.mxu0 %v4880
    %4954 = vmatprep.subr.mxu0 0.0
    %4955 = vmatpush2.msra.mxu0 %v4879
    %4956 = vmatprep.subr.mxu0 0.0
    %4957 = vmatpush2.msra.mxu0 %v4878
    %4958 = vmatprep.mubr.f32.mxu0 %v4789
    %4959 = vmatmul.mubr.f32.gmra.mxu0 %v4782
    %v4960 = vpop.f32.mrf.mxu0
    %v4961 = vadd.f32 0.0, %v4960
    %v4962 = vpop.f32.mrf.mxu0
    %4963 = vdwg.mxu0
    %v4964 = vmax.f32 %v4859, %v4961
    %v4966 = vcombine.high %v4964, %v4964
    %v4967 = vld [vmem:[%s15] sm:$0xff]
    %v4968 = vld [vmem:[%s15 + $0x8] sm:$0xff]
    %v4969 = vld [vmem:[%s15 + $0x10] sm:$0xff]
    %v4970 = vld [vmem:[%s15 + $0x18] sm:$0xff]
    %v4971 = vld [vmem:[%s15 + $0x20] sm:$0xff]
    %v4972 = vld [vmem:[%s15 + $0x28] sm:$0xff]
    %v4973 = vld [vmem:[%s15 + $0x30] sm:$0xff]
    %v4974 = vld [vmem:[%s15 + $0x38] sm:$0xff]
    %v4975 = vld [vmem:[%s15 + $0x40] sm:$0xff]
    %v4976 = vld [vmem:[%s15 + $0x48] sm:$0xff]
    %v4977 = vld [vmem:[%s15 + $0x50] sm:$0xff]
    %v4978 = vld [vmem:[%s15 + $0x58] sm:$0xff]
    %v4979 = vld [vmem:[%s15 + $0x60] sm:$0xff]
    %v4980 = vld [vmem:[%s15 + $0x68] sm:$0xff]
    %v4981 = vld [vmem:[%s15 + $0x70] sm:$0xff]
    %v4982 = vld [vmem:[%s15 + $0x78] sm:$0xff]
    %s4983 = scalar_lea.vmem %s15, 128
    %v4984 = vld [vmem:[%s4983] sm:$0xff]
    %v4985 = vld [vmem:[%s4983 + $0x8] sm:$0xff]
    %v4986 = vld [vmem:[%s4983 + $0x10] sm:$0xff]
    %v4987 = vld [vmem:[%s4983 + $0x18] sm:$0xff]
    %v4988 = vld [vmem:[%s4983 + $0x20] sm:$0xff]
    %v4989 = vld [vmem:[%s4983 + $0x28] sm:$0xff]
    %v4990 = vld [vmem:[%s4983 + $0x30] sm:$0xff]
    %v4991 = vld [vmem:[%s4983 + $0x38] sm:$0xff]
    %v4992 = vld [vmem:[%s4983 + $0x40] sm:$0xff]
    %v4993 = vld [vmem:[%s4983 + $0x48] sm:$0xff]
    %v4994 = vld [vmem:[%s4983 + $0x50] sm:$0xff]
    %v4995 = vld [vmem:[%s4983 + $0x58] sm:$0xff]
    %v4996 = vld [vmem:[%s4983 + $0x60] sm:$0xff]
    %v4997 = vld [vmem:[%s4983 + $0x68] sm:$0xff]
    %v4998 = vld [vmem:[%s4983 + $0x70] sm:$0xff]
    %v4999 = vld [vmem:[%s4983 + $0x78] sm:$0xff]
    %v5000 = vlaneseq
    %v5001 = vshrl.u32 %v5000, 7
    %v5002 = vsub.s32 1, %v5001
    %v5003 = vrot.slane %v4964, %v5002
    %v5004 = vlaneseq
    %v5005 = vshrl.u32 %v5004, 7
    %v5006 = vsub.s32 1, %v5005
    %v5007 = vrot.slane %v4966, %v5006
    %v5008 = vsel %vm2924, %v5007, %v5003
    %5010 = vmatprep.subr.mxu0 0.0
    %5011 = vmatpush1.msra.mxu0 %v4999
    %5012 = vmatprep.subr.mxu0 0.0
    %5013 = vmatpush1.msra.mxu0 %v4998
    %5014 = vmatprep.subr.mxu0 0.0
    %5015 = vmatpush1.msra.mxu0 %v4997
    %5016 = vmatprep.subr.mxu0 0.0
    %5017 = vmatpush1.msra.mxu0 %v4996
    %5018 = vmatprep.subr.mxu0 0.0
    %5019 = vmatpush1.msra.mxu0 %v4995
    %5020 = vmatprep.subr.mxu0 0.0
    %5021 = vmatpush1.msra.mxu0 %v4994
    %5022 = vmatprep.subr.mxu0 0.0
    %5023 = vmatpush1.msra.mxu0 %v4993
    %5024 = vmatprep.subr.mxu0 0.0
    %5025 = vmatpush1.msra.mxu0 %v4992
    %5026 = vmatprep.subr.mxu0 0.0
    %5027 = vmatpush1.msra.mxu0 %v4991
    %5028 = vmatprep.subr.mxu0 0.0
    %5029 = vmatpush1.msra.mxu0 %v4990
    %5030 = vmatprep.subr.mxu0 0.0
    %5031 = vmatpush1.msra.mxu0 %v4989
    %5032 = vmatprep.subr.mxu0 0.0
    %5033 = vmatpush1.msra.mxu0 %v4988
    %5034 = vmatprep.subr.mxu0 0.0
    %5035 = vmatpush1.msra.mxu0 %v4987
    %5036 = vmatprep.subr.mxu0 0.0
    %5037 = vmatpush1.msra.mxu0 %v4986
    %5038 = vmatprep.subr.mxu0 0.0
    %5039 = vmatpush1.msra.mxu0 %v4985
    %5040 = vmatprep.subr.mxu0 0.0
    %5041 = vmatpush1.msra.mxu0 %v4984
    %5042 = vmatprep.subr.mxu0 0.0
    %5043 = vmatpush2.msra.mxu0 0.0
    %5044 = vmatprep.subr.mxu0 0.0
    %5045 = vmatpush2.msra.mxu0 0.0
    %5046 = vmatprep.subr.mxu0 0.0
    %5047 = vmatpush2.msra.mxu0 0.0
    %5048 = vmatprep.subr.mxu0 0.0
    %5049 = vmatpush2.msra.mxu0 0.0
    %5050 = vmatprep.subr.mxu0 0.0
    %5051 = vmatpush2.msra.mxu0 0.0
    %5052 = vmatprep.subr.mxu0 0.0
    %5053 = vmatpush2.msra.mxu0 0.0
    %5054 = vmatprep.subr.mxu0 0.0
    %5055 = vmatpush2.msra.mxu0 0.0
    %5056 = vmatprep.subr.mxu0 0.0
    %5057 = vmatpush2.msra.mxu0 0.0
    %5058 = vmatprep.subr.mxu0 0.0
    %5059 = vmatpush2.msra.mxu0 0.0
    %5060 = vmatprep.subr.mxu0 0.0
    %5061 = vmatpush2.msra.mxu0 0.0
    %5062 = vmatprep.subr.mxu0 0.0
    %5063 = vmatpush2.msra.mxu0 0.0
    %5064 = vmatprep.subr.mxu0 0.0
    %5065 = vmatpush2.msra.mxu0 0.0
    %5066 = vmatprep.subr.mxu0 0.0
    %5067 = vmatpush2.msra.mxu0 0.0
    %5068 = vmatprep.subr.mxu0 0.0
    %5069 = vmatpush2.msra.mxu0 0.0
    %5070 = vmatprep.subr.mxu0 0.0
    %5071 = vmatpush2.msra.mxu0 0.0
    %5072 = vmatprep.subr.mxu0 0.0
    %5073 = vmatpush2.msra.mxu0 0.0
    %5074 = vmatprep.mubr.f32.mxu0 0.0
    %5075 = vmatmul.mubr.f32.gmra.mxu0 %v5008
    %v5076 = vpop.f32.mrf.mxu0
    %v5077 = vadd.f32 0.0, %v5076
    %v5078 = vpop.f32.mrf.mxu0
    %5079 = vdwg.mxu0
    %v5080 = vlaneseq
    %v5081 = vshrl.u32 %v5080, 7
    %v5082 = vsub.s32 0, %v5081
    %v5083 = vrot.slane %v4964, %v5082
    %v5084 = vlaneseq
    %v5085 = vshrl.u32 %v5084, 7
    %v5086 = vsub.s32 0, %v5085
    %v5087 = vrot.slane %v4966, %v5086
    %v5088 = vsel %vm2924, %v5087, %v5083
    %5090 = vmatprep.subr.mxu0 0.0
    %5091 = vmatpush1.msra.mxu0 %v4982
    %5092 = vmatprep.subr.mxu0 0.0
    %5093 = vmatpush1.msra.mxu0 %v4981
    %5094 = vmatprep.subr.mxu0 0.0
    %5095 = vmatpush1.msra.mxu0 %v4980
    %5096 = vmatprep.subr.mxu0 0.0
    %5097 = vmatpush1.msra.mxu0 %v4979
    %5098 = vmatprep.subr.mxu0 0.0
    %5099 = vmatpush1.msra.mxu0 %v4978
    %5100 = vmatprep.subr.mxu0 0.0
    %5101 = vmatpush1.msra.mxu0 %v4977
    %5102 = vmatprep.subr.mxu0 0.0
    %5103 = vmatpush1.msra.mxu0 %v4976
    %5104 = vmatprep.subr.mxu0 0.0
    %5105 = vmatpush1.msra.mxu0 %v4975
    %5106 = vmatprep.subr.mxu0 0.0
    %5107 = vmatpush1.msra.mxu0 %v4974
    %5108 = vmatprep.subr.mxu0 0.0
    %5109 = vmatpush1.msra.mxu0 %v4973
    %5110 = vmatprep.subr.mxu0 0.0
    %5111 = vmatpush1.msra.mxu0 %v4972
    %5112 = vmatprep.subr.mxu0 0.0
    %5113 = vmatpush1.msra.mxu0 %v4971
    %5114 = vmatprep.subr.mxu0 0.0
    %5115 = vmatpush1.msra.mxu0 %v4970
    %5116 = vmatprep.subr.mxu0 0.0
    %5117 = vmatpush1.msra.mxu0 %v4969
    %5118 = vmatprep.subr.mxu0 0.0
    %5119 = vmatpush1.msra.mxu0 %v4968
    %5120 = vmatprep.subr.mxu0 0.0
    %5121 = vmatpush1.msra.mxu0 %v4967
    %5122 = vmatprep.subr.mxu0 0.0
    %5123 = vmatpush2.msra.mxu0 0.0
    %5124 = vmatprep.subr.mxu0 0.0
    %5125 = vmatpush2.msra.mxu0 0.0
    %5126 = vmatprep.subr.mxu0 0.0
    %5127 = vmatpush2.msra.mxu0 0.0
    %5128 = vmatprep.subr.mxu0 0.0
    %5129 = vmatpush2.msra.mxu0 0.0
    %5130 = vmatprep.subr.mxu0 0.0
    %5131 = vmatpush2.msra.mxu0 0.0
    %5132 = vmatprep.subr.mxu0 0.0
    %5133 = vmatpush2.msra.mxu0 0.0
    %5134 = vmatprep.subr.mxu0 0.0
    %5135 = vmatpush2.msra.mxu0 0.0
    %5136 = vmatprep.subr.mxu0 0.0
    %5137 = vmatpush2.msra.mxu0 0.0
    %5138 = vmatprep.subr.mxu0 0.0
    %5139 = vmatpush2.msra.mxu0 0.0
    %5140 = vmatprep.subr.mxu0 0.0
    %5141 = vmatpush2.msra.mxu0 0.0
    %5142 = vmatprep.subr.mxu0 0.0
    %5143 = vmatpush2.msra.mxu0 0.0
    %5144 = vmatprep.subr.mxu0 0.0
    %5145 = vmatpush2.msra.mxu0 0.0
    %5146 = vmatprep.subr.mxu0 0.0
    %5147 = vmatpush2.msra.mxu0 0.0
    %5148 = vmatprep.subr.mxu0 0.0
    %5149 = vmatpush2.msra.mxu0 0.0
    %5150 = vmatprep.subr.mxu0 0.0
    %5151 = vmatpush2.msra.mxu0 0.0
    %5152 = vmatprep.subr.mxu0 0.0
    %5153 = vmatpush2.msra.mxu0 0.0
    %5154 = vmatprep.mubr.f32.mxu0 0.0
    %5155 = vmatmul.mubr.f32.gmra.mxu0 %v5088
    %v5156 = vpop.f32.mrf.mxu0
    %v5157 = vadd.f32 %v5077, %v5156
    %v5158 = vpop.f32.mrf.mxu0
    %5159 = vdwg.mxu0
    %s5160 = scalar_lea.vmem %s15, 256
    %v5161 = vld [vmem:[%s5160] sm:$0xff]
    %v5162 = vld [vmem:[%s5160 + $0x8] sm:$0xff]
    %v5163 = vld [vmem:[%s5160 + $0x10] sm:$0xff]
    %v5164 = vld [vmem:[%s5160 + $0x18] sm:$0xff]
    %v5165 = vld [vmem:[%s5160 + $0x20] sm:$0xff]
    %v5166 = vld [vmem:[%s5160 + $0x28] sm:$0xff]
    %v5167 = vld [vmem:[%s5160 + $0x30] sm:$0xff]
    %v5168 = vld [vmem:[%s5160 + $0x38] sm:$0xff]
    %v5169 = vld [vmem:[%s5160 + $0x40] sm:$0xff]
    %v5170 = vld [vmem:[%s5160 + $0x48] sm:$0xff]
    %v5171 = vld [vmem:[%s5160 + $0x50] sm:$0xff]
    %v5172 = vld [vmem:[%s5160 + $0x58] sm:$0xff]
    %v5173 = vld [vmem:[%s5160 + $0x60] sm:$0xff]
    %v5174 = vld [vmem:[%s5160 + $0x68] sm:$0xff]
    %v5175 = vld [vmem:[%s5160 + $0x70] sm:$0xff]
    %v5176 = vld [vmem:[%s5160 + $0x78] sm:$0xff]
    %v5177 = vlaneseq
    %v5178 = vshrl.u32 %v5177, 7
    %v5179 = vsub.s32 2, %v5178
    %v5180 = vrot.slane %v4964, %v5179
    %v5181 = vlaneseq
    %v5182 = vshrl.u32 %v5181, 7
    %v5183 = vsub.s32 2, %v5182
    %v5184 = vrot.slane %v4966, %v5183
    %v5185 = vsel %vm2924, %v5184, %v5180
    %5187 = vmatprep.subr.mxu0 0.0
    %5188 = vmatpush1.msra.mxu0 %v5176
    %5189 = vmatprep.subr.mxu0 0.0
    %5190 = vmatpush1.msra.mxu0 %v5175
    %5191 = vmatprep.subr.mxu0 0.0
    %5192 = vmatpush1.msra.mxu0 %v5174
    %5193 = vmatprep.subr.mxu0 0.0
    %5194 = vmatpush1.msra.mxu0 %v5173
    %5195 = vmatprep.subr.mxu0 0.0
    %5196 = vmatpush1.msra.mxu0 %v5172
    %5197 = vmatprep.subr.mxu0 0.0
    %5198 = vmatpush1.msra.mxu0 %v5171
    %5199 = vmatprep.subr.mxu0 0.0
    %5200 = vmatpush1.msra.mxu0 %v5170
    %5201 = vmatprep.subr.mxu0 0.0
    %5202 = vmatpush1.msra.mxu0 %v5169
    %5203 = vmatprep.subr.mxu0 0.0
    %5204 = vmatpush1.msra.mxu0 %v5168
    %5205 = vmatprep.subr.mxu0 0.0
    %5206 = vmatpush1.msra.mxu0 %v5167
    %5207 = vmatprep.subr.mxu0 0.0
    %5208 = vmatpush1.msra.mxu0 %v5166
    %5209 = vmatprep.subr.mxu0 0.0
    %5210 = vmatpush1.msra.mxu0 %v5165
    %5211 = vmatprep.subr.mxu0 0.0
    %5212 = vmatpush1.msra.mxu0 %v5164
    %5213 = vmatprep.subr.mxu0 0.0
    %5214 = vmatpush1.msra.mxu0 %v5163
    %5215 = vmatprep.subr.mxu0 0.0
    %5216 = vmatpush1.msra.mxu0 %v5162
    %5217 = vmatprep.subr.mxu0 0.0
    %5218 = vmatpush1.msra.mxu0 %v5161
    %5219 = vmatprep.subr.mxu0 0.0
    %5220 = vmatpush2.msra.mxu0 0.0
    %5221 = vmatprep.subr.mxu0 0.0
    %5222 = vmatpush2.msra.mxu0 0.0
    %5223 = vmatprep.subr.mxu0 0.0
    %5224 = vmatpush2.msra.mxu0 0.0
    %5225 = vmatprep.subr.mxu0 0.0
    %5226 = vmatpush2.msra.mxu0 0.0
    %5227 = vmatprep.subr.mxu0 0.0
    %5228 = vmatpush2.msra.mxu0 0.0
    %5229 = vmatprep.subr.mxu0 0.0
    %5230 = vmatpush2.msra.mxu0 0.0
    %5231 = vmatprep.subr.mxu0 0.0
    %5232 = vmatpush2.msra.mxu0 0.0
    %5233 = vmatprep.subr.mxu0 0.0
    %5234 = vmatpush2.msra.mxu0 0.0
    %5235 = vmatprep.subr.mxu0 0.0
    %5236 = vmatpush2.msra.mxu0 0.0
    %5237 = vmatprep.subr.mxu0 0.0
    %5238 = vmatpush2.msra.mxu0 0.0
    %5239 = vmatprep.subr.mxu0 0.0
    %5240 = vmatpush2.msra.mxu0 0.0
    %5241 = vmatprep.subr.mxu0 0.0
    %5242 = vmatpush2.msra.mxu0 0.0
    %5243 = vmatprep.subr.mxu0 0.0
    %5244 = vmatpush2.msra.mxu0 0.0
    %5245 = vmatprep.subr.mxu0 0.0
    %5246 = vmatpush2.msra.mxu0 0.0
    %5247 = vmatprep.subr.mxu0 0.0
    %5248 = vmatpush2.msra.mxu0 0.0
    %5249 = vmatprep.subr.mxu0 0.0
    %5250 = vmatpush2.msra.mxu0 0.0
    %5251 = vmatprep.mubr.f32.mxu0 0.0
    %5252 = vmatmul.mubr.f32.gmra.mxu0 %v5185
    %v5253 = vpop.f32.mrf.mxu0
    %v5254 = vadd.f32 0.0, %v5253
    %v5255 = vpop.f32.mrf.mxu0
    %5256 = vdwg.mxu0
    %v5257 = vadd.f32 %v5157, %v5254
    %s5258 = scalar_lea.vmem %s15, 384
    %v5259 = vld [vmem:[%s5258] sm:$0xff]
    %v5260 = vld [vmem:[%s5258 + $0x8] sm:$0xff]
    %v5261 = vld [vmem:[%s5258 + $0x10] sm:$0xff]
    %v5262 = vld [vmem:[%s5258 + $0x18] sm:$0xff]
    %v5263 = vld [vmem:[%s5258 + $0x20] sm:$0xff]
    %v5264 = vld [vmem:[%s5258 + $0x28] sm:$0xff]
    %v5265 = vld [vmem:[%s5258 + $0x30] sm:$0xff]
    %v5266 = vld [vmem:[%s5258 + $0x38] sm:$0xff]
    %v5267 = vld [vmem:[%s5258 + $0x40] sm:$0xff]
    %v5268 = vld [vmem:[%s5258 + $0x48] sm:$0xff]
    %v5269 = vld [vmem:[%s5258 + $0x50] sm:$0xff]
    %v5270 = vld [vmem:[%s5258 + $0x58] sm:$0xff]
    %v5271 = vld [vmem:[%s5258 + $0x60] sm:$0xff]
    %v5272 = vld [vmem:[%s5258 + $0x68] sm:$0xff]
    %v5273 = vld [vmem:[%s5258 + $0x70] sm:$0xff]
    %v5274 = vld [vmem:[%s5258 + $0x78] sm:$0xff]
    %v5275 = vlaneseq
    %v5276 = vshrl.u32 %v5275, 7
    %v5277 = vsub.s32 3, %v5276
    %v5278 = vrot.slane %v4964, %v5277
    %v5279 = vlaneseq
    %v5280 = vshrl.u32 %v5279, 7
    %v5281 = vsub.s32 3, %v5280
    %v5282 = vrot.slane %v4966, %v5281
    %v5283 = vsel %vm2924, %v5282, %v5278
    %5285 = vmatprep.subr.mxu0 0.0
    %5286 = vmatpush1.msra.mxu0 %v5274
    %5287 = vmatprep.subr.mxu0 0.0
    %5288 = vmatpush1.msra.mxu0 %v5273
    %5289 = vmatprep.subr.mxu0 0.0
    %5290 = vmatpush1.msra.mxu0 %v5272
    %5291 = vmatprep.subr.mxu0 0.0
    %5292 = vmatpush1.msra.mxu0 %v5271
    %5293 = vmatprep.subr.mxu0 0.0
    %5294 = vmatpush1.msra.mxu0 %v5270
    %5295 = vmatprep.subr.mxu0 0.0
    %5296 = vmatpush1.msra.mxu0 %v5269
    %5297 = vmatprep.subr.mxu0 0.0
    %5298 = vmatpush1.msra.mxu0 %v5268
    %5299 = vmatprep.subr.mxu0 0.0
    %5300 = vmatpush1.msra.mxu0 %v5267
    %5301 = vmatprep.subr.mxu0 0.0
    %5302 = vmatpush1.msra.mxu0 %v5266
    %5303 = vmatprep.subr.mxu0 0.0
    %5304 = vmatpush1.msra.mxu0 %v5265
    %5305 = vmatprep.subr.mxu0 0.0
    %5306 = vmatpush1.msra.mxu0 %v5264
    %5307 = vmatprep.subr.mxu0 0.0
    %5308 = vmatpush1.msra.mxu0 %v5263
    %5309 = vmatprep.subr.mxu0 0.0
    %5310 = vmatpush1.msra.mxu0 %v5262
    %5311 = vmatprep.subr.mxu0 0.0
    %5312 = vmatpush1.msra.mxu0 %v5261
    %5313 = vmatprep.subr.mxu0 0.0
    %5314 = vmatpush1.msra.mxu0 %v5260
    %5315 = vmatprep.subr.mxu0 0.0
    %5316 = vmatpush1.msra.mxu0 %v5259
    %5317 = vmatprep.subr.mxu0 0.0
    %5318 = vmatpush2.msra.mxu0 0.0
    %5319 = vmatprep.subr.mxu0 0.0
    %5320 = vmatpush2.msra.mxu0 0.0
    %5321 = vmatprep.subr.mxu0 0.0
    %5322 = vmatpush2.msra.mxu0 0.0
    %5323 = vmatprep.subr.mxu0 0.0
    %5324 = vmatpush2.msra.mxu0 0.0
    %5325 = vmatprep.subr.mxu0 0.0
    %5326 = vmatpush2.msra.mxu0 0.0
    %5327 = vmatprep.subr.mxu0 0.0
    %5328 = vmatpush2.msra.mxu0 0.0
    %5329 = vmatprep.subr.mxu0 0.0
    %5330 = vmatpush2.msra.mxu0 0.0
    %5331 = vmatprep.subr.mxu0 0.0
    %5332 = vmatpush2.msra.mxu0 0.0
    %5333 = vmatprep.subr.mxu0 0.0
    %5334 = vmatpush2.msra.mxu0 0.0
    %5335 = vmatprep.subr.mxu0 0.0
    %5336 = vmatpush2.msra.mxu0 0.0
    %5337 = vmatprep.subr.mxu0 0.0
    %5338 = vmatpush2.msra.mxu0 0.0
    %5339 = vmatprep.subr.mxu0 0.0
    %5340 = vmatpush2.msra.mxu0 0.0
    %5341 = vmatprep.subr.mxu0 0.0
    %5342 = vmatpush2.msra.mxu0 0.0
    %5343 = vmatprep.subr.mxu0 0.0
    %5344 = vmatpush2.msra.mxu0 0.0
    %5345 = vmatprep.subr.mxu0 0.0
    %5346 = vmatpush2.msra.mxu0 0.0
    %5347 = vmatprep.subr.mxu0 0.0
    %5348 = vmatpush2.msra.mxu0 0.0
    %5349 = vmatprep.mubr.f32.mxu0 0.0
    %5350 = vmatmul.mubr.f32.gmra.mxu0 %v5283
    %v5351 = vpop.f32.mrf.mxu0
    %v5352 = vadd.f32 0.0, %v5351
    %v5353 = vpop.f32.mrf.mxu0
    %5354 = vdwg.mxu0
    %v5355 = vadd.f32 %v5257, %v5352
    %v5356 = vld [vmem:[#allocation8] sm:$0x1]
    %v5358 = vlaneseq
    %v5359 = vshrl.u32 %v5358, 7
    %v5360 = vsub.s32 0, %v5359
    %v5361 = vrot.slane %v5356, %v5360
    %v5363 = vadd.f32 %v5355, %v5361
    %vm5364 = vcmask 74752
    %5365 = vst.msk [vmem:[#allocation10] sm:$0x3] %vm5364, %v5363
    // Predicated region
    $region86: #{cnn_forward.1} parent=1 // pred_check
      _
    $region87: #{cnn_forward.1} parent=1 // pred_check_branch
      %5367 = sbr.rel (0) target = $region89
    $region88: #{cnn_forward.1} parent=1 // pred_region
      %s5369 = ssub.s32 32, 32
      %5370 = vsyncadd [#allocation4], %s5369
      %s5372 = sshll.u32 [#allocation10], 4
      %s5373 = int_to_ptr.vmem [resolvable:$true] %s5372
      %5375 = dma.vmem_to_hbm [thread:$0]  %s5373, 32, %s17, [#allocation4]
    $region89: #{cnn_forward.1} parent=1 // pred_fallthru
      _
    // Predicated region
    $region90: #{cnn_forward.1} parent=1 // pred_check
      _
    $region91: #{cnn_forward.1} parent=1 // pred_check_branch
      %5377 = sbr.rel (0) target = $region93
    $region92: #{cnn_forward.1} parent=1 // pred_region
      %5378 = dma.done [#allocation4], 32
    $region93: #{cnn_forward.1} parent=1 // pred_fallthru
      _
    %5379 = vsyncpa [#allocation3], 1
    %5380 = vsyncpa [#allocation6], 1
    %5381 = vsyncpa [#allocation9], 1
    %5382 = vsyncpa [#allocation4], 1

</llo_original>
